<compile_context>
chip_gen: v7x
topology: tpu7x:2x2x1
jax: 0.10.0
libtpu: 0.0.40
codegen_flags: <defaults>
</compile_context>

<pallas_src>
import math
import functools

import jax
import jax.numpy as jnp
from jax.experimental import pallas as pl
from jax.experimental.pallas import tpu as pltpu


# ---------------------------------------------------------------------------
# helpers
# ---------------------------------------------------------------------------
def _round_up(x, m):
    return (x + m - 1) // m * m


def _vmem_capacity_bytes(default=64 << 20):
    """Physical VMEM per TensorCore; conservative 64 MiB (v7x) if unknown."""
    try:
        cap = getattr(pltpu.get_tpu_info(), "vmem_capacity_bytes", None)
        if cap:
            return int(cap)
    except Exception:
        pass
    return default


def _pick_toh(OH, OW, vmem_fn, budget, target_rows=512):
    """TOH = output rows per grid step.
    Legal TOH: divides OH and either TM=TOH*OW is a multiple of 8 (sublane rule
    for the output block) or TOH == OH (block spans the full flattened-pixel
    axis, always legal -- any future blocking of that axis must re-check the
    (8,128) rule).  Among legal TOH prefer the largest with TM <= target_rows
    whose VMEM estimate fits the budget; shrink if VMEM-bound."""
    cands = sorted(d for d in range(1, OH + 1)
                   if OH % d == 0 and ((d * OW) % 8 == 0 or d == OH))
    pool = [d for d in cands if vmem_fn(d) <= budget] or cands
    fitting = [d for d in pool if d * OW <= target_rows]
    return max(fitting) if fitting else min(pool)


# ---------------------------------------------------------------------------
# Pallas kernel: fused im2col + single deep matmul per (batch, row-tile, cout-tile)
# ---------------------------------------------------------------------------
def _make_conv_kernel(KH, KW, TOH, OW, stride, cinp):
    TM = TOH * OW

    def kernel(x_ref, w_ref, b_ref, o_ref, patch_ref):
        # x_ref:     (1, Hp, Wp, Cinp)  padded NHWC image (compute dtype)
        # w_ref:     (Kp, TCOUT)        flattened per-tap weights
        # b_ref:     (1, TCOUT)         bias row (f32; zeros if bias=False)
        # o_ref:     (1, TM, TCOUT)     output tile (lane-dense channels)
        # patch_ref: (TM, Kp)           im2col scratch, Kp = KH*KW*Cinp
        r = pl.program_id(1)

        # Build the im2col patch once per (n, r); the Cout axis (grid axis 2) is
        # innermost and sequential ("arbitrary"), so the scratch built at c == 0
        # is reused for every Cout tile of this row tile.
        @pl.when(pl.program_id(2) == 0)
        def _build_patch():
            row0 = pl.multiple_of(r * (TOH * stride), TOH * stride)
            for i in range(KH):
                for j in range(KW):
                    if stride == 1:
                        tap = x_ref[0, pl.ds(row0 + i, TOH), pl.ds(j, OW), :]
                    else:
                        # TODO(synk): stride>1 path (strided pl.ds on the row /
                        # column axes) is not exercised by the self-test below.
                        tap = x_ref[0, pl.ds(row0 + i, TOH, stride),
                                    pl.ds(j, OW, stride), :]
                    t = i * KW + j
                    patch_ref[:, t * cinp:(t + 1) * cinp] = tap.reshape(TM, cinp)

        # One deep matmul (K = KH*KW*Cinp) instead of KH*KW shallow matmuls each
        # doing a full f32 accumulator read-modify-write.
        acc = jnp.dot(patch_ref[...], w_ref[...],
                      preferred_element_type=jnp.float32)
        o_ref[0] = (acc + b_ref[...]).astype(o_ref.dtype)

    return kernel


# ---------------------------------------------------------------------------
# PrunedConv forward
# ---------------------------------------------------------------------------
def pruned_conv_forward(x, weight, bias=None, *, stride=1, padding=0,
                        compute_dtype=jnp.bfloat16, store_dtype=None,
                        out_layout="NCHW"):
    """x: (N, Cin, H, W); weight: (Cout, Cin, KH, KW); bias: (Cout,) or None."""
    N, Cin, H, W = x.shape
    Cout, Cin_w, KH, KW = weight.shape
    assert Cin_w == Cin, (Cin_w, Cin)

    OH = (H + 2 * padding - KH) // stride + 1
    OW = (W + 2 * padding - KW) // stride + 1
    assert OH > 0 and OW > 0

    itm = jnp.dtype(compute_dtype).itemsize
    LANE = 128
    SUB = max(8, 32 // itm)                 # bf16 -> 16, f32 -> 8 (native tile)
    Coutp = _round_up(Cout, LANE)           # lane-dense output channels
    Cinp = _round_up(Cin, SUB)              # contraction dim, dtype-tile aligned
    Kp = KH * KW * Cinp                     # fused-tap contraction depth

    if store_dtype is None:
        out_dtype = x.dtype if jnp.issubdtype(x.dtype, jnp.floating) else jnp.float32
    else:
        out_dtype = jnp.dtype(store_dtype)
    osz = jnp.dtype(out_dtype).itemsize

    # ---- layout plumbing (plain XLA, touches x / weight exactly once) ----
    # x: NCHW -> NHWC, spatial zero pad, channel zero pad, cast to compute dtype.
    x_nhwc = jnp.transpose(x, (0, 2, 3, 1))
    x_pad = jnp.pad(
        x_nhwc,
        ((0, 0), (padding, padding), (padding, padding), (0, Cinp - Cin)),
    ).astype(compute_dtype)
    Hp, Wp = H + 2 * padding, W + 2 * padding

    # weight: (Cout, Cin, KH, KW) -> (KH, KW, Cinp, Coutp) -> (Kp, Coutp) so the
    # matrix row index (i*KW + j)*Cinp + c matches the patch column layout.
    w_mat = jnp.transpose(weight, (2, 3, 1, 0))
    w_mat = jnp.pad(w_mat, ((0, 0), (0, 0), (0, Cinp - Cin), (0, Coutp - Cout)))
    w_mat = w_mat.reshape(Kp, Coutp).astype(compute_dtype)

    if bias is None:
        b_row = jnp.zeros((1, Coutp), jnp.float32)
    else:
        b_row = jnp.pad(bias.astype(jnp.float32).reshape(1, Cout),
                        ((0, 0), (0, Coutp - Cout)))

    # ---- Cout tiling (bounds weight block + f32 result for big Cout) ----
    if Coutp <= 256:
        TCOUT = Coutp
    elif Coutp % 256 == 0:
        TCOUT = 256                          # matches v6e/v7x 256-wide MXU
    else:
        TCOUT = 128
    NCO = Coutp // TCOUT

    # ---- VMEM budgeting & row tiling ----
    vmem_cap = _vmem_capacity_bytes()
    wbuf = 1 if NCO == 1 else 2              # weights single-buffered if grid-invariant

    def vmem_est_fn(toh):
        tm = toh * OW
        return (2 * Hp * Wp * Cinp * itm                 # resident image, double-buffered
                + wbuf * (Kp * TCOUT * itm + TCOUT * 4)  # weight + bias blocks
                + 2 * tm * TCOUT * osz                   # output tiles, double-buffered
                + tm * Kp * itm                          # im2col patch scratch
                + tm * TCOUT * 4                         # live f32 matmul result
                + (1 << 20))                             # headroom

    budget = max(8 << 20, min(48 << 20, vmem_cap - (16 << 20)))
    TOH = _pick_toh(OH, OW, vmem_est_fn, budget)
    TM = TOH * OW
    OHT = OH // TOH
    vmem_est = vmem_est_fn(TOH)
    # TODO(synk): for images where 2*Hp*Wp*Cinp alone busts the budget (large
    # v7x shapes), halo-tile the H axis instead of keeping the image resident.

    kernel = _make_conv_kernel(KH, KW, TOH, OW, stride, Cinp)

    cost = pl.CostEstimate(
        flops=2 * N * OH * OW * Kp * Coutp,
        transcendentals=0,
        bytes_accessed=int(N * Hp * Wp * Cinp * itm
                           + Kp * Coutp * itm + Coutp * 4
                           + N * OH * OW * Coutp * osz))

    cp_kwargs = dict(dimension_semantics=("parallel", "parallel", "arbitrary"))
    if vmem_est > (14 << 20):                # v5e default scoped limit is 16 MiB
        limit = min(vmem_est + (8 << 20), vmem_cap - (4 << 20))
        cp_kwargs["vmem_limit_bytes"] = int(max(limit, 16 << 20))

    # Weight / bias blocks: single-buffer when their block index never changes.
    inv_kwargs = {"pipeline_mode": pl.Buffered(1)} if NCO == 1 else {}
    w_spec = pl.BlockSpec((Kp, TCOUT), lambda n, r, c: (0, c), **inv_kwargs)
    b_spec = pl.BlockSpec((1, TCOUT), lambda n, r, c: (0, c), **inv_kwargs)

    outp = pl.pallas_call(
        kernel,
        out_shape=jax.ShapeDtypeStruct((N, OH * OW, Coutp), out_dtype),
        grid_spec=pltpu.PrefetchScalarGridSpec(
            num_scalar_prefetch=0,
            grid=(N, OHT, NCO),
            in_specs=[
                # whole padded image; block index only changes with n, so the
                # pipeline copies it once per batch element.
                pl.BlockSpec((1, Hp, Wp, Cinp), lambda n, r, c: (n, 0, 0, 0)),
                w_spec,
                b_spec,
            ],
            out_specs=pl.BlockSpec((1, TM, TCOUT), lambda n, r, c: (n, r, c)),
            scratch_shapes=[pltpu.VMEM((TM, Kp), compute_dtype)],
        ),
        compiler_params=pltpu.CompilerParams(**cp_kwargs),
        cost_estimate=cost,
    )(x_pad, w_mat, b_row)

    out = outp[:, :, :Cout].reshape(N, OH, OW, Cout)   # NHWC, lane-dense slab
    if out_layout == "NCHW":
        out = jnp.transpose(out, (0, 3, 1, 2))         # PyTorch layout (boundary only)
    return out


# TODO(synk): set_up()/prune_by_percentage() mutate weights offline (bit-level
# quantization of a random weight subset); they are not part of forward() and
# are not implemented here.

def make_params(key, in_channels, out_channels, kernel_size, bias=True):
    """Deterministic init mirroring PrunedConv.__init__."""
    n = kernel_size * kernel_size * out_channels
    m = kernel_size * kernel_size * in_channels
    std = math.sqrt(2.0 / (n + m))
    kw_, kb_ = jax.random.split(key)
    weight = std * jax.random.normal(
        kw_, (out_channels, in_channels, kernel_size, kernel_size), jnp.float32)
    if bias:
        fan_in = in_channels * kernel_size * kernel_size
        bound = 1.0 / math.sqrt(fan_in)
        b = jax.random.uniform(kb_, (out_channels,), jnp.float32,
                               minval=-bound, maxval=bound)
    else:
        b = None
    return weight, b


if __name__ == "__main__":
    key = jax.random.PRNGKey(0)
    kx, kp = jax.random.split(key)

    # Small shapes: batch=2, in_channels=4, out_channels=8, spatial=16,
    # kernel=3, stride=1, padding=1  ->  output (2, 8, 16, 16)
    N, Cin, H, W = 2, 4, 16, 16
    Cout, ksize, stride, padding = 8, 3, 1, 1

    x = jax.random.normal(kx, (N, Cin, H, W), jnp.float32)
    weight, bias = make_params(kp, Cin, Cout, ksize, bias=True)

    fwd = jax.jit(functools.partial(pruned_conv_forward,
                                    stride=stride, padding=padding))
    out = jax.block_until_ready(fwd(x, weight, bias))
    assert out.shape == (N, Cout, H, W), out.shape

    # Tight check: reference with the SAME bf16-rounded operands, f32 accum.
    xq = x.astype(jnp.bfloat16).astype(jnp.float32)
    wq = weight.astype(jnp.bfloat16).astype(jnp.float32)
    ref_q = jax.lax.conv_general_dilated(
        xq, wq, window_strides=(stride, stride),
        padding=[(padding, padding), (padding, padding)],
        dimension_numbers=("NCHW", "OIHW", "NCHW"),
        precision=jax.lax.Precision.HIGHEST) + bias.reshape(1, Cout, 1, 1)
    err_q = float(jnp.max(jnp.abs(out - ref_q)))
    assert jnp.allclose(out, ref_q, atol=5e-4, rtol=5e-4), err_q

    # Loose sanity check vs the full-f32 reference (bf16 operand rounding).
    ref = jax.lax.conv_general_dilated(
        x, weight, window_strides=(stride, stride),
        padding=[(padding, padding), (padding, padding)],
        dimension_numbers=("NCHW", "OIHW", "NCHW"),
        precision=jax.lax.Precision.HIGHEST) + bias.reshape(1, Cout, 1, 1)
    err = float(jnp.max(jnp.abs(out - ref)))
    assert jnp.allclose(out, ref, atol=5e-2, rtol=5e-2), err

    print("KERNEL_OK")
</pallas_src>

<mosaic_0001>
module attributes {stable_mosaic.version = 11 : i64} {
  func.func @kernel(%arg0: i32, %arg1: i32, %arg2: i32, %arg3: memref<1x18x18x16xbf16, #tpu.memory_space<vmem>>, %arg4: memref<144x128xbf16, #tpu.memory_space<vmem>>, %arg5: memref<1x128xf32, #tpu.memory_space<vmem>>, %arg6: memref<1x256x128xf32, #tpu.memory_space<vmem>>, %arg7: memref<256x144xbf16, #tpu.memory_space<vmem>>) attributes {dimension_semantics = [#tpu.dimension_semantics<parallel>, #tpu.dimension_semantics<parallel>, #tpu.dimension_semantics<arbitrary>], iteration_bounds = array<i64: 2, 1, 1>, scalar_prefetch = 0 : i64, scratch_operands = 1 : i64, tpu.core_type = #tpu.core_type<tc>, window_params = [{transform_indices = @transform_0, window_bounds = array<i64: 1, 18, 18, 16>}, {pipeline_mode = #tpu.pipeline_mode<synchronous>, transform_indices = @transform_1, window_bounds = array<i64: 144, 128>}, {pipeline_mode = #tpu.pipeline_mode<synchronous>, transform_indices = @transform_2, window_bounds = array<i64: 1, 128>}, {transform_indices = @transform_3, window_bounds = array<i64: 1, 256, 128>}]} {
    %c0_i32 = arith.constant 0 : i32
    %0 = arith.cmpi eq, %arg2, %c0_i32 : i32
    %1 = arith.extui %0 : i1 to i32
    %c0_i32_0 = arith.constant 0 : i32
    %2 = arith.cmpi ne, %1, %c0_i32_0 : i32
    scf.if %2 {
      %c16_i32 = arith.constant 16 : i32
      %12 = arith.muli %arg1, %c16_i32 : i32
      %13 = tpu.assume_multiple %12, 16 : i32
      %c0_i32_9 = arith.constant 0 : i32
      %14 = arith.addi %13, %c0_i32_9 : i32
      %c0_10 = arith.constant 0 : index
      %15 = arith.index_cast %14 : i32 to index
      %c0_11 = arith.constant 0 : index
      %c0_12 = arith.constant 0 : index
      %16 = vector.load %arg3[%c0_10, %15, %c0_11, %c0_12] : memref<1x18x18x16xbf16, #tpu.memory_space<vmem>>, vector<1x16x16x16xbf16>
      %17 = vector.shape_cast %16 : vector<1x16x16x16xbf16> to vector<16x16x16xbf16>
      %18 = vector.shape_cast %17 : vector<16x16x16xbf16> to vector<256x16xbf16>
      %c0_13 = arith.constant 0 : index
      %c0_14 = arith.constant 0 : index
      %19 = vector.load %arg7[%c0_13, %c0_14] : memref<256x144xbf16, #tpu.memory_space<vmem>>, vector<256x16xbf16>
      tpu.vector_store %arg7[%c0_13, %c0_14], %18 {strides = array<i32>} : memref<256x144xbf16, #tpu.memory_space<vmem>>, vector<256x16xbf16>,
      %c0_i32_15 = arith.constant 0 : i32
      %20 = arith.addi %13, %c0_i32_15 : i32
      %c0_16 = arith.constant 0 : index
      %21 = arith.index_cast %20 : i32 to index
      %c1 = arith.constant 1 : index
      %c0_17 = arith.constant 0 : index
      %22 = vector.load %arg3[%c0_16, %21, %c1, %c0_17] : memref<1x18x18x16xbf16, #tpu.memory_space<vmem>>, vector<1x16x16x16xbf16>
      %23 = vector.shape_cast %22 : vector<1x16x16x16xbf16> to vector<16x16x16xbf16>
      %24 = vector.shape_cast %23 : vector<16x16x16xbf16> to vector<256x16xbf16>
      %c0_18 = arith.constant 0 : index
      %c16 = arith.constant 16 : index
      %25 = vector.load %arg7[%c0_18, %c16] : memref<256x144xbf16, #tpu.memory_space<vmem>>, vector<256x16xbf16>
      tpu.vector_store %arg7[%c0_18, %c16], %24 {strides = array<i32>} : memref<256x144xbf16, #tpu.memory_space<vmem>>, vector<256x16xbf16>,
      %c0_i32_19 = arith.constant 0 : i32
      %26 = arith.addi %13, %c0_i32_19 : i32
      %c0_20 = arith.constant 0 : index
      %27 = arith.index_cast %26 : i32 to index
      %c2 = arith.constant 2 : index
      %c0_21 = arith.constant 0 : index
      %28 = vector.load %arg3[%c0_20, %27, %c2, %c0_21] : memref<1x18x18x16xbf16, #tpu.memory_space<vmem>>, vector<1x16x16x16xbf16>
      %29 = vector.shape_cast %28 : vector<1x16x16x16xbf16> to vector<16x16x16xbf16>
      %30 = vector.shape_cast %29 : vector<16x16x16xbf16> to vector<256x16xbf16>
      %c0_22 = arith.constant 0 : index
      %c32 = arith.constant 32 : index
      %31 = vector.load %arg7[%c0_22, %c32] : memref<256x144xbf16, #tpu.memory_space<vmem>>, vector<256x16xbf16>
      tpu.vector_store %arg7[%c0_22, %c32], %30 {strides = array<i32>} : memref<256x144xbf16, #tpu.memory_space<vmem>>, vector<256x16xbf16>,
      %c1_i32 = arith.constant 1 : i32
      %32 = arith.addi %13, %c1_i32 : i32
      %c0_23 = arith.constant 0 : index
      %33 = arith.index_cast %32 : i32 to index
      %c0_24 = arith.constant 0 : index
      %c0_25 = arith.constant 0 : index
      %34 = vector.load %arg3[%c0_23, %33, %c0_24, %c0_25] : memref<1x18x18x16xbf16, #tpu.memory_space<vmem>>, vector<1x16x16x16xbf16>
      %35 = vector.shape_cast %34 : vector<1x16x16x16xbf16> to vector<16x16x16xbf16>
      %36 = vector.shape_cast %35 : vector<16x16x16xbf16> to vector<256x16xbf16>
      %c0_26 = arith.constant 0 : index
      %c48 = arith.constant 48 : index
      %37 = vector.load %arg7[%c0_26, %c48] : memref<256x144xbf16, #tpu.memory_space<vmem>>, vector<256x16xbf16>
      tpu.vector_store %arg7[%c0_26, %c48], %36 {strides = array<i32>} : memref<256x144xbf16, #tpu.memory_space<vmem>>, vector<256x16xbf16>,
      %c1_i32_27 = arith.constant 1 : i32
      %38 = arith.addi %13, %c1_i32_27 : i32
      %c0_28 = arith.constant 0 : index
      %39 = arith.index_cast %38 : i32 to index
      %c1_29 = arith.constant 1 : index
      %c0_30 = arith.constant 0 : index
      %40 = vector.load %arg3[%c0_28, %39, %c1_29, %c0_30] : memref<1x18x18x16xbf16, #tpu.memory_space<vmem>>, vector<1x16x16x16xbf16>
      %41 = vector.shape_cast %40 : vector<1x16x16x16xbf16> to vector<16x16x16xbf16>
      %42 = vector.shape_cast %41 : vector<16x16x16xbf16> to vector<256x16xbf16>
      %c0_31 = arith.constant 0 : index
      %c64 = arith.constant 64 : index
      %43 = vector.load %arg7[%c0_31, %c64] : memref<256x144xbf16, #tpu.memory_space<vmem>>, vector<256x16xbf16>
      tpu.vector_store %arg7[%c0_31, %c64], %42 {strides = array<i32>} : memref<256x144xbf16, #tpu.memory_space<vmem>>, vector<256x16xbf16>,
      %c1_i32_32 = arith.constant 1 : i32
      %44 = arith.addi %13, %c1_i32_32 : i32
      %c0_33 = arith.constant 0 : index
      %45 = arith.index_cast %44 : i32 to index
      %c2_34 = arith.constant 2 : index
      %c0_35 = arith.constant 0 : index
      %46 = vector.load %arg3[%c0_33, %45, %c2_34, %c0_35] : memref<1x18x18x16xbf16, #tpu.memory_space<vmem>>, vector<1x16x16x16xbf16>
      %47 = vector.shape_cast %46 : vector<1x16x16x16xbf16> to vector<16x16x16xbf16>
      %48 = vector.shape_cast %47 : vector<16x16x16xbf16> to vector<256x16xbf16>
      %c0_36 = arith.constant 0 : index
      %c80 = arith.constant 80 : index
      %49 = vector.load %arg7[%c0_36, %c80] : memref<256x144xbf16, #tpu.memory_space<vmem>>, vector<256x16xbf16>
      tpu.vector_store %arg7[%c0_36, %c80], %48 {strides = array<i32>} : memref<256x144xbf16, #tpu.memory_space<vmem>>, vector<256x16xbf16>,
      %c2_i32 = arith.constant 2 : i32
      %50 = arith.addi %13, %c2_i32 : i32
      %c0_37 = arith.constant 0 : index
      %51 = arith.index_cast %50 : i32 to index
      %c0_38 = arith.constant 0 : index
      %c0_39 = arith.constant 0 : index
      %52 = vector.load %arg3[%c0_37, %51, %c0_38, %c0_39] : memref<1x18x18x16xbf16, #tpu.memory_space<vmem>>, vector<1x16x16x16xbf16>
      %53 = vector.shape_cast %52 : vector<1x16x16x16xbf16> to vector<16x16x16xbf16>
      %54 = vector.shape_cast %53 : vector<16x16x16xbf16> to vector<256x16xbf16>
      %c0_40 = arith.constant 0 : index
      %c96 = arith.constant 96 : index
      %55 = vector.load %arg7[%c0_40, %c96] : memref<256x144xbf16, #tpu.memory_space<vmem>>, vector<256x16xbf16>
      tpu.vector_store %arg7[%c0_40, %c96], %54 {strides = array<i32>} : memref<256x144xbf16, #tpu.memory_space<vmem>>, vector<256x16xbf16>,
      %c2_i32_41 = arith.constant 2 : i32
      %56 = arith.addi %13, %c2_i32_41 : i32
      %c0_42 = arith.constant 0 : index
      %57 = arith.index_cast %56 : i32 to index
      %c1_43 = arith.constant 1 : index
      %c0_44 = arith.constant 0 : index
      %58 = vector.load %arg3[%c0_42, %57, %c1_43, %c0_44] : memref<1x18x18x16xbf16, #tpu.memory_space<vmem>>, vector<1x16x16x16xbf16>
      %59 = vector.shape_cast %58 : vector<1x16x16x16xbf16> to vector<16x16x16xbf16>
      %60 = vector.shape_cast %59 : vector<16x16x16xbf16> to vector<256x16xbf16>
      %c0_45 = arith.constant 0 : index
      %c112 = arith.constant 112 : index
      %61 = vector.load %arg7[%c0_45, %c112] : memref<256x144xbf16, #tpu.memory_space<vmem>>, vector<256x16xbf16>
      tpu.vector_store %arg7[%c0_45, %c112], %60 {strides = array<i32>} : memref<256x144xbf16, #tpu.memory_space<vmem>>, vector<256x16xbf16>,
      %c2_i32_46 = arith.constant 2 : i32
      %62 = arith.addi %13, %c2_i32_46 : i32
      %c0_47 = arith.constant 0 : index
      %63 = arith.index_cast %62 : i32 to index
      %c2_48 = arith.constant 2 : index
      %c0_49 = arith.constant 0 : index
      %64 = vector.load %arg3[%c0_47, %63, %c2_48, %c0_49] : memref<1x18x18x16xbf16, #tpu.memory_space<vmem>>, vector<1x16x16x16xbf16>
      %65 = vector.shape_cast %64 : vector<1x16x16x16xbf16> to vector<16x16x16xbf16>
      %66 = vector.shape_cast %65 : vector<16x16x16xbf16> to vector<256x16xbf16>
      %c0_50 = arith.constant 0 : index
      %c128 = arith.constant 128 : index
      %67 = vector.load %arg7[%c0_50, %c128] : memref<256x144xbf16, #tpu.memory_space<vmem>>, vector<256x16xbf16>
      tpu.vector_store %arg7[%c0_50, %c128], %66 {strides = array<i32>} : memref<256x144xbf16, #tpu.memory_space<vmem>>, vector<256x16xbf16>,
    } else {
    }
    %c0 = arith.constant 0 : index
    %c0_1 = arith.constant 0 : index
    %3 = vector.load %arg7[%c0, %c0_1] : memref<256x144xbf16, #tpu.memory_space<vmem>>, vector<256x144xbf16>
    %c0_2 = arith.constant 0 : index
    %c0_3 = arith.constant 0 : index
    %4 = vector.load %arg4[%c0_2, %c0_3] : memref<144x128xbf16, #tpu.memory_space<vmem>>, vector<144x128xbf16>
    %cst = arith.constant dense<0.000000e+00> : vector<256x128xf32>
    %5 = tpu.matmul %3, %4, %cst {dimension_numbers = #tpu.dot_dimension_numbers<[1], [0], [0], [1], [0, 0, 1, 1], [], []>} : vector<256x144xbf16>, vector<144x128xbf16>, vector<256x128xf32> -> vector<256x128xf32>
    %c0_4 = arith.constant 0 : index
    %c0_5 = arith.constant 0 : index
    %6 = vector.load %arg5[%c0_4, %c0_5] : memref<1x128xf32, #tpu.memory_space<vmem>>, vector<1x128xf32>
    %7 = vector.broadcast %6 : vector<1x128xf32> to vector<256x128xf32>
    %8 = arith.addf %5, %7 : vector<256x128xf32>
    %c0_6 = arith.constant 0 : index
    %c0_7 = arith.constant 0 : index
    %c0_8 = arith.constant 0 : index
    %9 = vector.load %arg6[%c0_6, %c0_7, %c0_8] : memref<1x256x128xf32, #tpu.memory_space<vmem>>, vector<1x256x128xf32>
    %10 = vector.shape_cast %9 : vector<1x256x128xf32> to vector<256x128xf32>
    %11 = vector.shape_cast %8 : vector<256x128xf32> to vector<1x256x128xf32>
    tpu.vector_store %arg6[%c0_6, %c0_7, %c0_8], %11 {strides = array<i32>} : memref<1x256x128xf32, #tpu.memory_space<vmem>>, vector<1x256x128xf32>,
    return
  }
  func.func @transform_0(%arg0: i32, %arg1: i32, %arg2: i32) -> (i32, i32, i32, i32) {
    %c0_i32 = arith.constant 0 : i32
    %c0_i32_0 = arith.constant 0 : i32
    %c0_i32_1 = arith.constant 0 : i32
    %c0_i32_2 = arith.constant 0 : i32
    return %arg0, %c0_i32, %c0_i32_0, %c0_i32_1 : i32, i32, i32, i32
  }
  func.func @transform_1(%arg0: i32, %arg1: i32, %arg2: i32) -> (i32, i32) {
    %c0_i32 = arith.constant 0 : i32
    %c0_i32_0 = arith.constant 0 : i32
    return %c0_i32, %arg2 : i32, i32
  }
  func.func @transform_2(%arg0: i32, %arg1: i32, %arg2: i32) -> (i32, i32) {
    %c0_i32 = arith.constant 0 : i32
    %c0_i32_0 = arith.constant 0 : i32
    return %c0_i32, %arg2 : i32, i32
  }
  func.func @transform_3(%arg0: i32, %arg1: i32, %arg2: i32) -> (i32, i32, i32) {
    %c0_i32 = arith.constant 0 : i32
    return %arg0, %arg1, %arg2 : i32, i32, i32
  }
}

</mosaic_0001>

<llo_original>
// kernel: pruned_conv_forward.1
$region0: #{pruned_conv_forward.1}
  #allocation0 [shape = 'u32[]', space=smem, size = 0x4, offset = 0x4, fixed_abs, tag = 'smem constant byte address 0x4 - core index']
  #allocation1 [shape = 'u32[144,128]{1,0:T(1,128)}', space=vmem, size = 0x12000, scoped, tag = 'internal scratch']
  #allocation2 [shape = 'bf16[256,144]{1,0:T(16,128)(2,1)}', space=vmem, size = 0x20000, scoped, tag = 'scratch operand']
  %s0 = inlined_call_operand.vmem [shape: bf16[2,18,18,16], index: 0, kind: input, shape index: {}]
  %s1 = inlined_call_operand.vmem [shape: bf16[144,128], index: 1, kind: input, shape index: {}]
  %s2 = inlined_call_operand.vmem [shape: f32[1,128], index: 2, kind: input, shape index: {}]
  %s3 = inlined_call_operand.vmem [shape: f32[2,256,128], index: 3, kind: output, shape index: {}]
  %s4 = sld [smem:[#allocation0]]
  $region49: #{pruned_conv_forward.1} parent=0
    _
  %s6 = ssub.s32 1, %s4
  %s7 = scalar_select 0, %s6, %s4
  loop: start=0, step=1, limit=4
  $region2: #{pruned_conv_forward.1} parent=0 // loop_pre_header
    _
  $region3: #{pruned_conv_forward.1} parent=0 // loop_header
    %s9 = sphi 0, %s13
    %p10 = scmp.ge.s32.totalorder %s9, 4
    %s16 = sphi 0, %s35
    %s17 = sphi 0, %s31
    %s18 = sphi 0, %s27
    %s19 = sphi 0, %s16
    %s20 = sphi 0, %s17
    %s21 = sphi 0, %s18
    %s22 = sphi 0, %s19
    %s23 = sphi 0, %s20
    %s24 = sphi 0, %s21
    %s38 = sphi 0, %s40
    %s41 = sphi 0, %s38
    %s42 = sphi 0, %s41
    %s58 = sphi 0, %s42
    %s64 = sphi 0, %s66
    %s67 = sphi 0, %s64
    %s68 = sphi 0, %s67
    %s84 = sphi 0, %s68
    %s90 = sphi 0, %s92
    %s93 = sphi 0, %s90
    %s94 = sphi 0, %s93
    %s110 = sphi 0, %s94
    %s120 = sphi 0, %s122
    %s123 = sphi 0, %s120
    %s124 = sphi 0, %s123
    %s140 = sphi 0, %s124
  $region4: #{pruned_conv_forward.1} parent=0 // loop_header_branch
    %12 = sbr.rel (%p10) target = $region8
  $region5: #{pruned_conv_forward.1} parent=0 // loop_body
    %s14 = ssub.s32 %s9, 1
    %s15 = ssub.s32 %s9, 2
    %s25 = sadd.s32 1, %s18
    %p26 = scmp.ge.s32.totalorder %s25, 1
    %s27 = scalar_select %p26, 0, %s25
    %s28 = sadd.s32 1, %s17
    %s29 = scalar_select %p26, %s28, %s17
    %p30 = scmp.ge.s32.totalorder %s29, 1
    %s31 = scalar_select %p30, 0, %s29
    %s32 = sadd.s32 1, %s16
    %s33 = scalar_select %p30, %s32, %s16
    %p34 = scmp.ge.s32.totalorder %s33, 2
    %s35 = scalar_select %p34, 0, %s33
    %s36 = ssub.s32 %s16, %s35
    %p37 = scmp.eq.s32.totalorder %s36, 0
    %s39 = sadd.s32 %s38, 1
    %s40 = scalar_select %p37, %s38, %s39
    %p43 = pneg %p37
    %p44 = scmp.eq.s32.totalorder %s9, 1
    %p45 = por %p43, %p44
    %p46 = scmp.ne.s32.totalorder %s38, %s41
    %p47 = scmp.eq.s32.totalorder %s9, 0
    %p48 = por %p46, %p47
    %p49 = scmp.ne.s32.totalorder %s38, %s41
    %p50 = scmp.eq.s32.totalorder %s14, 1
    %p51 = por %p49, %p50
    %p52 = scmp.ne.s32.totalorder %s41, %s42
    %p53 = scmp.eq.s32.totalorder %s14, 0
    %p54 = por %p52, %p53
    %p55 = scmp.ne.s32.totalorder %s41, %s42
    %p56 = scmp.eq.s32.totalorder %s15, 1
    %p57 = por %p55, %p56
    %p59 = scmp.ne.s32.totalorder %s42, %s58
    %p60 = scmp.eq.s32.totalorder %s15, 0
    %p61 = por %p59, %p60
    %s62 = ssub.s32 %s18, %s27
    %p63 = scmp.eq.s32.totalorder %s62, 0
    %s65 = sadd.s32 %s64, 1
    %s66 = scalar_select %p63, %s64, %s65
    %p69 = pneg %p63
    %p70 = scmp.eq.s32.totalorder %s9, 1
    %p71 = por %p69, %p70
    %p72 = scmp.ne.s32.totalorder %s64, %s67
    %p73 = scmp.eq.s32.totalorder %s9, 0
    %p74 = por %p72, %p73
    %p75 = scmp.ne.s32.totalorder %s64, %s67
    %p76 = scmp.eq.s32.totalorder %s14, 1
    %p77 = por %p75, %p76
    %p78 = scmp.ne.s32.totalorder %s67, %s68
    %p79 = scmp.eq.s32.totalorder %s14, 0
    %p80 = por %p78, %p79
    %p81 = scmp.ne.s32.totalorder %s67, %s68
    %p82 = scmp.eq.s32.totalorder %s15, 1
    %p83 = por %p81, %p82
    %p85 = scmp.ne.s32.totalorder %s68, %s84
    %p86 = scmp.eq.s32.totalorder %s15, 0
    %p87 = por %p85, %p86
    %s88 = ssub.s32 %s18, %s27
    %p89 = scmp.eq.s32.totalorder %s88, 0
    %s91 = sadd.s32 %s90, 1
    %s92 = scalar_select %p89, %s90, %s91
    %p95 = pneg %p89
    %p96 = scmp.eq.s32.totalorder %s9, 1
    %p97 = por %p95, %p96
    %p98 = scmp.ne.s32.totalorder %s90, %s93
    %p99 = scmp.eq.s32.totalorder %s9, 0
    %p100 = por %p98, %p99
    %p101 = scmp.ne.s32.totalorder %s90, %s93
    %p102 = scmp.eq.s32.totalorder %s14, 1
    %p103 = por %p101, %p102
    %p104 = scmp.ne.s32.totalorder %s93, %s94
    %p105 = scmp.eq.s32.totalorder %s14, 0
    %p106 = por %p104, %p105
    %p107 = scmp.ne.s32.totalorder %s93, %s94
    %p108 = scmp.eq.s32.totalorder %s15, 1
    %p109 = por %p107, %p108
    %p111 = scmp.ne.s32.totalorder %s94, %s110
    %p112 = scmp.eq.s32.totalorder %s15, 0
    %p113 = por %p111, %p112
    %s114 = ssub.s32 %s16, %s35
    %s115 = ssub.s32 %s17, %s31
    %s116 = sor.u32 %s114, %s115
    %s117 = ssub.s32 %s18, %s27
    %s118 = sor.u32 %s116, %s117
    %p119 = scmp.eq.s32.totalorder %s118, 0
    %s121 = sadd.s32 %s120, 1
    %s122 = scalar_select %p119, %s120, %s121
    %p125 = pneg %p119
    %p126 = scmp.eq.s32.totalorder %s9, 1
    %p127 = por %p125, %p126
    %p128 = scmp.ne.s32.totalorder %s120, %s123
    %p129 = scmp.eq.s32.totalorder %s9, 0
    %p130 = por %p128, %p129
    %p131 = scmp.ne.s32.totalorder %s120, %s123
    %p132 = scmp.eq.s32.totalorder %s14, 1
    %p133 = por %p131, %p132
    %p134 = scmp.ne.s32.totalorder %s123, %s124
    %p135 = scmp.eq.s32.totalorder %s14, 0
    %p136 = por %p134, %p135
    %p137 = scmp.ne.s32.totalorder %s123, %s124
    %p138 = scmp.eq.s32.totalorder %s15, 1
    %p139 = por %p137, %p138
    %p141 = scmp.ne.s32.totalorder %s124, %s140
    %p142 = scmp.eq.s32.totalorder %s15, 0
    %p143 = por %p141, %p142
    %p144 = scmp.le.s32.totalorder 1, %s9
    %p145 = scmp.lt.s32.totalorder %s9, 3
    %p146 = pnand %p144, %p145
    %p147 = pneg %p146
    // Predicated region
    $region9: #{pruned_conv_forward.1} parent=5 // pred_check
      _
    $region10: #{pruned_conv_forward.1} parent=5 // pred_check_branch
      %149 = sbr.rel (%p146) target = $region12
    $region11: #{pruned_conv_forward.1} parent=5 // pred_region
      %s150 = ssub.s32 %s9, 1
      // Predicated region
      $region13: #{pruned_conv_forward.1} parent=11 // pred_check
        %p151 = pneg %p80
      $region14: #{pruned_conv_forward.1} parent=11 // pred_check_branch
        %153 = sbr.rel (%p151) target = $region16
      $region15: #{pruned_conv_forward.1} parent=11 // pred_region
        %p154 = scmp.lt.s32.totalorder %s21, 0
        %s155 = scalar_select %p154, %s21, 0
        %s156 = smul.addr %s155, 4
        %s157 = scalar_lea.vmem %s1, %s156
      $region16: #{pruned_conv_forward.1} parent=11 // pred_fallthru
        _
      // Predicated region
      $region17: #{pruned_conv_forward.1} parent=11 // pred_check
        %p158 = pneg %p106
      $region18: #{pruned_conv_forward.1} parent=11 // pred_check_branch
        %160 = sbr.rel (%p158) target = $region20
      $region19: #{pruned_conv_forward.1} parent=11 // pred_region
        %p161 = scmp.lt.s32.totalorder %s21, 0
        %s162 = scalar_select %p161, %s21, 0
        %s163 = scalar_lea.vmem %s2, %s162
      $region20: #{pruned_conv_forward.1} parent=11 // pred_fallthru
        _
    $region12: #{pruned_conv_forward.1} parent=5 // pred_fallthru
      _
    %p164 = scmp.lt.s32.totalorder %s9, 2
    // Predicated region
    $region21: #{pruned_conv_forward.1} parent=5 // pred_check
      %p165 = pneg %p164
    $region22: #{pruned_conv_forward.1} parent=5 // pred_check_branch
      %167 = sbr.rel (%p165) target = $region24
    $region23: #{pruned_conv_forward.1} parent=5 // pred_region
      // Predicated region
      $region25: #{pruned_conv_forward.1} parent=23 // pred_check
        %p168 = pneg %p48
      $region26: #{pruned_conv_forward.1} parent=23 // pred_check_branch
        %170 = sbr.rel (%p168) target = $region28
      $region27: #{pruned_conv_forward.1} parent=23 // pred_region
        %p171 = scmp.lt.s32.totalorder %s16, 1
        %s172 = scalar_select %p171, %s16, 1
        %s173 = smul.addr %s172, 54
        %s174 = smul.addr %s173, 4
        %s175 = scalar_lea.vmem %s0, %s174
      $region28: #{pruned_conv_forward.1} parent=23 // pred_fallthru
        _
    $region24: #{pruned_conv_forward.1} parent=5 // pred_fallthru
      _
    %p176 = scmp.le.s32.totalorder 1, %s9
    %p177 = scmp.lt.s32.totalorder %s9, 3
    %p178 = pnand %p176, %p177
    %p179 = pneg %p178
    // Predicated region
    $region29: #{pruned_conv_forward.1} parent=5 // pred_check
      _
    $region30: #{pruned_conv_forward.1} parent=5 // pred_check_branch
      %181 = sbr.rel (%p178) target = $region32
    $region31: #{pruned_conv_forward.1} parent=5 // pred_region
      %s182 = ssub.s32 %s9, 1
      %p183 = scmp.lt.s32.totalorder %s19, 1
      %s184 = scalar_select %p183, %s19, 1
      %s185 = smul.addr %s184, 54
      %s186 = smul.addr %s185, 4
      %s187 = scalar_lea.vmem %s0, %s186
      %p188 = pneg %p54
      %p189 = pneg %p51
      %p190 = scmp.lt.s32.totalorder %s21, 0
      %s191 = scalar_select %p190, %s21, 0
      %s192 = smul.addr %s191, 4
      %s193 = scalar_lea.vmem %s1, %s192
      %p194 = pneg %p80
      %p195 = pneg %p77
      %p196 = scmp.lt.s32.totalorder %s21, 0
      %s197 = scalar_select %p196, %s21, 0
      %s198 = scalar_lea.vmem %s2, %s197
      %p199 = pneg %p106
      %p200 = pneg %p103
      %p201 = pneg %p136
      %p202 = pneg %p133
      %s203 = smul.u32 32, %s20
      %p204 = scmp.lt.s32.totalorder %s19, 1
      %s205 = scalar_select %p204, %s19, 1
      %p206 = scmp.lt.s32.totalorder %s203, 31
      %s207 = scalar_select %p206, %s203, 31
      %p208 = scmp.lt.s32.totalorder %s21, 0
      %s209 = scalar_select %p208, %s21, 0
      %s210 = sadd.s32 %s209, %s207
      %s211 = smul.addr %s205, 32
      %s212 = sadd.s32 %s210, %s211
      %s213 = smul.addr %s212, 8
      %s214 = scalar_lea.vmem %s3, %s213
      %p215 = scmp.lt.s32.totalorder %s19, 1
      %s216 = scalar_select %p215, %s19, 1
      %s217 = smul.addr %s216, 54
      %s218 = smul.addr %s217, 4
      %s219 = scalar_lea.vmem %s0, %s218
      %p220 = scmp.lt.s32.totalorder %s21, 0
      %s221 = scalar_select %p220, %s21, 0
      %s222 = smul.addr %s221, 4
      %s223 = scalar_lea.vmem %s1, %s222
      %p224 = scmp.lt.s32.totalorder %s21, 0
      %s225 = scalar_select %p224, %s21, 0
      %s226 = scalar_lea.vmem %s2, %s225
      %s227 = smul.u32 32, %s20
      %p228 = scmp.lt.s32.totalorder %s19, 1
      %s229 = scalar_select %p228, %s19, 1
      %p230 = scmp.lt.s32.totalorder %s227, 31
      %s231 = scalar_select %p230, %s227, 31
      %p232 = scmp.lt.s32.totalorder %s21, 0
      %s233 = scalar_select %p232, %s21, 0
      %s234 = sadd.s32 %s233, %s231
      %s235 = smul.addr %s229, 32
      %s236 = sadd.s32 %s234, %s235
      %s237 = smul.addr %s236, 8
      %s238 = scalar_lea.vmem %s3, %s237
      %s239 = smul.u32 32, %s20
      %p241 = scmp.eq.s32.totalorder %s21, 0
      // Predicated region
      $region33: #{pruned_conv_forward.1} parent=31 // pred_check
        %p242 = pneg %p241
      $region34: #{pruned_conv_forward.1} parent=31 // pred_check_branch
        %244 = sbr.rel (%p242) target = $region36
      $region35: #{pruned_conv_forward.1} parent=31 // pred_region
        %s245 = smul.u32 %s20, 16
        %s246 = smul.u32 %s245, 3
        %s247 = smul.addr %s246, 4
        %s248 = scalar_lea.vmem %s219, %s247
        %v249 = vld [vmem:[%s248] sm:$0xf]
        %v250 = vld [vmem:[%s248 + $0x4] sm:$0xf]
        %v251 = vld [vmem:[%s248 + $0xc] sm:$0xf]
        %v252 = vld [vmem:[%s248 + $0x10] sm:$0xf]
        %v253 = vld [vmem:[%s248 + $0x18] sm:$0xf]
        %v254 = vld [vmem:[%s248 + $0x1c] sm:$0xf]
        %v255 = vld [vmem:[%s248 + $0x24] sm:$0xf]
        %v256 = vld [vmem:[%s248 + $0x28] sm:$0xf]
        %v257 = vld [vmem:[%s248 + $0x30] sm:$0xf]
        %v258 = vld [vmem:[%s248 + $0x34] sm:$0xf]
        %v259 = vld [vmem:[%s248 + $0x3c] sm:$0xf]
        %v260 = vld [vmem:[%s248 + $0x40] sm:$0xf]
        %v261 = vld [vmem:[%s248 + $0x48] sm:$0xf]
        %v262 = vld [vmem:[%s248 + $0x4c] sm:$0xf]
        %v263 = vld [vmem:[%s248 + $0x54] sm:$0xf]
        %v264 = vld [vmem:[%s248 + $0x58] sm:$0xf]
        %v265 = vld [vmem:[%s248 + $0x60] sm:$0xf]
        %v266 = vld [vmem:[%s248 + $0x64] sm:$0xf]
        %v267 = vld [vmem:[%s248 + $0x6c] sm:$0xf]
        %v268 = vld [vmem:[%s248 + $0x70] sm:$0xf]
        %v269 = vld [vmem:[%s248 + $0x78] sm:$0xf]
        %v270 = vld [vmem:[%s248 + $0x7c] sm:$0xf]
        %v271 = vld [vmem:[%s248 + $0x84] sm:$0xf]
        %v272 = vld [vmem:[%s248 + $0x88] sm:$0xf]
        %v273 = vld [vmem:[%s248 + $0x90] sm:$0xf]
        %v274 = vld [vmem:[%s248 + $0x94] sm:$0xf]
        %v275 = vld [vmem:[%s248 + $0x9c] sm:$0xf]
        %v276 = vld [vmem:[%s248 + $0xa0] sm:$0xf]
        %v277 = vld [vmem:[%s248 + $0xa8] sm:$0xf]
        %v278 = vld [vmem:[%s248 + $0xac] sm:$0xf]
        %v279 = vld [vmem:[%s248 + $0xb4] sm:$0xf]
        %v280 = vld [vmem:[%s248 + $0xb8] sm:$0xf]
        %v313 = vunpack.c.l.b16 %v249
        %v314 = vunpack.c.l.b16 %v250
        %v315 = vunpack.c.l.b16 %v251
        %v316 = vunpack.c.l.b16 %v252
        %v317 = vunpack.c.l.b16 %v253
        %v318 = vunpack.c.l.b16 %v254
        %v319 = vunpack.c.l.b16 %v255
        %v320 = vunpack.c.l.b16 %v256
        %v321 = vunpack.c.l.b16 %v257
        %v322 = vunpack.c.l.b16 %v258
        %v323 = vunpack.c.l.b16 %v259
        %v324 = vunpack.c.l.b16 %v260
        %v325 = vunpack.c.l.b16 %v261
        %v326 = vunpack.c.l.b16 %v262
        %v327 = vunpack.c.l.b16 %v263
        %v328 = vunpack.c.l.b16 %v264
        %v329 = vunpack.c.l.b16 %v265
        %v330 = vunpack.c.l.b16 %v266
        %v331 = vunpack.c.l.b16 %v267
        %v332 = vunpack.c.l.b16 %v268
        %v333 = vunpack.c.l.b16 %v269
        %v334 = vunpack.c.l.b16 %v270
        %v335 = vunpack.c.l.b16 %v271
        %v336 = vunpack.c.l.b16 %v272
        %v337 = vunpack.c.l.b16 %v273
        %v338 = vunpack.c.l.b16 %v274
        %v339 = vunpack.c.l.b16 %v275
        %v340 = vunpack.c.l.b16 %v276
        %v341 = vunpack.c.l.b16 %v277
        %v342 = vunpack.c.l.b16 %v278
        %v343 = vunpack.c.l.b16 %v279
        %v344 = vunpack.c.l.b16 %v280
        %v345 = vpack.c.b16 %v314, %v313
        %v346 = vpack.c.b16 %v316, %v315
        %v347 = vpack.c.b16 %v318, %v317
        %v348 = vpack.c.b16 %v320, %v319
        %v349 = vpack.c.b16 %v322, %v321
        %v350 = vpack.c.b16 %v324, %v323
        %v351 = vpack.c.b16 %v326, %v325
        %v352 = vpack.c.b16 %v328, %v327
        %v353 = vpack.c.b16 %v330, %v329
        %v354 = vpack.c.b16 %v332, %v331
        %v355 = vpack.c.b16 %v334, %v333
        %v356 = vpack.c.b16 %v336, %v335
        %v357 = vpack.c.b16 %v338, %v337
        %v358 = vpack.c.b16 %v340, %v339
        %v359 = vpack.c.b16 %v342, %v341
        %v360 = vpack.c.b16 %v344, %v343
        %vm377 = vcmask 130048
        %378 = vst.msk [vmem:[#allocation2] sm:$0xff] %vm377, %v345
        %379 = vst.msk [vmem:[#allocation2 + $0x10] sm:$0xff] %vm377, %v346
        %380 = vst.msk [vmem:[#allocation2 + $0x20] sm:$0xff] %vm377, %v347
        %381 = vst.msk [vmem:[#allocation2 + $0x30] sm:$0xff] %vm377, %v348
        %382 = vst.msk [vmem:[#allocation2 + $0x40] sm:$0xff] %vm377, %v349
        %383 = vst.msk [vmem:[#allocation2 + $0x50] sm:$0xff] %vm377, %v350
        %384 = vst.msk [vmem:[#allocation2 + $0x60] sm:$0xff] %vm377, %v351
        %385 = vst.msk [vmem:[#allocation2 + $0x70] sm:$0xff] %vm377, %v352
        %386 = vst.msk [vmem:[#allocation2 + $0x80] sm:$0xff] %vm377, %v353
        %387 = vst.msk [vmem:[#allocation2 + $0x90] sm:$0xff] %vm377, %v354
        %388 = vst.msk [vmem:[#allocation2 + $0xa0] sm:$0xff] %vm377, %v355
        %389 = vst.msk [vmem:[#allocation2 + $0xb0] sm:$0xff] %vm377, %v356
        %390 = vst.msk [vmem:[#allocation2 + $0xc0] sm:$0xff] %vm377, %v357
        %391 = vst.msk [vmem:[#allocation2 + $0xd0] sm:$0xff] %vm377, %v358
        %392 = vst.msk [vmem:[#allocation2 + $0xe0] sm:$0xff] %vm377, %v359
        %393 = vst.msk [vmem:[#allocation2 + $0xf0] sm:$0xff] %vm377, %v360
        %v394 = vld [vmem:[%s248] sm:$0xf]
        %v395 = vld [vmem:[%s248 + $0x4] sm:$0xf]
        %v396 = vld [vmem:[%s248 + $0x8] sm:$0x1]
        %v397 = vld [vmem:[%s248 + $0xc] sm:$0xf]
        %v398 = vld [vmem:[%s248 + $0x10] sm:$0xf]
        %v399 = vld [vmem:[%s248 + $0x14] sm:$0x1]
        %v400 = vld [vmem:[%s248 + $0x18] sm:$0xf]
        %v401 = vld [vmem:[%s248 + $0x1c] sm:$0xf]
        %v402 = vld [vmem:[%s248 + $0x20] sm:$0x1]
        %v403 = vld [vmem:[%s248 + $0x24] sm:$0xf]
        %v404 = vld [vmem:[%s248 + $0x28] sm:$0xf]
        %v405 = vld [vmem:[%s248 + $0x2c] sm:$0x1]
        %v406 = vld [vmem:[%s248 + $0x30] sm:$0xf]
        %v407 = vld [vmem:[%s248 + $0x34] sm:$0xf]
        %v408 = vld [vmem:[%s248 + $0x38] sm:$0x1]
        %v409 = vld [vmem:[%s248 + $0x3c] sm:$0xf]
        %v410 = vld [vmem:[%s248 + $0x40] sm:$0xf]
        %v411 = vld [vmem:[%s248 + $0x44] sm:$0x1]
        %v412 = vld [vmem:[%s248 + $0x48] sm:$0xf]
        %v413 = vld [vmem:[%s248 + $0x4c] sm:$0xf]
        %v414 = vld [vmem:[%s248 + $0x50] sm:$0x1]
        %v415 = vld [vmem:[%s248 + $0x54] sm:$0xf]
        %v416 = vld [vmem:[%s248 + $0x58] sm:$0xf]
        %v417 = vld [vmem:[%s248 + $0x5c] sm:$0x1]
        %v418 = vld [vmem:[%s248 + $0x60] sm:$0xf]
        %v419 = vld [vmem:[%s248 + $0x64] sm:$0xf]
        %v420 = vld [vmem:[%s248 + $0x68] sm:$0x1]
        %v421 = vld [vmem:[%s248 + $0x6c] sm:$0xf]
        %v422 = vld [vmem:[%s248 + $0x70] sm:$0xf]
        %v423 = vld [vmem:[%s248 + $0x74] sm:$0x1]
        %v424 = vld [vmem:[%s248 + $0x78] sm:$0xf]
        %v425 = vld [vmem:[%s248 + $0x7c] sm:$0xf]
        %v426 = vld [vmem:[%s248 + $0x80] sm:$0x1]
        %v427 = vld [vmem:[%s248 + $0x84] sm:$0xf]
        %v428 = vld [vmem:[%s248 + $0x88] sm:$0xf]
        %v429 = vld [vmem:[%s248 + $0x8c] sm:$0x1]
        %v430 = vld [vmem:[%s248 + $0x90] sm:$0xf]
        %v431 = vld [vmem:[%s248 + $0x94] sm:$0xf]
        %v432 = vld [vmem:[%s248 + $0x98] sm:$0x1]
        %v433 = vld [vmem:[%s248 + $0x9c] sm:$0xf]
        %v434 = vld [vmem:[%s248 + $0xa0] sm:$0xf]
        %v435 = vld [vmem:[%s248 + $0xa4] sm:$0x1]
        %v436 = vld [vmem:[%s248 + $0xa8] sm:$0xf]
        %v437 = vld [vmem:[%s248 + $0xac] sm:$0xf]
        %v438 = vld [vmem:[%s248 + $0xb0] sm:$0x1]
        %v439 = vld [vmem:[%s248 + $0xb4] sm:$0xf]
        %v440 = vld [vmem:[%s248 + $0xb8] sm:$0xf]
        %v441 = vld [vmem:[%s248 + $0xbc] sm:$0x1]
        %vm442 = vsmask.f32 3328
        %vm443 = vsmask.f32 7440
        %vm444 = vmor %vm442, %vm443
        %v446 = vshrl.u32 %v394, 16
        %v448 = vrot.slane %v446, 4
        %v449 = vshll.u32 %v394, 16
        %v451 = vrot.slane %v449, 5
        %v452 = vor.u32 %v448, %v451
        %v453 = vrot.slane %v452, 4
        %v455 = vshll.u32 %v395, 16
        %v457 = vrot.slane %v455, 5
        %v458 = vsel %vm444, %v453, %v457
        %v459 = vshrl.u32 %v395, 16
        %v461 = vrot.slane %v459, 4
        %v462 = vor.u32 %v461, %v457
        %v463 = vrot.slane %v462, 4
        %v465 = vshll.u32 %v396, 16
        %v467 = vrot.slane %v465, 5
        %v468 = vsel %vm444, %v463, %v467
        %v470 = vshrl.u32 %v397, 16
        %v472 = vrot.slane %v470, 4
        %v473 = vshll.u32 %v397, 16
        %v475 = vrot.slane %v473, 5
        %v476 = vor.u32 %v472, %v475
        %v477 = vrot.slane %v476, 4
        %v479 = vshll.u32 %v398, 16
        %v481 = vrot.slane %v479, 5
        %v482 = vsel %vm444, %v477, %v481
        %v483 = vshrl.u32 %v398, 16
        %v485 = vrot.slane %v483, 4
        %v486 = vor.u32 %v485, %v481
        %v487 = vrot.slane %v486, 4
        %v489 = vshll.u32 %v399, 16
        %v491 = vrot.slane %v489, 5
        %v492 = vsel %vm444, %v487, %v491
        %v494 = vshrl.u32 %v400, 16
        %v496 = vrot.slane %v494, 4
        %v497 = vshll.u32 %v400, 16
        %v499 = vrot.slane %v497, 5
        %v500 = vor.u32 %v496, %v499
        %v501 = vrot.slane %v500, 4
        %v503 = vshll.u32 %v401, 16
        %v505 = vrot.slane %v503, 5
        %v506 = vsel %vm444, %v501, %v505
        %v507 = vshrl.u32 %v401, 16
        %v509 = vrot.slane %v507, 4
        %v510 = vor.u32 %v509, %v505
        %v511 = vrot.slane %v510, 4
        %v513 = vshll.u32 %v402, 16
        %v515 = vrot.slane %v513, 5
        %v516 = vsel %vm444, %v511, %v515
        %v518 = vshrl.u32 %v403, 16
        %v520 = vrot.slane %v518, 4
        %v521 = vshll.u32 %v403, 16
        %v523 = vrot.slane %v521, 5
        %v524 = vor.u32 %v520, %v523
        %v525 = vrot.slane %v524, 4
        %v527 = vshll.u32 %v404, 16
        %v529 = vrot.slane %v527, 5
        %v530 = vsel %vm444, %v525, %v529
        %v531 = vshrl.u32 %v404, 16
        %v533 = vrot.slane %v531, 4
        %v534 = vor.u32 %v533, %v529
        %v535 = vrot.slane %v534, 4
        %v537 = vshll.u32 %v405, 16
        %v539 = vrot.slane %v537, 5
        %v540 = vsel %vm444, %v535, %v539
        %v542 = vshrl.u32 %v406, 16
        %v544 = vrot.slane %v542, 4
        %v545 = vshll.u32 %v406, 16
        %v547 = vrot.slane %v545, 5
        %v548 = vor.u32 %v544, %v547
        %v549 = vrot.slane %v548, 4
        %v551 = vshll.u32 %v407, 16
        %v553 = vrot.slane %v551, 5
        %v554 = vsel %vm444, %v549, %v553
        %v555 = vshrl.u32 %v407, 16
        %v557 = vrot.slane %v555, 4
        %v558 = vor.u32 %v557, %v553
        %v559 = vrot.slane %v558, 4
        %v561 = vshll.u32 %v408, 16
        %v563 = vrot.slane %v561, 5
        %v564 = vsel %vm444, %v559, %v563
        %v566 = vshrl.u32 %v409, 16
        %v568 = vrot.slane %v566, 4
        %v569 = vshll.u32 %v409, 16
        %v571 = vrot.slane %v569, 5
        %v572 = vor.u32 %v568, %v571
        %v573 = vrot.slane %v572, 4
        %v575 = vshll.u32 %v410, 16
        %v577 = vrot.slane %v575, 5
        %v578 = vsel %vm444, %v573, %v577
        %v579 = vshrl.u32 %v410, 16
        %v581 = vrot.slane %v579, 4
        %v582 = vor.u32 %v581, %v577
        %v583 = vrot.slane %v582, 4
        %v585 = vshll.u32 %v411, 16
        %v587 = vrot.slane %v585, 5
        %v588 = vsel %vm444, %v583, %v587
        %v590 = vshrl.u32 %v412, 16
        %v592 = vrot.slane %v590, 4
        %v593 = vshll.u32 %v412, 16
        %v595 = vrot.slane %v593, 5
        %v596 = vor.u32 %v592, %v595
        %v597 = vrot.slane %v596, 4
        %v599 = vshll.u32 %v413, 16
        %v601 = vrot.slane %v599, 5
        %v602 = vsel %vm444, %v597, %v601
        %v603 = vshrl.u32 %v413, 16
        %v605 = vrot.slane %v603, 4
        %v606 = vor.u32 %v605, %v601
        %v607 = vrot.slane %v606, 4
        %v609 = vshll.u32 %v414, 16
        %v611 = vrot.slane %v609, 5
        %v612 = vsel %vm444, %v607, %v611
        %v614 = vshrl.u32 %v415, 16
        %v616 = vrot.slane %v614, 4
        %v617 = vshll.u32 %v415, 16
        %v619 = vrot.slane %v617, 5
        %v620 = vor.u32 %v616, %v619
        %v621 = vrot.slane %v620, 4
        %v623 = vshll.u32 %v416, 16
        %v625 = vrot.slane %v623, 5
        %v626 = vsel %vm444, %v621, %v625
        %v627 = vshrl.u32 %v416, 16
        %v629 = vrot.slane %v627, 4
        %v630 = vor.u32 %v629, %v625
        %v631 = vrot.slane %v630, 4
        %v633 = vshll.u32 %v417, 16
        %v635 = vrot.slane %v633, 5
        %v636 = vsel %vm444, %v631, %v635
        %v638 = vshrl.u32 %v418, 16
        %v640 = vrot.slane %v638, 4
        %v641 = vshll.u32 %v418, 16
        %v643 = vrot.slane %v641, 5
        %v644 = vor.u32 %v640, %v643
        %v645 = vrot.slane %v644, 4
        %v647 = vshll.u32 %v419, 16
        %v649 = vrot.slane %v647, 5
        %v650 = vsel %vm444, %v645, %v649
        %v651 = vshrl.u32 %v419, 16
        %v653 = vrot.slane %v651, 4
        %v654 = vor.u32 %v653, %v649
        %v655 = vrot.slane %v654, 4
        %v657 = vshll.u32 %v420, 16
        %v659 = vrot.slane %v657, 5
        %v660 = vsel %vm444, %v655, %v659
        %v662 = vshrl.u32 %v421, 16
        %v664 = vrot.slane %v662, 4
        %v665 = vshll.u32 %v421, 16
        %v667 = vrot.slane %v665, 5
        %v668 = vor.u32 %v664, %v667
        %v669 = vrot.slane %v668, 4
        %v671 = vshll.u32 %v422, 16
        %v673 = vrot.slane %v671, 5
        %v674 = vsel %vm444, %v669, %v673
        %v675 = vshrl.u32 %v422, 16
        %v677 = vrot.slane %v675, 4
        %v678 = vor.u32 %v677, %v673
        %v679 = vrot.slane %v678, 4
        %v681 = vshll.u32 %v423, 16
        %v683 = vrot.slane %v681, 5
        %v684 = vsel %vm444, %v679, %v683
        %v686 = vshrl.u32 %v424, 16
        %v688 = vrot.slane %v686, 4
        %v689 = vshll.u32 %v424, 16
        %v691 = vrot.slane %v689, 5
        %v692 = vor.u32 %v688, %v691
        %v693 = vrot.slane %v692, 4
        %v695 = vshll.u32 %v425, 16
        %v697 = vrot.slane %v695, 5
        %v698 = vsel %vm444, %v693, %v697
        %v699 = vshrl.u32 %v425, 16
        %v701 = vrot.slane %v699, 4
        %v702 = vor.u32 %v701, %v697
        %v703 = vrot.slane %v702, 4
        %v705 = vshll.u32 %v426, 16
        %v707 = vrot.slane %v705, 5
        %v708 = vsel %vm444, %v703, %v707
        %v710 = vshrl.u32 %v427, 16
        %v712 = vrot.slane %v710, 4
        %v713 = vshll.u32 %v427, 16
        %v715 = vrot.slane %v713, 5
        %v716 = vor.u32 %v712, %v715
        %v717 = vrot.slane %v716, 4
        %v719 = vshll.u32 %v428, 16
        %v721 = vrot.slane %v719, 5
        %v722 = vsel %vm444, %v717, %v721
        %v723 = vshrl.u32 %v428, 16
        %v725 = vrot.slane %v723, 4
        %v726 = vor.u32 %v725, %v721
        %v727 = vrot.slane %v726, 4
        %v729 = vshll.u32 %v429, 16
        %v731 = vrot.slane %v729, 5
        %v732 = vsel %vm444, %v727, %v731
        %v734 = vshrl.u32 %v430, 16
        %v736 = vrot.slane %v734, 4
        %v737 = vshll.u32 %v430, 16
        %v739 = vrot.slane %v737, 5
        %v740 = vor.u32 %v736, %v739
        %v741 = vrot.slane %v740, 4
        %v743 = vshll.u32 %v431, 16
        %v745 = vrot.slane %v743, 5
        %v746 = vsel %vm444, %v741, %v745
        %v747 = vshrl.u32 %v431, 16
        %v749 = vrot.slane %v747, 4
        %v750 = vor.u32 %v749, %v745
        %v751 = vrot.slane %v750, 4
        %v753 = vshll.u32 %v432, 16
        %v755 = vrot.slane %v753, 5
        %v756 = vsel %vm444, %v751, %v755
        %v758 = vshrl.u32 %v433, 16
        %v760 = vrot.slane %v758, 4
        %v761 = vshll.u32 %v433, 16
        %v763 = vrot.slane %v761, 5
        %v764 = vor.u32 %v760, %v763
        %v765 = vrot.slane %v764, 4
        %v767 = vshll.u32 %v434, 16
        %v769 = vrot.slane %v767, 5
        %v770 = vsel %vm444, %v765, %v769
        %v771 = vshrl.u32 %v434, 16
        %v773 = vrot.slane %v771, 4
        %v774 = vor.u32 %v773, %v769
        %v775 = vrot.slane %v774, 4
        %v777 = vshll.u32 %v435, 16
        %v779 = vrot.slane %v777, 5
        %v780 = vsel %vm444, %v775, %v779
        %v782 = vshrl.u32 %v436, 16
        %v784 = vrot.slane %v782, 4
        %v785 = vshll.u32 %v436, 16
        %v787 = vrot.slane %v785, 5
        %v788 = vor.u32 %v784, %v787
        %v789 = vrot.slane %v788, 4
        %v791 = vshll.u32 %v437, 16
        %v793 = vrot.slane %v791, 5
        %v794 = vsel %vm444, %v789, %v793
        %v795 = vshrl.u32 %v437, 16
        %v797 = vrot.slane %v795, 4
        %v798 = vor.u32 %v797, %v793
        %v799 = vrot.slane %v798, 4
        %v801 = vshll.u32 %v438, 16
        %v803 = vrot.slane %v801, 5
        %v804 = vsel %vm444, %v799, %v803
        %v806 = vshrl.u32 %v439, 16
        %v808 = vrot.slane %v806, 4
        %v809 = vshll.u32 %v439, 16
        %v811 = vrot.slane %v809, 5
        %v812 = vor.u32 %v808, %v811
        %v813 = vrot.slane %v812, 4
        %v815 = vshll.u32 %v440, 16
        %v817 = vrot.slane %v815, 5
        %v818 = vsel %vm444, %v813, %v817
        %v819 = vshrl.u32 %v440, 16
        %v821 = vrot.slane %v819, 4
        %v822 = vor.u32 %v821, %v817
        %v823 = vrot.slane %v822, 4
        %v825 = vshll.u32 %v441, 16
        %v827 = vrot.slane %v825, 5
        %v828 = vsel %vm444, %v823, %v827
        %v829 = vunpack.c.l.b16 %v458
        %v830 = vunpack.c.l.b16 %v468
        %v831 = vunpack.c.l.b16 %v482
        %v832 = vunpack.c.l.b16 %v492
        %v833 = vunpack.c.l.b16 %v506
        %v834 = vunpack.c.l.b16 %v516
        %v835 = vunpack.c.l.b16 %v530
        %v836 = vunpack.c.l.b16 %v540
        %v837 = vunpack.c.l.b16 %v554
        %v838 = vunpack.c.l.b16 %v564
        %v839 = vunpack.c.l.b16 %v578
        %v840 = vunpack.c.l.b16 %v588
        %v841 = vunpack.c.l.b16 %v602
        %v842 = vunpack.c.l.b16 %v612
        %v843 = vunpack.c.l.b16 %v626
        %v844 = vunpack.c.l.b16 %v636
        %v845 = vunpack.c.l.b16 %v650
        %v846 = vunpack.c.l.b16 %v660
        %v847 = vunpack.c.l.b16 %v674
        %v848 = vunpack.c.l.b16 %v684
        %v849 = vunpack.c.l.b16 %v698
        %v850 = vunpack.c.l.b16 %v708
        %v851 = vunpack.c.l.b16 %v722
        %v852 = vunpack.c.l.b16 %v732
        %v853 = vunpack.c.l.b16 %v746
        %v854 = vunpack.c.l.b16 %v756
        %v855 = vunpack.c.l.b16 %v770
        %v856 = vunpack.c.l.b16 %v780
        %v857 = vunpack.c.l.b16 %v794
        %v858 = vunpack.c.l.b16 %v804
        %v859 = vunpack.c.l.b16 %v818
        %v860 = vunpack.c.l.b16 %v828
        %v861 = vpack.c.b16 %v830, %v829
        %v862 = vpack.c.b16 %v832, %v831
        %v863 = vpack.c.b16 %v834, %v833
        %v864 = vpack.c.b16 %v836, %v835
        %v865 = vpack.c.b16 %v838, %v837
        %v866 = vpack.c.b16 %v840, %v839
        %v867 = vpack.c.b16 %v842, %v841
        %v868 = vpack.c.b16 %v844, %v843
        %v869 = vpack.c.b16 %v846, %v845
        %v870 = vpack.c.b16 %v848, %v847
        %v871 = vpack.c.b16 %v850, %v849
        %v872 = vpack.c.b16 %v852, %v851
        %v873 = vpack.c.b16 %v854, %v853
        %v874 = vpack.c.b16 %v856, %v855
        %v875 = vpack.c.b16 %v858, %v857
        %v876 = vpack.c.b16 %v860, %v859
        %877 = vrot.lane.b32.xlu0 %v861, 16
        %v878 = vpop.permute.xlu0 %877
        %879 = vrot.lane.b32.xlu0 %v862, 16
        %v880 = vpop.permute.xlu0 %879
        %881 = vrot.lane.b32.xlu0 %v863, 16
        %v882 = vpop.permute.xlu0 %881
        %883 = vrot.lane.b32.xlu0 %v864, 16
        %v884 = vpop.permute.xlu0 %883
        %885 = vrot.lane.b32.xlu0 %v865, 16
        %v886 = vpop.permute.xlu0 %885
        %887 = vrot.lane.b32.xlu0 %v866, 16
        %v888 = vpop.permute.xlu0 %887
        %889 = vrot.lane.b32.xlu0 %v867, 16
        %v890 = vpop.permute.xlu0 %889
        %891 = vrot.lane.b32.xlu0 %v868, 16
        %v892 = vpop.permute.xlu0 %891
        %893 = vrot.lane.b32.xlu0 %v869, 16
        %v894 = vpop.permute.xlu0 %893
        %895 = vrot.lane.b32.xlu0 %v870, 16
        %v896 = vpop.permute.xlu0 %895
        %897 = vrot.lane.b32.xlu0 %v871, 16
        %v898 = vpop.permute.xlu0 %897
        %899 = vrot.lane.b32.xlu0 %v872, 16
        %v900 = vpop.permute.xlu0 %899
        %901 = vrot.lane.b32.xlu0 %v873, 16
        %v902 = vpop.permute.xlu0 %901
        %903 = vrot.lane.b32.xlu0 %v874, 16
        %v904 = vpop.permute.xlu0 %903
        %905 = vrot.lane.b32.xlu0 %v875, 16
        %v906 = vpop.permute.xlu0 %905
        %907 = vrot.lane.b32.xlu0 %v876, 16
        %v908 = vpop.permute.xlu0 %907
        %vm925 = vcmask 261248
        %926 = vst.msk [vmem:[#allocation2] sm:$0xff] %vm925, %v878
        %927 = vst.msk [vmem:[#allocation2 + $0x10] sm:$0xff] %vm925, %v880
        %928 = vst.msk [vmem:[#allocation2 + $0x20] sm:$0xff] %vm925, %v882
        %929 = vst.msk [vmem:[#allocation2 + $0x30] sm:$0xff] %vm925, %v884
        %930 = vst.msk [vmem:[#allocation2 + $0x40] sm:$0xff] %vm925, %v886
        %931 = vst.msk [vmem:[#allocation2 + $0x50] sm:$0xff] %vm925, %v888
        %932 = vst.msk [vmem:[#allocation2 + $0x60] sm:$0xff] %vm925, %v890
        %933 = vst.msk [vmem:[#allocation2 + $0x70] sm:$0xff] %vm925, %v892
        %934 = vst.msk [vmem:[#allocation2 + $0x80] sm:$0xff] %vm925, %v894
        %935 = vst.msk [vmem:[#allocation2 + $0x90] sm:$0xff] %vm925, %v896
        %936 = vst.msk [vmem:[#allocation2 + $0xa0] sm:$0xff] %vm925, %v898
        %937 = vst.msk [vmem:[#allocation2 + $0xb0] sm:$0xff] %vm925, %v900
        %938 = vst.msk [vmem:[#allocation2 + $0xc0] sm:$0xff] %vm925, %v902
        %939 = vst.msk [vmem:[#allocation2 + $0xd0] sm:$0xff] %vm925, %v904
        %940 = vst.msk [vmem:[#allocation2 + $0xe0] sm:$0xff] %vm925, %v906
        %941 = vst.msk [vmem:[#allocation2 + $0xf0] sm:$0xff] %vm925, %v908
        %v942 = vld [vmem:[%s248] sm:$0xe]
        %v943 = vld [vmem:[%s248 + $0x4] sm:$0xf]
        %v944 = vld [vmem:[%s248 + $0x8] sm:$0x1]
        %v945 = vld [vmem:[%s248 + $0xc] sm:$0xe]
        %v946 = vld [vmem:[%s248 + $0x10] sm:$0xf]
        %v947 = vld [vmem:[%s248 + $0x14] sm:$0x1]
        %v948 = vld [vmem:[%s248 + $0x18] sm:$0xe]
        %v949 = vld [vmem:[%s248 + $0x1c] sm:$0xf]
        %v950 = vld [vmem:[%s248 + $0x20] sm:$0x1]
        %v951 = vld [vmem:[%s248 + $0x24] sm:$0xe]
        %v952 = vld [vmem:[%s248 + $0x28] sm:$0xf]
        %v953 = vld [vmem:[%s248 + $0x2c] sm:$0x1]
        %v954 = vld [vmem:[%s248 + $0x30] sm:$0xe]
        %v955 = vld [vmem:[%s248 + $0x34] sm:$0xf]
        %v956 = vld [vmem:[%s248 + $0x38] sm:$0x1]
        %v957 = vld [vmem:[%s248 + $0x3c] sm:$0xe]
        %v958 = vld [vmem:[%s248 + $0x40] sm:$0xf]
        %v959 = vld [vmem:[%s248 + $0x44] sm:$0x1]
        %v960 = vld [vmem:[%s248 + $0x48] sm:$0xe]
        %v961 = vld [vmem:[%s248 + $0x4c] sm:$0xf]
        %v962 = vld [vmem:[%s248 + $0x50] sm:$0x1]
        %v963 = vld [vmem:[%s248 + $0x54] sm:$0xe]
        %v964 = vld [vmem:[%s248 + $0x58] sm:$0xf]
        %v965 = vld [vmem:[%s248 + $0x5c] sm:$0x1]
        %v966 = vld [vmem:[%s248 + $0x60] sm:$0xe]
        %v967 = vld [vmem:[%s248 + $0x64] sm:$0xf]
        %v968 = vld [vmem:[%s248 + $0x68] sm:$0x1]
        %v969 = vld [vmem:[%s248 + $0x6c] sm:$0xe]
        %v970 = vld [vmem:[%s248 + $0x70] sm:$0xf]
        %v971 = vld [vmem:[%s248 + $0x74] sm:$0x1]
        %v972 = vld [vmem:[%s248 + $0x78] sm:$0xe]
        %v973 = vld [vmem:[%s248 + $0x7c] sm:$0xf]
        %v974 = vld [vmem:[%s248 + $0x80] sm:$0x1]
        %v975 = vld [vmem:[%s248 + $0x84] sm:$0xe]
        %v976 = vld [vmem:[%s248 + $0x88] sm:$0xf]
        %v977 = vld [vmem:[%s248 + $0x8c] sm:$0x1]
        %v978 = vld [vmem:[%s248 + $0x90] sm:$0xe]
        %v979 = vld [vmem:[%s248 + $0x94] sm:$0xf]
        %v980 = vld [vmem:[%s248 + $0x98] sm:$0x1]
        %v981 = vld [vmem:[%s248 + $0x9c] sm:$0xe]
        %v982 = vld [vmem:[%s248 + $0xa0] sm:$0xf]
        %v983 = vld [vmem:[%s248 + $0xa4] sm:$0x1]
        %v984 = vld [vmem:[%s248 + $0xa8] sm:$0xe]
        %v985 = vld [vmem:[%s248 + $0xac] sm:$0xf]
        %v986 = vld [vmem:[%s248 + $0xb0] sm:$0x1]
        %v987 = vld [vmem:[%s248 + $0xb4] sm:$0xe]
        %v988 = vld [vmem:[%s248 + $0xb8] sm:$0xf]
        %v989 = vld [vmem:[%s248 + $0xbc] sm:$0x1]
        %vm1038 = vcmask 1042432
        %vm1039 = vcmask 1046532
        %vm1040 = vmor %vm1038, %vm1039
        %v1041 = vrot.slane %v942, 5
        %v1042 = vrot.slane %v1041, 4
        %v1043 = vrot.slane %v943, 5
        %v1044 = vsel %vm1040, %v1042, %v1043
        %v1045 = vrot.slane %v1043, 4
        %v1046 = vrot.slane %v944, 5
        %v1047 = vsel %vm1040, %v1045, %v1046
        %v1048 = vrot.slane %v945, 5
        %v1049 = vrot.slane %v1048, 4
        %v1050 = vrot.slane %v946, 5
        %v1051 = vsel %vm1040, %v1049, %v1050
        %v1052 = vrot.slane %v1050, 4
        %v1053 = vrot.slane %v947, 5
        %v1054 = vsel %vm1040, %v1052, %v1053
        %v1055 = vrot.slane %v948, 5
        %v1056 = vrot.slane %v1055, 4
        %v1057 = vrot.slane %v949, 5
        %v1058 = vsel %vm1040, %v1056, %v1057
        %v1059 = vrot.slane %v1057, 4
        %v1060 = vrot.slane %v950, 5
        %v1061 = vsel %vm1040, %v1059, %v1060
        %v1062 = vrot.slane %v951, 5
        %v1063 = vrot.slane %v1062, 4
        %v1064 = vrot.slane %v952, 5
        %v1065 = vsel %vm1040, %v1063, %v1064
        %v1066 = vrot.slane %v1064, 4
        %v1067 = vrot.slane %v953, 5
        %v1068 = vsel %vm1040, %v1066, %v1067
        %v1069 = vrot.slane %v954, 5
        %v1070 = vrot.slane %v1069, 4
        %v1071 = vrot.slane %v955, 5
        %v1072 = vsel %vm1040, %v1070, %v1071
        %v1073 = vrot.slane %v1071, 4
        %v1074 = vrot.slane %v956, 5
        %v1075 = vsel %vm1040, %v1073, %v1074
        %v1076 = vrot.slane %v957, 5
        %v1077 = vrot.slane %v1076, 4
        %v1078 = vrot.slane %v958, 5
        %v1079 = vsel %vm1040, %v1077, %v1078
        %v1080 = vrot.slane %v1078, 4
        %v1081 = vrot.slane %v959, 5
        %v1082 = vsel %vm1040, %v1080, %v1081
        %v1083 = vrot.slane %v960, 5
        %v1084 = vrot.slane %v1083, 4
        %v1085 = vrot.slane %v961, 5
        %v1086 = vsel %vm1040, %v1084, %v1085
        %v1087 = vrot.slane %v1085, 4
        %v1088 = vrot.slane %v962, 5
        %v1089 = vsel %vm1040, %v1087, %v1088
        %v1090 = vrot.slane %v963, 5
        %v1091 = vrot.slane %v1090, 4
        %v1092 = vrot.slane %v964, 5
        %v1093 = vsel %vm1040, %v1091, %v1092
        %v1094 = vrot.slane %v1092, 4
        %v1095 = vrot.slane %v965, 5
        %v1096 = vsel %vm1040, %v1094, %v1095
        %v1097 = vrot.slane %v966, 5
        %v1098 = vrot.slane %v1097, 4
        %v1099 = vrot.slane %v967, 5
        %v1100 = vsel %vm1040, %v1098, %v1099
        %v1101 = vrot.slane %v1099, 4
        %v1102 = vrot.slane %v968, 5
        %v1103 = vsel %vm1040, %v1101, %v1102
        %v1104 = vrot.slane %v969, 5
        %v1105 = vrot.slane %v1104, 4
        %v1106 = vrot.slane %v970, 5
        %v1107 = vsel %vm1040, %v1105, %v1106
        %v1108 = vrot.slane %v1106, 4
        %v1109 = vrot.slane %v971, 5
        %v1110 = vsel %vm1040, %v1108, %v1109
        %v1111 = vrot.slane %v972, 5
        %v1112 = vrot.slane %v1111, 4
        %v1113 = vrot.slane %v973, 5
        %v1114 = vsel %vm1040, %v1112, %v1113
        %v1115 = vrot.slane %v1113, 4
        %v1116 = vrot.slane %v974, 5
        %v1117 = vsel %vm1040, %v1115, %v1116
        %v1118 = vrot.slane %v975, 5
        %v1119 = vrot.slane %v1118, 4
        %v1120 = vrot.slane %v976, 5
        %v1121 = vsel %vm1040, %v1119, %v1120
        %v1122 = vrot.slane %v1120, 4
        %v1123 = vrot.slane %v977, 5
        %v1124 = vsel %vm1040, %v1122, %v1123
        %v1125 = vrot.slane %v978, 5
        %v1126 = vrot.slane %v1125, 4
        %v1127 = vrot.slane %v979, 5
        %v1128 = vsel %vm1040, %v1126, %v1127
        %v1129 = vrot.slane %v1127, 4
        %v1130 = vrot.slane %v980, 5
        %v1131 = vsel %vm1040, %v1129, %v1130
        %v1132 = vrot.slane %v981, 5
        %v1133 = vrot.slane %v1132, 4
        %v1134 = vrot.slane %v982, 5
        %v1135 = vsel %vm1040, %v1133, %v1134
        %v1136 = vrot.slane %v1134, 4
        %v1137 = vrot.slane %v983, 5
        %v1138 = vsel %vm1040, %v1136, %v1137
        %v1139 = vrot.slane %v984, 5
        %v1140 = vrot.slane %v1139, 4
        %v1141 = vrot.slane %v985, 5
        %v1142 = vsel %vm1040, %v1140, %v1141
        %v1143 = vrot.slane %v1141, 4
        %v1144 = vrot.slane %v986, 5
        %v1145 = vsel %vm1040, %v1143, %v1144
        %v1146 = vrot.slane %v987, 5
        %v1147 = vrot.slane %v1146, 4
        %v1148 = vrot.slane %v988, 5
        %v1149 = vsel %vm1040, %v1147, %v1148
        %v1150 = vrot.slane %v1148, 4
        %v1151 = vrot.slane %v989, 5
        %v1152 = vsel %vm1040, %v1150, %v1151
        %v1153 = vunpack.c.l.b16 %v1044
        %v1154 = vunpack.c.l.b16 %v1047
        %v1155 = vunpack.c.l.b16 %v1051
        %v1156 = vunpack.c.l.b16 %v1054
        %v1157 = vunpack.c.l.b16 %v1058
        %v1158 = vunpack.c.l.b16 %v1061
        %v1159 = vunpack.c.l.b16 %v1065
        %v1160 = vunpack.c.l.b16 %v1068
        %v1161 = vunpack.c.l.b16 %v1072
        %v1162 = vunpack.c.l.b16 %v1075
        %v1163 = vunpack.c.l.b16 %v1079
        %v1164 = vunpack.c.l.b16 %v1082
        %v1165 = vunpack.c.l.b16 %v1086
        %v1166 = vunpack.c.l.b16 %v1089
        %v1167 = vunpack.c.l.b16 %v1093
        %v1168 = vunpack.c.l.b16 %v1096
        %v1169 = vunpack.c.l.b16 %v1100
        %v1170 = vunpack.c.l.b16 %v1103
        %v1171 = vunpack.c.l.b16 %v1107
        %v1172 = vunpack.c.l.b16 %v1110
        %v1173 = vunpack.c.l.b16 %v1114
        %v1174 = vunpack.c.l.b16 %v1117
        %v1175 = vunpack.c.l.b16 %v1121
        %v1176 = vunpack.c.l.b16 %v1124
        %v1177 = vunpack.c.l.b16 %v1128
        %v1178 = vunpack.c.l.b16 %v1131
        %v1179 = vunpack.c.l.b16 %v1135
        %v1180 = vunpack.c.l.b16 %v1138
        %v1181 = vunpack.c.l.b16 %v1142
        %v1182 = vunpack.c.l.b16 %v1145
        %v1183 = vunpack.c.l.b16 %v1149
        %v1184 = vunpack.c.l.b16 %v1152
        %v1185 = vpack.c.b16 %v1154, %v1153
        %v1186 = vpack.c.b16 %v1156, %v1155
        %v1187 = vpack.c.b16 %v1158, %v1157
        %v1188 = vpack.c.b16 %v1160, %v1159
        %v1189 = vpack.c.b16 %v1162, %v1161
        %v1190 = vpack.c.b16 %v1164, %v1163
        %v1191 = vpack.c.b16 %v1166, %v1165
        %v1192 = vpack.c.b16 %v1168, %v1167
        %v1193 = vpack.c.b16 %v1170, %v1169
        %v1194 = vpack.c.b16 %v1172, %v1171
        %v1195 = vpack.c.b16 %v1174, %v1173
        %v1196 = vpack.c.b16 %v1176, %v1175
        %v1197 = vpack.c.b16 %v1178, %v1177
        %v1198 = vpack.c.b16 %v1180, %v1179
        %v1199 = vpack.c.b16 %v1182, %v1181
        %v1200 = vpack.c.b16 %v1184, %v1183
        %1201 = vrot.lane.b32.xlu0 %v1185, 32
        %v1202 = vpop.permute.xlu0 %1201
        %1203 = vrot.lane.b32.xlu0 %v1186, 32
        %v1204 = vpop.permute.xlu0 %1203
        %1205 = vrot.lane.b32.xlu0 %v1187, 32
        %v1206 = vpop.permute.xlu0 %1205
        %1207 = vrot.lane.b32.xlu0 %v1188, 32
        %v1208 = vpop.permute.xlu0 %1207
        %1209 = vrot.lane.b32.xlu0 %v1189, 32
        %v1210 = vpop.permute.xlu0 %1209
        %1211 = vrot.lane.b32.xlu0 %v1190, 32
        %v1212 = vpop.permute.xlu0 %1211
        %1213 = vrot.lane.b32.xlu0 %v1191, 32
        %v1214 = vpop.permute.xlu0 %1213
        %1215 = vrot.lane.b32.xlu0 %v1192, 32
        %v1216 = vpop.permute.xlu0 %1215
        %1217 = vrot.lane.b32.xlu0 %v1193, 32
        %v1218 = vpop.permute.xlu0 %1217
        %1219 = vrot.lane.b32.xlu0 %v1194, 32
        %v1220 = vpop.permute.xlu0 %1219
        %1221 = vrot.lane.b32.xlu0 %v1195, 32
        %v1222 = vpop.permute.xlu0 %1221
        %1223 = vrot.lane.b32.xlu0 %v1196, 32
        %v1224 = vpop.permute.xlu0 %1223
        %1225 = vrot.lane.b32.xlu0 %v1197, 32
        %v1226 = vpop.permute.xlu0 %1225
        %1227 = vrot.lane.b32.xlu0 %v1198, 32
        %v1228 = vpop.permute.xlu0 %1227
        %1229 = vrot.lane.b32.xlu0 %v1199, 32
        %v1230 = vpop.permute.xlu0 %1229
        %1231 = vrot.lane.b32.xlu0 %v1200, 32
        %v1232 = vpop.permute.xlu0 %1231
        %vm1249 = vcmask 392448
        %1250 = vst.msk [vmem:[#allocation2] sm:$0xff] %vm1249, %v1202
        %1251 = vst.msk [vmem:[#allocation2 + $0x10] sm:$0xff] %vm1249, %v1204
        %1252 = vst.msk [vmem:[#allocation2 + $0x20] sm:$0xff] %vm1249, %v1206
        %1253 = vst.msk [vmem:[#allocation2 + $0x30] sm:$0xff] %vm1249, %v1208
        %1254 = vst.msk [vmem:[#allocation2 + $0x40] sm:$0xff] %vm1249, %v1210
        %1255 = vst.msk [vmem:[#allocation2 + $0x50] sm:$0xff] %vm1249, %v1212
        %1256 = vst.msk [vmem:[#allocation2 + $0x60] sm:$0xff] %vm1249, %v1214
        %1257 = vst.msk [vmem:[#allocation2 + $0x70] sm:$0xff] %vm1249, %v1216
        %1258 = vst.msk [vmem:[#allocation2 + $0x80] sm:$0xff] %vm1249, %v1218
        %1259 = vst.msk [vmem:[#allocation2 + $0x90] sm:$0xff] %vm1249, %v1220
        %1260 = vst.msk [vmem:[#allocation2 + $0xa0] sm:$0xff] %vm1249, %v1222
        %1261 = vst.msk [vmem:[#allocation2 + $0xb0] sm:$0xff] %vm1249, %v1224
        %1262 = vst.msk [vmem:[#allocation2 + $0xc0] sm:$0xff] %vm1249, %v1226
        %1263 = vst.msk [vmem:[#allocation2 + $0xd0] sm:$0xff] %vm1249, %v1228
        %1264 = vst.msk [vmem:[#allocation2 + $0xe0] sm:$0xff] %vm1249, %v1230
        %1265 = vst.msk [vmem:[#allocation2 + $0xf0] sm:$0xff] %vm1249, %v1232
        %s1266 = sadd.s32 %s245, 1
        %s1267 = smul.u32 %s1266, 3
        %s1268 = smul.addr %s1267, 4
        %s1269 = scalar_lea.vmem %s219, %s1268
        %v1270 = vld [vmem:[%s1269] sm:$0xf]
        %v1271 = vld [vmem:[%s1269 + $0x4] sm:$0xf]
        %v1272 = vld [vmem:[%s1269 + $0xc] sm:$0xf]
        %v1273 = vld [vmem:[%s1269 + $0x10] sm:$0xf]
        %v1274 = vld [vmem:[%s1269 + $0x18] sm:$0xf]
        %v1275 = vld [vmem:[%s1269 + $0x1c] sm:$0xf]
        %v1276 = vld [vmem:[%s1269 + $0x24] sm:$0xf]
        %v1277 = vld [vmem:[%s1269 + $0x28] sm:$0xf]
        %v1278 = vld [vmem:[%s1269 + $0x30] sm:$0xf]
        %v1279 = vld [vmem:[%s1269 + $0x34] sm:$0xf]
        %v1280 = vld [vmem:[%s1269 + $0x3c] sm:$0xf]
        %v1281 = vld [vmem:[%s1269 + $0x40] sm:$0xf]
        %v1282 = vld [vmem:[%s1269 + $0x48] sm:$0xf]
        %v1283 = vld [vmem:[%s1269 + $0x4c] sm:$0xf]
        %v1284 = vld [vmem:[%s1269 + $0x54] sm:$0xf]
        %v1285 = vld [vmem:[%s1269 + $0x58] sm:$0xf]
        %v1286 = vld [vmem:[%s1269 + $0x60] sm:$0xf]
        %v1287 = vld [vmem:[%s1269 + $0x64] sm:$0xf]
        %v1288 = vld [vmem:[%s1269 + $0x6c] sm:$0xf]
        %v1289 = vld [vmem:[%s1269 + $0x70] sm:$0xf]
        %v1290 = vld [vmem:[%s1269 + $0x78] sm:$0xf]
        %v1291 = vld [vmem:[%s1269 + $0x7c] sm:$0xf]
        %v1292 = vld [vmem:[%s1269 + $0x84] sm:$0xf]
        %v1293 = vld [vmem:[%s1269 + $0x88] sm:$0xf]
        %v1294 = vld [vmem:[%s1269 + $0x90] sm:$0xf]
        %v1295 = vld [vmem:[%s1269 + $0x94] sm:$0xf]
        %v1296 = vld [vmem:[%s1269 + $0x9c] sm:$0xf]
        %v1297 = vld [vmem:[%s1269 + $0xa0] sm:$0xf]
        %v1298 = vld [vmem:[%s1269 + $0xa8] sm:$0xf]
        %v1299 = vld [vmem:[%s1269 + $0xac] sm:$0xf]
        %v1300 = vld [vmem:[%s1269 + $0xb4] sm:$0xf]
        %v1301 = vld [vmem:[%s1269 + $0xb8] sm:$0xf]
        %v1334 = vunpack.c.l.b16 %v1270
        %v1335 = vunpack.c.l.b16 %v1271
        %v1336 = vunpack.c.l.b16 %v1272
        %v1337 = vunpack.c.l.b16 %v1273
        %v1338 = vunpack.c.l.b16 %v1274
        %v1339 = vunpack.c.l.b16 %v1275
        %v1340 = vunpack.c.l.b16 %v1276
        %v1341 = vunpack.c.l.b16 %v1277
        %v1342 = vunpack.c.l.b16 %v1278
        %v1343 = vunpack.c.l.b16 %v1279
        %v1344 = vunpack.c.l.b16 %v1280
        %v1345 = vunpack.c.l.b16 %v1281
        %v1346 = vunpack.c.l.b16 %v1282
        %v1347 = vunpack.c.l.b16 %v1283
        %v1348 = vunpack.c.l.b16 %v1284
        %v1349 = vunpack.c.l.b16 %v1285
        %v1350 = vunpack.c.l.b16 %v1286
        %v1351 = vunpack.c.l.b16 %v1287
        %v1352 = vunpack.c.l.b16 %v1288
        %v1353 = vunpack.c.l.b16 %v1289
        %v1354 = vunpack.c.l.b16 %v1290
        %v1355 = vunpack.c.l.b16 %v1291
        %v1356 = vunpack.c.l.b16 %v1292
        %v1357 = vunpack.c.l.b16 %v1293
        %v1358 = vunpack.c.l.b16 %v1294
        %v1359 = vunpack.c.l.b16 %v1295
        %v1360 = vunpack.c.l.b16 %v1296
        %v1361 = vunpack.c.l.b16 %v1297
        %v1362 = vunpack.c.l.b16 %v1298
        %v1363 = vunpack.c.l.b16 %v1299
        %v1364 = vunpack.c.l.b16 %v1300
        %v1365 = vunpack.c.l.b16 %v1301
        %v1366 = vpack.c.b16 %v1335, %v1334
        %v1367 = vpack.c.b16 %v1337, %v1336
        %v1368 = vpack.c.b16 %v1339, %v1338
        %v1369 = vpack.c.b16 %v1341, %v1340
        %v1370 = vpack.c.b16 %v1343, %v1342
        %v1371 = vpack.c.b16 %v1345, %v1344
        %v1372 = vpack.c.b16 %v1347, %v1346
        %v1373 = vpack.c.b16 %v1349, %v1348
        %v1374 = vpack.c.b16 %v1351, %v1350
        %v1375 = vpack.c.b16 %v1353, %v1352
        %v1376 = vpack.c.b16 %v1355, %v1354
        %v1377 = vpack.c.b16 %v1357, %v1356
        %v1378 = vpack.c.b16 %v1359, %v1358
        %v1379 = vpack.c.b16 %v1361, %v1360
        %v1380 = vpack.c.b16 %v1363, %v1362
        %v1381 = vpack.c.b16 %v1365, %v1364
        %1382 = vrot.lane.b32.xlu0 %v1366, 48
        %v1383 = vpop.permute.xlu0 %1382
        %1384 = vrot.lane.b32.xlu0 %v1367, 48
        %v1385 = vpop.permute.xlu0 %1384
        %1386 = vrot.lane.b32.xlu0 %v1368, 48
        %v1387 = vpop.permute.xlu0 %1386
        %1388 = vrot.lane.b32.xlu0 %v1369, 48
        %v1389 = vpop.permute.xlu0 %1388
        %1390 = vrot.lane.b32.xlu0 %v1370, 48
        %v1391 = vpop.permute.xlu0 %1390
        %1392 = vrot.lane.b32.xlu0 %v1371, 48
        %v1393 = vpop.permute.xlu0 %1392
        %1394 = vrot.lane.b32.xlu0 %v1372, 48
        %v1395 = vpop.permute.xlu0 %1394
        %1396 = vrot.lane.b32.xlu0 %v1373, 48
        %v1397 = vpop.permute.xlu0 %1396
        %1398 = vrot.lane.b32.xlu0 %v1374, 48
        %v1399 = vpop.permute.xlu0 %1398
        %1400 = vrot.lane.b32.xlu0 %v1375, 48
        %v1401 = vpop.permute.xlu0 %1400
        %1402 = vrot.lane.b32.xlu0 %v1376, 48
        %v1403 = vpop.permute.xlu0 %1402
        %1404 = vrot.lane.b32.xlu0 %v1377, 48
        %v1405 = vpop.permute.xlu0 %1404
        %1406 = vrot.lane.b32.xlu0 %v1378, 48
        %v1407 = vpop.permute.xlu0 %1406
        %1408 = vrot.lane.b32.xlu0 %v1379, 48
        %v1409 = vpop.permute.xlu0 %1408
        %1410 = vrot.lane.b32.xlu0 %v1380, 48
        %v1411 = vpop.permute.xlu0 %1410
        %1412 = vrot.lane.b32.xlu0 %v1381, 48
        %v1413 = vpop.permute.xlu0 %1412
        %vm1430 = vcmask 523648
        %1431 = vst.msk [vmem:[#allocation2] sm:$0xff] %vm1430, %v1383
        %1432 = vst.msk [vmem:[#allocation2 + $0x10] sm:$0xff] %vm1430, %v1385
        %1433 = vst.msk [vmem:[#allocation2 + $0x20] sm:$0xff] %vm1430, %v1387
        %1434 = vst.msk [vmem:[#allocation2 + $0x30] sm:$0xff] %vm1430, %v1389
        %1435 = vst.msk [vmem:[#allocation2 + $0x40] sm:$0xff] %vm1430, %v1391
        %1436 = vst.msk [vmem:[#allocation2 + $0x50] sm:$0xff] %vm1430, %v1393
        %1437 = vst.msk [vmem:[#allocation2 + $0x60] sm:$0xff] %vm1430, %v1395
        %1438 = vst.msk [vmem:[#allocation2 + $0x70] sm:$0xff] %vm1430, %v1397
        %1439 = vst.msk [vmem:[#allocation2 + $0x80] sm:$0xff] %vm1430, %v1399
        %1440 = vst.msk [vmem:[#allocation2 + $0x90] sm:$0xff] %vm1430, %v1401
        %1441 = vst.msk [vmem:[#allocation2 + $0xa0] sm:$0xff] %vm1430, %v1403
        %1442 = vst.msk [vmem:[#allocation2 + $0xb0] sm:$0xff] %vm1430, %v1405
        %1443 = vst.msk [vmem:[#allocation2 + $0xc0] sm:$0xff] %vm1430, %v1407
        %1444 = vst.msk [vmem:[#allocation2 + $0xd0] sm:$0xff] %vm1430, %v1409
        %1445 = vst.msk [vmem:[#allocation2 + $0xe0] sm:$0xff] %vm1430, %v1411
        %1446 = vst.msk [vmem:[#allocation2 + $0xf0] sm:$0xff] %vm1430, %v1413
        %v1447 = vld [vmem:[%s1269] sm:$0xf]
        %v1448 = vld [vmem:[%s1269 + $0x4] sm:$0xf]
        %v1449 = vld [vmem:[%s1269 + $0x8] sm:$0x1]
        %v1450 = vld [vmem:[%s1269 + $0xc] sm:$0xf]
        %v1451 = vld [vmem:[%s1269 + $0x10] sm:$0xf]
        %v1452 = vld [vmem:[%s1269 + $0x14] sm:$0x1]
        %v1453 = vld [vmem:[%s1269 + $0x18] sm:$0xf]
        %v1454 = vld [vmem:[%s1269 + $0x1c] sm:$0xf]
        %v1455 = vld [vmem:[%s1269 + $0x20] sm:$0x1]
        %v1456 = vld [vmem:[%s1269 + $0x24] sm:$0xf]
        %v1457 = vld [vmem:[%s1269 + $0x28] sm:$0xf]
        %v1458 = vld [vmem:[%s1269 + $0x2c] sm:$0x1]
        %v1459 = vld [vmem:[%s1269 + $0x30] sm:$0xf]
        %v1460 = vld [vmem:[%s1269 + $0x34] sm:$0xf]
        %v1461 = vld [vmem:[%s1269 + $0x38] sm:$0x1]
        %v1462 = vld [vmem:[%s1269 + $0x3c] sm:$0xf]
        %v1463 = vld [vmem:[%s1269 + $0x40] sm:$0xf]
        %v1464 = vld [vmem:[%s1269 + $0x44] sm:$0x1]
        %v1465 = vld [vmem:[%s1269 + $0x48] sm:$0xf]
        %v1466 = vld [vmem:[%s1269 + $0x4c] sm:$0xf]
        %v1467 = vld [vmem:[%s1269 + $0x50] sm:$0x1]
        %v1468 = vld [vmem:[%s1269 + $0x54] sm:$0xf]
        %v1469 = vld [vmem:[%s1269 + $0x58] sm:$0xf]
        %v1470 = vld [vmem:[%s1269 + $0x5c] sm:$0x1]
        %v1471 = vld [vmem:[%s1269 + $0x60] sm:$0xf]
        %v1472 = vld [vmem:[%s1269 + $0x64] sm:$0xf]
        %v1473 = vld [vmem:[%s1269 + $0x68] sm:$0x1]
        %v1474 = vld [vmem:[%s1269 + $0x6c] sm:$0xf]
        %v1475 = vld [vmem:[%s1269 + $0x70] sm:$0xf]
        %v1476 = vld [vmem:[%s1269 + $0x74] sm:$0x1]
        %v1477 = vld [vmem:[%s1269 + $0x78] sm:$0xf]
        %v1478 = vld [vmem:[%s1269 + $0x7c] sm:$0xf]
        %v1479 = vld [vmem:[%s1269 + $0x80] sm:$0x1]
        %v1480 = vld [vmem:[%s1269 + $0x84] sm:$0xf]
        %v1481 = vld [vmem:[%s1269 + $0x88] sm:$0xf]
        %v1482 = vld [vmem:[%s1269 + $0x8c] sm:$0x1]
        %v1483 = vld [vmem:[%s1269 + $0x90] sm:$0xf]
        %v1484 = vld [vmem:[%s1269 + $0x94] sm:$0xf]
        %v1485 = vld [vmem:[%s1269 + $0x98] sm:$0x1]
        %v1486 = vld [vmem:[%s1269 + $0x9c] sm:$0xf]
        %v1487 = vld [vmem:[%s1269 + $0xa0] sm:$0xf]
        %v1488 = vld [vmem:[%s1269 + $0xa4] sm:$0x1]
        %v1489 = vld [vmem:[%s1269 + $0xa8] sm:$0xf]
        %v1490 = vld [vmem:[%s1269 + $0xac] sm:$0xf]
        %v1491 = vld [vmem:[%s1269 + $0xb0] sm:$0x1]
        %v1492 = vld [vmem:[%s1269 + $0xb4] sm:$0xf]
        %v1493 = vld [vmem:[%s1269 + $0xb8] sm:$0xf]
        %v1494 = vld [vmem:[%s1269 + $0xbc] sm:$0x1]
        %v1496 = vshrl.u32 %v1447, 16
        %v1498 = vrot.slane %v1496, 4
        %v1499 = vshll.u32 %v1447, 16
        %v1501 = vrot.slane %v1499, 5
        %v1502 = vor.u32 %v1498, %v1501
        %v1503 = vrot.slane %v1502, 4
        %v1505 = vshll.u32 %v1448, 16
        %v1507 = vrot.slane %v1505, 5
        %v1508 = vsel %vm444, %v1503, %v1507
        %v1509 = vshrl.u32 %v1448, 16
        %v1511 = vrot.slane %v1509, 4
        %v1512 = vor.u32 %v1511, %v1507
        %v1513 = vrot.slane %v1512, 4
        %v1515 = vshll.u32 %v1449, 16
        %v1517 = vrot.slane %v1515, 5
        %v1518 = vsel %vm444, %v1513, %v1517
        %v1520 = vshrl.u32 %v1450, 16
        %v1522 = vrot.slane %v1520, 4
        %v1523 = vshll.u32 %v1450, 16
        %v1525 = vrot.slane %v1523, 5
        %v1526 = vor.u32 %v1522, %v1525
        %v1527 = vrot.slane %v1526, 4
        %v1529 = vshll.u32 %v1451, 16
        %v1531 = vrot.slane %v1529, 5
        %v1532 = vsel %vm444, %v1527, %v1531
        %v1533 = vshrl.u32 %v1451, 16
        %v1535 = vrot.slane %v1533, 4
        %v1536 = vor.u32 %v1535, %v1531
        %v1537 = vrot.slane %v1536, 4
        %v1539 = vshll.u32 %v1452, 16
        %v1541 = vrot.slane %v1539, 5
        %v1542 = vsel %vm444, %v1537, %v1541
        %v1544 = vshrl.u32 %v1453, 16
        %v1546 = vrot.slane %v1544, 4
        %v1547 = vshll.u32 %v1453, 16
        %v1549 = vrot.slane %v1547, 5
        %v1550 = vor.u32 %v1546, %v1549
        %v1551 = vrot.slane %v1550, 4
        %v1553 = vshll.u32 %v1454, 16
        %v1555 = vrot.slane %v1553, 5
        %v1556 = vsel %vm444, %v1551, %v1555
        %v1557 = vshrl.u32 %v1454, 16
        %v1559 = vrot.slane %v1557, 4
        %v1560 = vor.u32 %v1559, %v1555
        %v1561 = vrot.slane %v1560, 4
        %v1563 = vshll.u32 %v1455, 16
        %v1565 = vrot.slane %v1563, 5
        %v1566 = vsel %vm444, %v1561, %v1565
        %v1568 = vshrl.u32 %v1456, 16
        %v1570 = vrot.slane %v1568, 4
        %v1571 = vshll.u32 %v1456, 16
        %v1573 = vrot.slane %v1571, 5
        %v1574 = vor.u32 %v1570, %v1573
        %v1575 = vrot.slane %v1574, 4
        %v1577 = vshll.u32 %v1457, 16
        %v1579 = vrot.slane %v1577, 5
        %v1580 = vsel %vm444, %v1575, %v1579
        %v1581 = vshrl.u32 %v1457, 16
        %v1583 = vrot.slane %v1581, 4
        %v1584 = vor.u32 %v1583, %v1579
        %v1585 = vrot.slane %v1584, 4
        %v1587 = vshll.u32 %v1458, 16
        %v1589 = vrot.slane %v1587, 5
        %v1590 = vsel %vm444, %v1585, %v1589
        %v1592 = vshrl.u32 %v1459, 16
        %v1594 = vrot.slane %v1592, 4
        %v1595 = vshll.u32 %v1459, 16
        %v1597 = vrot.slane %v1595, 5
        %v1598 = vor.u32 %v1594, %v1597
        %v1599 = vrot.slane %v1598, 4
        %v1601 = vshll.u32 %v1460, 16
        %v1603 = vrot.slane %v1601, 5
        %v1604 = vsel %vm444, %v1599, %v1603
        %v1605 = vshrl.u32 %v1460, 16
        %v1607 = vrot.slane %v1605, 4
        %v1608 = vor.u32 %v1607, %v1603
        %v1609 = vrot.slane %v1608, 4
        %v1611 = vshll.u32 %v1461, 16
        %v1613 = vrot.slane %v1611, 5
        %v1614 = vsel %vm444, %v1609, %v1613
        %v1616 = vshrl.u32 %v1462, 16
        %v1618 = vrot.slane %v1616, 4
        %v1619 = vshll.u32 %v1462, 16
        %v1621 = vrot.slane %v1619, 5
        %v1622 = vor.u32 %v1618, %v1621
        %v1623 = vrot.slane %v1622, 4
        %v1625 = vshll.u32 %v1463, 16
        %v1627 = vrot.slane %v1625, 5
        %v1628 = vsel %vm444, %v1623, %v1627
        %v1629 = vshrl.u32 %v1463, 16
        %v1631 = vrot.slane %v1629, 4
        %v1632 = vor.u32 %v1631, %v1627
        %v1633 = vrot.slane %v1632, 4
        %v1635 = vshll.u32 %v1464, 16
        %v1637 = vrot.slane %v1635, 5
        %v1638 = vsel %vm444, %v1633, %v1637
        %v1640 = vshrl.u32 %v1465, 16
        %v1642 = vrot.slane %v1640, 4
        %v1643 = vshll.u32 %v1465, 16
        %v1645 = vrot.slane %v1643, 5
        %v1646 = vor.u32 %v1642, %v1645
        %v1647 = vrot.slane %v1646, 4
        %v1649 = vshll.u32 %v1466, 16
        %v1651 = vrot.slane %v1649, 5
        %v1652 = vsel %vm444, %v1647, %v1651
        %v1653 = vshrl.u32 %v1466, 16
        %v1655 = vrot.slane %v1653, 4
        %v1656 = vor.u32 %v1655, %v1651
        %v1657 = vrot.slane %v1656, 4
        %v1659 = vshll.u32 %v1467, 16
        %v1661 = vrot.slane %v1659, 5
        %v1662 = vsel %vm444, %v1657, %v1661
        %v1664 = vshrl.u32 %v1468, 16
        %v1666 = vrot.slane %v1664, 4
        %v1667 = vshll.u32 %v1468, 16
        %v1669 = vrot.slane %v1667, 5
        %v1670 = vor.u32 %v1666, %v1669
        %v1671 = vrot.slane %v1670, 4
        %v1673 = vshll.u32 %v1469, 16
        %v1675 = vrot.slane %v1673, 5
        %v1676 = vsel %vm444, %v1671, %v1675
        %v1677 = vshrl.u32 %v1469, 16
        %v1679 = vrot.slane %v1677, 4
        %v1680 = vor.u32 %v1679, %v1675
        %v1681 = vrot.slane %v1680, 4
        %v1683 = vshll.u32 %v1470, 16
        %v1685 = vrot.slane %v1683, 5
        %v1686 = vsel %vm444, %v1681, %v1685
        %v1688 = vshrl.u32 %v1471, 16
        %v1690 = vrot.slane %v1688, 4
        %v1691 = vshll.u32 %v1471, 16
        %v1693 = vrot.slane %v1691, 5
        %v1694 = vor.u32 %v1690, %v1693
        %v1695 = vrot.slane %v1694, 4
        %v1697 = vshll.u32 %v1472, 16
        %v1699 = vrot.slane %v1697, 5
        %v1700 = vsel %vm444, %v1695, %v1699
        %v1701 = vshrl.u32 %v1472, 16
        %v1703 = vrot.slane %v1701, 4
        %v1704 = vor.u32 %v1703, %v1699
        %v1705 = vrot.slane %v1704, 4
        %v1707 = vshll.u32 %v1473, 16
        %v1709 = vrot.slane %v1707, 5
        %v1710 = vsel %vm444, %v1705, %v1709
        %v1712 = vshrl.u32 %v1474, 16
        %v1714 = vrot.slane %v1712, 4
        %v1715 = vshll.u32 %v1474, 16
        %v1717 = vrot.slane %v1715, 5
        %v1718 = vor.u32 %v1714, %v1717
        %v1719 = vrot.slane %v1718, 4
        %v1721 = vshll.u32 %v1475, 16
        %v1723 = vrot.slane %v1721, 5
        %v1724 = vsel %vm444, %v1719, %v1723
        %v1725 = vshrl.u32 %v1475, 16
        %v1727 = vrot.slane %v1725, 4
        %v1728 = vor.u32 %v1727, %v1723
        %v1729 = vrot.slane %v1728, 4
        %v1731 = vshll.u32 %v1476, 16
        %v1733 = vrot.slane %v1731, 5
        %v1734 = vsel %vm444, %v1729, %v1733
        %v1736 = vshrl.u32 %v1477, 16
        %v1738 = vrot.slane %v1736, 4
        %v1739 = vshll.u32 %v1477, 16
        %v1741 = vrot.slane %v1739, 5
        %v1742 = vor.u32 %v1738, %v1741
        %v1743 = vrot.slane %v1742, 4
        %v1745 = vshll.u32 %v1478, 16
        %v1747 = vrot.slane %v1745, 5
        %v1748 = vsel %vm444, %v1743, %v1747
        %v1749 = vshrl.u32 %v1478, 16
        %v1751 = vrot.slane %v1749, 4
        %v1752 = vor.u32 %v1751, %v1747
        %v1753 = vrot.slane %v1752, 4
        %v1755 = vshll.u32 %v1479, 16
        %v1757 = vrot.slane %v1755, 5
        %v1758 = vsel %vm444, %v1753, %v1757
        %v1760 = vshrl.u32 %v1480, 16
        %v1762 = vrot.slane %v1760, 4
        %v1763 = vshll.u32 %v1480, 16
        %v1765 = vrot.slane %v1763, 5
        %v1766 = vor.u32 %v1762, %v1765
        %v1767 = vrot.slane %v1766, 4
        %v1769 = vshll.u32 %v1481, 16
        %v1771 = vrot.slane %v1769, 5
        %v1772 = vsel %vm444, %v1767, %v1771
        %v1773 = vshrl.u32 %v1481, 16
        %v1775 = vrot.slane %v1773, 4
        %v1776 = vor.u32 %v1775, %v1771
        %v1777 = vrot.slane %v1776, 4
        %v1779 = vshll.u32 %v1482, 16
        %v1781 = vrot.slane %v1779, 5
        %v1782 = vsel %vm444, %v1777, %v1781
        %v1784 = vshrl.u32 %v1483, 16
        %v1786 = vrot.slane %v1784, 4
        %v1787 = vshll.u32 %v1483, 16
        %v1789 = vrot.slane %v1787, 5
        %v1790 = vor.u32 %v1786, %v1789
        %v1791 = vrot.slane %v1790, 4
        %v1793 = vshll.u32 %v1484, 16
        %v1795 = vrot.slane %v1793, 5
        %v1796 = vsel %vm444, %v1791, %v1795
        %v1797 = vshrl.u32 %v1484, 16
        %v1799 = vrot.slane %v1797, 4
        %v1800 = vor.u32 %v1799, %v1795
        %v1801 = vrot.slane %v1800, 4
        %v1803 = vshll.u32 %v1485, 16
        %v1805 = vrot.slane %v1803, 5
        %v1806 = vsel %vm444, %v1801, %v1805
        %v1808 = vshrl.u32 %v1486, 16
        %v1810 = vrot.slane %v1808, 4
        %v1811 = vshll.u32 %v1486, 16
        %v1813 = vrot.slane %v1811, 5
        %v1814 = vor.u32 %v1810, %v1813
        %v1815 = vrot.slane %v1814, 4
        %v1817 = vshll.u32 %v1487, 16
        %v1819 = vrot.slane %v1817, 5
        %v1820 = vsel %vm444, %v1815, %v1819
        %v1821 = vshrl.u32 %v1487, 16
        %v1823 = vrot.slane %v1821, 4
        %v1824 = vor.u32 %v1823, %v1819
        %v1825 = vrot.slane %v1824, 4
        %v1827 = vshll.u32 %v1488, 16
        %v1829 = vrot.slane %v1827, 5
        %v1830 = vsel %vm444, %v1825, %v1829
        %v1832 = vshrl.u32 %v1489, 16
        %v1834 = vrot.slane %v1832, 4
        %v1835 = vshll.u32 %v1489, 16
        %v1837 = vrot.slane %v1835, 5
        %v1838 = vor.u32 %v1834, %v1837
        %v1839 = vrot.slane %v1838, 4
        %v1841 = vshll.u32 %v1490, 16
        %v1843 = vrot.slane %v1841, 5
        %v1844 = vsel %vm444, %v1839, %v1843
        %v1845 = vshrl.u32 %v1490, 16
        %v1847 = vrot.slane %v1845, 4
        %v1848 = vor.u32 %v1847, %v1843
        %v1849 = vrot.slane %v1848, 4
        %v1851 = vshll.u32 %v1491, 16
        %v1853 = vrot.slane %v1851, 5
        %v1854 = vsel %vm444, %v1849, %v1853
        %v1856 = vshrl.u32 %v1492, 16
        %v1858 = vrot.slane %v1856, 4
        %v1859 = vshll.u32 %v1492, 16
        %v1861 = vrot.slane %v1859, 5
        %v1862 = vor.u32 %v1858, %v1861
        %v1863 = vrot.slane %v1862, 4
        %v1865 = vshll.u32 %v1493, 16
        %v1867 = vrot.slane %v1865, 5
        %v1868 = vsel %vm444, %v1863, %v1867
        %v1869 = vshrl.u32 %v1493, 16
        %v1871 = vrot.slane %v1869, 4
        %v1872 = vor.u32 %v1871, %v1867
        %v1873 = vrot.slane %v1872, 4
        %v1875 = vshll.u32 %v1494, 16
        %v1877 = vrot.slane %v1875, 5
        %v1878 = vsel %vm444, %v1873, %v1877
        %v1879 = vunpack.c.l.b16 %v1508
        %v1880 = vunpack.c.l.b16 %v1518
        %v1881 = vunpack.c.l.b16 %v1532
        %v1882 = vunpack.c.l.b16 %v1542
        %v1883 = vunpack.c.l.b16 %v1556
        %v1884 = vunpack.c.l.b16 %v1566
        %v1885 = vunpack.c.l.b16 %v1580
        %v1886 = vunpack.c.l.b16 %v1590
        %v1887 = vunpack.c.l.b16 %v1604
        %v1888 = vunpack.c.l.b16 %v1614
        %v1889 = vunpack.c.l.b16 %v1628
        %v1890 = vunpack.c.l.b16 %v1638
        %v1891 = vunpack.c.l.b16 %v1652
        %v1892 = vunpack.c.l.b16 %v1662
        %v1893 = vunpack.c.l.b16 %v1676
        %v1894 = vunpack.c.l.b16 %v1686
        %v1895 = vunpack.c.l.b16 %v1700
        %v1896 = vunpack.c.l.b16 %v1710
        %v1897 = vunpack.c.l.b16 %v1724
        %v1898 = vunpack.c.l.b16 %v1734
        %v1899 = vunpack.c.l.b16 %v1748
        %v1900 = vunpack.c.l.b16 %v1758
        %v1901 = vunpack.c.l.b16 %v1772
        %v1902 = vunpack.c.l.b16 %v1782
        %v1903 = vunpack.c.l.b16 %v1796
        %v1904 = vunpack.c.l.b16 %v1806
        %v1905 = vunpack.c.l.b16 %v1820
        %v1906 = vunpack.c.l.b16 %v1830
        %v1907 = vunpack.c.l.b16 %v1844
        %v1908 = vunpack.c.l.b16 %v1854
        %v1909 = vunpack.c.l.b16 %v1868
        %v1910 = vunpack.c.l.b16 %v1878
        %v1911 = vpack.c.b16 %v1880, %v1879
        %v1912 = vpack.c.b16 %v1882, %v1881
        %v1913 = vpack.c.b16 %v1884, %v1883
        %v1914 = vpack.c.b16 %v1886, %v1885
        %v1915 = vpack.c.b16 %v1888, %v1887
        %v1916 = vpack.c.b16 %v1890, %v1889
        %v1917 = vpack.c.b16 %v1892, %v1891
        %v1918 = vpack.c.b16 %v1894, %v1893
        %v1919 = vpack.c.b16 %v1896, %v1895
        %v1920 = vpack.c.b16 %v1898, %v1897
        %v1921 = vpack.c.b16 %v1900, %v1899
        %v1922 = vpack.c.b16 %v1902, %v1901
        %v1923 = vpack.c.b16 %v1904, %v1903
        %v1924 = vpack.c.b16 %v1906, %v1905
        %v1925 = vpack.c.b16 %v1908, %v1907
        %v1926 = vpack.c.b16 %v1910, %v1909
        %1927 = vrot.lane.b32.xlu0 %v1911, 64
        %v1928 = vpop.permute.xlu0 %1927
        %1929 = vrot.lane.b32.xlu0 %v1912, 64
        %v1930 = vpop.permute.xlu0 %1929
        %1931 = vrot.lane.b32.xlu0 %v1913, 64
        %v1932 = vpop.permute.xlu0 %1931
        %1933 = vrot.lane.b32.xlu0 %v1914, 64
        %v1934 = vpop.permute.xlu0 %1933
        %1935 = vrot.lane.b32.xlu0 %v1915, 64
        %v1936 = vpop.permute.xlu0 %1935
        %1937 = vrot.lane.b32.xlu0 %v1916, 64
        %v1938 = vpop.permute.xlu0 %1937
        %1939 = vrot.lane.b32.xlu0 %v1917, 64
        %v1940 = vpop.permute.xlu0 %1939
        %1941 = vrot.lane.b32.xlu0 %v1918, 64
        %v1942 = vpop.permute.xlu0 %1941
        %1943 = vrot.lane.b32.xlu0 %v1919, 64
        %v1944 = vpop.permute.xlu0 %1943
        %1945 = vrot.lane.b32.xlu0 %v1920, 64
        %v1946 = vpop.permute.xlu0 %1945
        %1947 = vrot.lane.b32.xlu0 %v1921, 64
        %v1948 = vpop.permute.xlu0 %1947
        %1949 = vrot.lane.b32.xlu0 %v1922, 64
        %v1950 = vpop.permute.xlu0 %1949
        %1951 = vrot.lane.b32.xlu0 %v1923, 64
        %v1952 = vpop.permute.xlu0 %1951
        %1953 = vrot.lane.b32.xlu0 %v1924, 64
        %v1954 = vpop.permute.xlu0 %1953
        %1955 = vrot.lane.b32.xlu0 %v1925, 64
        %v1956 = vpop.permute.xlu0 %1955
        %1957 = vrot.lane.b32.xlu0 %v1926, 64
        %v1958 = vpop.permute.xlu0 %1957
        %vm1975 = vcmask 654848
        %1976 = vst.msk [vmem:[#allocation2] sm:$0xff] %vm1975, %v1928
        %1977 = vst.msk [vmem:[#allocation2 + $0x10] sm:$0xff] %vm1975, %v1930
        %1978 = vst.msk [vmem:[#allocation2 + $0x20] sm:$0xff] %vm1975, %v1932
        %1979 = vst.msk [vmem:[#allocation2 + $0x30] sm:$0xff] %vm1975, %v1934
        %1980 = vst.msk [vmem:[#allocation2 + $0x40] sm:$0xff] %vm1975, %v1936
        %1981 = vst.msk [vmem:[#allocation2 + $0x50] sm:$0xff] %vm1975, %v1938
        %1982 = vst.msk [vmem:[#allocation2 + $0x60] sm:$0xff] %vm1975, %v1940
        %1983 = vst.msk [vmem:[#allocation2 + $0x70] sm:$0xff] %vm1975, %v1942
        %1984 = vst.msk [vmem:[#allocation2 + $0x80] sm:$0xff] %vm1975, %v1944
        %1985 = vst.msk [vmem:[#allocation2 + $0x90] sm:$0xff] %vm1975, %v1946
        %1986 = vst.msk [vmem:[#allocation2 + $0xa0] sm:$0xff] %vm1975, %v1948
        %1987 = vst.msk [vmem:[#allocation2 + $0xb0] sm:$0xff] %vm1975, %v1950
        %1988 = vst.msk [vmem:[#allocation2 + $0xc0] sm:$0xff] %vm1975, %v1952
        %1989 = vst.msk [vmem:[#allocation2 + $0xd0] sm:$0xff] %vm1975, %v1954
        %1990 = vst.msk [vmem:[#allocation2 + $0xe0] sm:$0xff] %vm1975, %v1956
        %1991 = vst.msk [vmem:[#allocation2 + $0xf0] sm:$0xff] %vm1975, %v1958
        %v1992 = vld [vmem:[%s1269] sm:$0xe]
        %v1993 = vld [vmem:[%s1269 + $0x4] sm:$0xf]
        %v1994 = vld [vmem:[%s1269 + $0x8] sm:$0x1]
        %v1995 = vld [vmem:[%s1269 + $0xc] sm:$0xe]
        %v1996 = vld [vmem:[%s1269 + $0x10] sm:$0xf]
        %v1997 = vld [vmem:[%s1269 + $0x14] sm:$0x1]
        %v1998 = vld [vmem:[%s1269 + $0x18] sm:$0xe]
        %v1999 = vld [vmem:[%s1269 + $0x1c] sm:$0xf]
        %v2000 = vld [vmem:[%s1269 + $0x20] sm:$0x1]
        %v2001 = vld [vmem:[%s1269 + $0x24] sm:$0xe]
        %v2002 = vld [vmem:[%s1269 + $0x28] sm:$0xf]
        %v2003 = vld [vmem:[%s1269 + $0x2c] sm:$0x1]
        %v2004 = vld [vmem:[%s1269 + $0x30] sm:$0xe]
        %v2005 = vld [vmem:[%s1269 + $0x34] sm:$0xf]
        %v2006 = vld [vmem:[%s1269 + $0x38] sm:$0x1]
        %v2007 = vld [vmem:[%s1269 + $0x3c] sm:$0xe]
        %v2008 = vld [vmem:[%s1269 + $0x40] sm:$0xf]
        %v2009 = vld [vmem:[%s1269 + $0x44] sm:$0x1]
        %v2010 = vld [vmem:[%s1269 + $0x48] sm:$0xe]
        %v2011 = vld [vmem:[%s1269 + $0x4c] sm:$0xf]
        %v2012 = vld [vmem:[%s1269 + $0x50] sm:$0x1]
        %v2013 = vld [vmem:[%s1269 + $0x54] sm:$0xe]
        %v2014 = vld [vmem:[%s1269 + $0x58] sm:$0xf]
        %v2015 = vld [vmem:[%s1269 + $0x5c] sm:$0x1]
        %v2016 = vld [vmem:[%s1269 + $0x60] sm:$0xe]
        %v2017 = vld [vmem:[%s1269 + $0x64] sm:$0xf]
        %v2018 = vld [vmem:[%s1269 + $0x68] sm:$0x1]
        %v2019 = vld [vmem:[%s1269 + $0x6c] sm:$0xe]
        %v2020 = vld [vmem:[%s1269 + $0x70] sm:$0xf]
        %v2021 = vld [vmem:[%s1269 + $0x74] sm:$0x1]
        %v2022 = vld [vmem:[%s1269 + $0x78] sm:$0xe]
        %v2023 = vld [vmem:[%s1269 + $0x7c] sm:$0xf]
        %v2024 = vld [vmem:[%s1269 + $0x80] sm:$0x1]
        %v2025 = vld [vmem:[%s1269 + $0x84] sm:$0xe]
        %v2026 = vld [vmem:[%s1269 + $0x88] sm:$0xf]
        %v2027 = vld [vmem:[%s1269 + $0x8c] sm:$0x1]
        %v2028 = vld [vmem:[%s1269 + $0x90] sm:$0xe]
        %v2029 = vld [vmem:[%s1269 + $0x94] sm:$0xf]
        %v2030 = vld [vmem:[%s1269 + $0x98] sm:$0x1]
        %v2031 = vld [vmem:[%s1269 + $0x9c] sm:$0xe]
        %v2032 = vld [vmem:[%s1269 + $0xa0] sm:$0xf]
        %v2033 = vld [vmem:[%s1269 + $0xa4] sm:$0x1]
        %v2034 = vld [vmem:[%s1269 + $0xa8] sm:$0xe]
        %v2035 = vld [vmem:[%s1269 + $0xac] sm:$0xf]
        %v2036 = vld [vmem:[%s1269 + $0xb0] sm:$0x1]
        %v2037 = vld [vmem:[%s1269 + $0xb4] sm:$0xe]
        %v2038 = vld [vmem:[%s1269 + $0xb8] sm:$0xf]
        %v2039 = vld [vmem:[%s1269 + $0xbc] sm:$0x1]
        %v2088 = vrot.slane %v1992, 5
        %v2089 = vrot.slane %v2088, 4
        %v2090 = vrot.slane %v1993, 5
        %v2091 = vsel %vm1040, %v2089, %v2090
        %v2092 = vrot.slane %v2090, 4
        %v2093 = vrot.slane %v1994, 5
        %v2094 = vsel %vm1040, %v2092, %v2093
        %v2095 = vrot.slane %v1995, 5
        %v2096 = vrot.slane %v2095, 4
        %v2097 = vrot.slane %v1996, 5
        %v2098 = vsel %vm1040, %v2096, %v2097
        %v2099 = vrot.slane %v2097, 4
        %v2100 = vrot.slane %v1997, 5
        %v2101 = vsel %vm1040, %v2099, %v2100
        %v2102 = vrot.slane %v1998, 5
        %v2103 = vrot.slane %v2102, 4
        %v2104 = vrot.slane %v1999, 5
        %v2105 = vsel %vm1040, %v2103, %v2104
        %v2106 = vrot.slane %v2104, 4
        %v2107 = vrot.slane %v2000, 5
        %v2108 = vsel %vm1040, %v2106, %v2107
        %v2109 = vrot.slane %v2001, 5
        %v2110 = vrot.slane %v2109, 4
        %v2111 = vrot.slane %v2002, 5
        %v2112 = vsel %vm1040, %v2110, %v2111
        %v2113 = vrot.slane %v2111, 4
        %v2114 = vrot.slane %v2003, 5
        %v2115 = vsel %vm1040, %v2113, %v2114
        %v2116 = vrot.slane %v2004, 5
        %v2117 = vrot.slane %v2116, 4
        %v2118 = vrot.slane %v2005, 5
        %v2119 = vsel %vm1040, %v2117, %v2118
        %v2120 = vrot.slane %v2118, 4
        %v2121 = vrot.slane %v2006, 5
        %v2122 = vsel %vm1040, %v2120, %v2121
        %v2123 = vrot.slane %v2007, 5
        %v2124 = vrot.slane %v2123, 4
        %v2125 = vrot.slane %v2008, 5
        %v2126 = vsel %vm1040, %v2124, %v2125
        %v2127 = vrot.slane %v2125, 4
        %v2128 = vrot.slane %v2009, 5
        %v2129 = vsel %vm1040, %v2127, %v2128
        %v2130 = vrot.slane %v2010, 5
        %v2131 = vrot.slane %v2130, 4
        %v2132 = vrot.slane %v2011, 5
        %v2133 = vsel %vm1040, %v2131, %v2132
        %v2134 = vrot.slane %v2132, 4
        %v2135 = vrot.slane %v2012, 5
        %v2136 = vsel %vm1040, %v2134, %v2135
        %v2137 = vrot.slane %v2013, 5
        %v2138 = vrot.slane %v2137, 4
        %v2139 = vrot.slane %v2014, 5
        %v2140 = vsel %vm1040, %v2138, %v2139
        %v2141 = vrot.slane %v2139, 4
        %v2142 = vrot.slane %v2015, 5
        %v2143 = vsel %vm1040, %v2141, %v2142
        %v2144 = vrot.slane %v2016, 5
        %v2145 = vrot.slane %v2144, 4
        %v2146 = vrot.slane %v2017, 5
        %v2147 = vsel %vm1040, %v2145, %v2146
        %v2148 = vrot.slane %v2146, 4
        %v2149 = vrot.slane %v2018, 5
        %v2150 = vsel %vm1040, %v2148, %v2149
        %v2151 = vrot.slane %v2019, 5
        %v2152 = vrot.slane %v2151, 4
        %v2153 = vrot.slane %v2020, 5
        %v2154 = vsel %vm1040, %v2152, %v2153
        %v2155 = vrot.slane %v2153, 4
        %v2156 = vrot.slane %v2021, 5
        %v2157 = vsel %vm1040, %v2155, %v2156
        %v2158 = vrot.slane %v2022, 5
        %v2159 = vrot.slane %v2158, 4
        %v2160 = vrot.slane %v2023, 5
        %v2161 = vsel %vm1040, %v2159, %v2160
        %v2162 = vrot.slane %v2160, 4
        %v2163 = vrot.slane %v2024, 5
        %v2164 = vsel %vm1040, %v2162, %v2163
        %v2165 = vrot.slane %v2025, 5
        %v2166 = vrot.slane %v2165, 4
        %v2167 = vrot.slane %v2026, 5
        %v2168 = vsel %vm1040, %v2166, %v2167
        %v2169 = vrot.slane %v2167, 4
        %v2170 = vrot.slane %v2027, 5
        %v2171 = vsel %vm1040, %v2169, %v2170
        %v2172 = vrot.slane %v2028, 5
        %v2173 = vrot.slane %v2172, 4
        %v2174 = vrot.slane %v2029, 5
        %v2175 = vsel %vm1040, %v2173, %v2174
        %v2176 = vrot.slane %v2174, 4
        %v2177 = vrot.slane %v2030, 5
        %v2178 = vsel %vm1040, %v2176, %v2177
        %v2179 = vrot.slane %v2031, 5
        %v2180 = vrot.slane %v2179, 4
        %v2181 = vrot.slane %v2032, 5
        %v2182 = vsel %vm1040, %v2180, %v2181
        %v2183 = vrot.slane %v2181, 4
        %v2184 = vrot.slane %v2033, 5
        %v2185 = vsel %vm1040, %v2183, %v2184
        %v2186 = vrot.slane %v2034, 5
        %v2187 = vrot.slane %v2186, 4
        %v2188 = vrot.slane %v2035, 5
        %v2189 = vsel %vm1040, %v2187, %v2188
        %v2190 = vrot.slane %v2188, 4
        %v2191 = vrot.slane %v2036, 5
        %v2192 = vsel %vm1040, %v2190, %v2191
        %v2193 = vrot.slane %v2037, 5
        %v2194 = vrot.slane %v2193, 4
        %v2195 = vrot.slane %v2038, 5
        %v2196 = vsel %vm1040, %v2194, %v2195
        %v2197 = vrot.slane %v2195, 4
        %v2198 = vrot.slane %v2039, 5
        %v2199 = vsel %vm1040, %v2197, %v2198
        %v2200 = vunpack.c.l.b16 %v2091
        %v2201 = vunpack.c.l.b16 %v2094
        %v2202 = vunpack.c.l.b16 %v2098
        %v2203 = vunpack.c.l.b16 %v2101
        %v2204 = vunpack.c.l.b16 %v2105
        %v2205 = vunpack.c.l.b16 %v2108
        %v2206 = vunpack.c.l.b16 %v2112
        %v2207 = vunpack.c.l.b16 %v2115
        %v2208 = vunpack.c.l.b16 %v2119
        %v2209 = vunpack.c.l.b16 %v2122
        %v2210 = vunpack.c.l.b16 %v2126
        %v2211 = vunpack.c.l.b16 %v2129
        %v2212 = vunpack.c.l.b16 %v2133
        %v2213 = vunpack.c.l.b16 %v2136
        %v2214 = vunpack.c.l.b16 %v2140
        %v2215 = vunpack.c.l.b16 %v2143
        %v2216 = vunpack.c.l.b16 %v2147
        %v2217 = vunpack.c.l.b16 %v2150
        %v2218 = vunpack.c.l.b16 %v2154
        %v2219 = vunpack.c.l.b16 %v2157
        %v2220 = vunpack.c.l.b16 %v2161
        %v2221 = vunpack.c.l.b16 %v2164
        %v2222 = vunpack.c.l.b16 %v2168
        %v2223 = vunpack.c.l.b16 %v2171
        %v2224 = vunpack.c.l.b16 %v2175
        %v2225 = vunpack.c.l.b16 %v2178
        %v2226 = vunpack.c.l.b16 %v2182
        %v2227 = vunpack.c.l.b16 %v2185
        %v2228 = vunpack.c.l.b16 %v2189
        %v2229 = vunpack.c.l.b16 %v2192
        %v2230 = vunpack.c.l.b16 %v2196
        %v2231 = vunpack.c.l.b16 %v2199
        %v2232 = vpack.c.b16 %v2201, %v2200
        %v2233 = vpack.c.b16 %v2203, %v2202
        %v2234 = vpack.c.b16 %v2205, %v2204
        %v2235 = vpack.c.b16 %v2207, %v2206
        %v2236 = vpack.c.b16 %v2209, %v2208
        %v2237 = vpack.c.b16 %v2211, %v2210
        %v2238 = vpack.c.b16 %v2213, %v2212
        %v2239 = vpack.c.b16 %v2215, %v2214
        %v2240 = vpack.c.b16 %v2217, %v2216
        %v2241 = vpack.c.b16 %v2219, %v2218
        %v2242 = vpack.c.b16 %v2221, %v2220
        %v2243 = vpack.c.b16 %v2223, %v2222
        %v2244 = vpack.c.b16 %v2225, %v2224
        %v2245 = vpack.c.b16 %v2227, %v2226
        %v2246 = vpack.c.b16 %v2229, %v2228
        %v2247 = vpack.c.b16 %v2231, %v2230
        %2248 = vrot.lane.b32.xlu0 %v2232, 80
        %v2249 = vpop.permute.xlu0 %2248
        %2250 = vrot.lane.b32.xlu0 %v2233, 80
        %v2251 = vpop.permute.xlu0 %2250
        %2252 = vrot.lane.b32.xlu0 %v2234, 80
        %v2253 = vpop.permute.xlu0 %2252
        %2254 = vrot.lane.b32.xlu0 %v2235, 80
        %v2255 = vpop.permute.xlu0 %2254
        %2256 = vrot.lane.b32.xlu0 %v2236, 80
        %v2257 = vpop.permute.xlu0 %2256
        %2258 = vrot.lane.b32.xlu0 %v2237, 80
        %v2259 = vpop.permute.xlu0 %2258
        %2260 = vrot.lane.b32.xlu0 %v2238, 80
        %v2261 = vpop.permute.xlu0 %2260
        %2262 = vrot.lane.b32.xlu0 %v2239, 80
        %v2263 = vpop.permute.xlu0 %2262
        %2264 = vrot.lane.b32.xlu0 %v2240, 80
        %v2265 = vpop.permute.xlu0 %2264
        %2266 = vrot.lane.b32.xlu0 %v2241, 80
        %v2267 = vpop.permute.xlu0 %2266
        %2268 = vrot.lane.b32.xlu0 %v2242, 80
        %v2269 = vpop.permute.xlu0 %2268
        %2270 = vrot.lane.b32.xlu0 %v2243, 80
        %v2271 = vpop.permute.xlu0 %2270
        %2272 = vrot.lane.b32.xlu0 %v2244, 80
        %v2273 = vpop.permute.xlu0 %2272
        %2274 = vrot.lane.b32.xlu0 %v2245, 80
        %v2275 = vpop.permute.xlu0 %2274
        %2276 = vrot.lane.b32.xlu0 %v2246, 80
        %v2277 = vpop.permute.xlu0 %2276
        %2278 = vrot.lane.b32.xlu0 %v2247, 80
        %v2279 = vpop.permute.xlu0 %2278
        %vm2296 = vcmask 786048
        %2297 = vst.msk [vmem:[#allocation2] sm:$0xff] %vm2296, %v2249
        %2298 = vst.msk [vmem:[#allocation2 + $0x10] sm:$0xff] %vm2296, %v2251
        %2299 = vst.msk [vmem:[#allocation2 + $0x20] sm:$0xff] %vm2296, %v2253
        %2300 = vst.msk [vmem:[#allocation2 + $0x30] sm:$0xff] %vm2296, %v2255
        %2301 = vst.msk [vmem:[#allocation2 + $0x40] sm:$0xff] %vm2296, %v2257
        %2302 = vst.msk [vmem:[#allocation2 + $0x50] sm:$0xff] %vm2296, %v2259
        %2303 = vst.msk [vmem:[#allocation2 + $0x60] sm:$0xff] %vm2296, %v2261
        %2304 = vst.msk [vmem:[#allocation2 + $0x70] sm:$0xff] %vm2296, %v2263
        %2305 = vst.msk [vmem:[#allocation2 + $0x80] sm:$0xff] %vm2296, %v2265
        %2306 = vst.msk [vmem:[#allocation2 + $0x90] sm:$0xff] %vm2296, %v2267
        %2307 = vst.msk [vmem:[#allocation2 + $0xa0] sm:$0xff] %vm2296, %v2269
        %2308 = vst.msk [vmem:[#allocation2 + $0xb0] sm:$0xff] %vm2296, %v2271
        %2309 = vst.msk [vmem:[#allocation2 + $0xc0] sm:$0xff] %vm2296, %v2273
        %2310 = vst.msk [vmem:[#allocation2 + $0xd0] sm:$0xff] %vm2296, %v2275
        %2311 = vst.msk [vmem:[#allocation2 + $0xe0] sm:$0xff] %vm2296, %v2277
        %2312 = vst.msk [vmem:[#allocation2 + $0xf0] sm:$0xff] %vm2296, %v2279
        %s2313 = sadd.s32 %s245, 2
        %s2314 = smul.u32 %s2313, 3
        %s2315 = smul.addr %s2314, 4
        %s2316 = scalar_lea.vmem %s219, %s2315
        %v2317 = vld [vmem:[%s2316] sm:$0xf]
        %v2318 = vld [vmem:[%s2316 + $0x4] sm:$0xf]
        %v2319 = vld [vmem:[%s2316 + $0xc] sm:$0xf]
        %v2320 = vld [vmem:[%s2316 + $0x10] sm:$0xf]
        %v2321 = vld [vmem:[%s2316 + $0x18] sm:$0xf]
        %v2322 = vld [vmem:[%s2316 + $0x1c] sm:$0xf]
        %v2323 = vld [vmem:[%s2316 + $0x24] sm:$0xf]
        %v2324 = vld [vmem:[%s2316 + $0x28] sm:$0xf]
        %v2325 = vld [vmem:[%s2316 + $0x30] sm:$0xf]
        %v2326 = vld [vmem:[%s2316 + $0x34] sm:$0xf]
        %v2327 = vld [vmem:[%s2316 + $0x3c] sm:$0xf]
        %v2328 = vld [vmem:[%s2316 + $0x40] sm:$0xf]
        %v2329 = vld [vmem:[%s2316 + $0x48] sm:$0xf]
        %v2330 = vld [vmem:[%s2316 + $0x4c] sm:$0xf]
        %v2331 = vld [vmem:[%s2316 + $0x54] sm:$0xf]
        %v2332 = vld [vmem:[%s2316 + $0x58] sm:$0xf]
        %v2333 = vld [vmem:[%s2316 + $0x60] sm:$0xf]
        %v2334 = vld [vmem:[%s2316 + $0x64] sm:$0xf]
        %v2335 = vld [vmem:[%s2316 + $0x6c] sm:$0xf]
        %v2336 = vld [vmem:[%s2316 + $0x70] sm:$0xf]
        %v2337 = vld [vmem:[%s2316 + $0x78] sm:$0xf]
        %v2338 = vld [vmem:[%s2316 + $0x7c] sm:$0xf]
        %v2339 = vld [vmem:[%s2316 + $0x84] sm:$0xf]
        %v2340 = vld [vmem:[%s2316 + $0x88] sm:$0xf]
        %v2341 = vld [vmem:[%s2316 + $0x90] sm:$0xf]
        %v2342 = vld [vmem:[%s2316 + $0x94] sm:$0xf]
        %v2343 = vld [vmem:[%s2316 + $0x9c] sm:$0xf]
        %v2344 = vld [vmem:[%s2316 + $0xa0] sm:$0xf]
        %v2345 = vld [vmem:[%s2316 + $0xa8] sm:$0xf]
        %v2346 = vld [vmem:[%s2316 + $0xac] sm:$0xf]
        %v2347 = vld [vmem:[%s2316 + $0xb4] sm:$0xf]
        %v2348 = vld [vmem:[%s2316 + $0xb8] sm:$0xf]
        %v2381 = vunpack.c.l.b16 %v2317
        %v2382 = vunpack.c.l.b16 %v2318
        %v2383 = vunpack.c.l.b16 %v2319
        %v2384 = vunpack.c.l.b16 %v2320
        %v2385 = vunpack.c.l.b16 %v2321
        %v2386 = vunpack.c.l.b16 %v2322
        %v2387 = vunpack.c.l.b16 %v2323
        %v2388 = vunpack.c.l.b16 %v2324
        %v2389 = vunpack.c.l.b16 %v2325
        %v2390 = vunpack.c.l.b16 %v2326
        %v2391 = vunpack.c.l.b16 %v2327
        %v2392 = vunpack.c.l.b16 %v2328
        %v2393 = vunpack.c.l.b16 %v2329
        %v2394 = vunpack.c.l.b16 %v2330
        %v2395 = vunpack.c.l.b16 %v2331
        %v2396 = vunpack.c.l.b16 %v2332
        %v2397 = vunpack.c.l.b16 %v2333
        %v2398 = vunpack.c.l.b16 %v2334
        %v2399 = vunpack.c.l.b16 %v2335
        %v2400 = vunpack.c.l.b16 %v2336
        %v2401 = vunpack.c.l.b16 %v2337
        %v2402 = vunpack.c.l.b16 %v2338
        %v2403 = vunpack.c.l.b16 %v2339
        %v2404 = vunpack.c.l.b16 %v2340
        %v2405 = vunpack.c.l.b16 %v2341
        %v2406 = vunpack.c.l.b16 %v2342
        %v2407 = vunpack.c.l.b16 %v2343
        %v2408 = vunpack.c.l.b16 %v2344
        %v2409 = vunpack.c.l.b16 %v2345
        %v2410 = vunpack.c.l.b16 %v2346
        %v2411 = vunpack.c.l.b16 %v2347
        %v2412 = vunpack.c.l.b16 %v2348
        %v2413 = vpack.c.b16 %v2382, %v2381
        %v2414 = vpack.c.b16 %v2384, %v2383
        %v2415 = vpack.c.b16 %v2386, %v2385
        %v2416 = vpack.c.b16 %v2388, %v2387
        %v2417 = vpack.c.b16 %v2390, %v2389
        %v2418 = vpack.c.b16 %v2392, %v2391
        %v2419 = vpack.c.b16 %v2394, %v2393
        %v2420 = vpack.c.b16 %v2396, %v2395
        %v2421 = vpack.c.b16 %v2398, %v2397
        %v2422 = vpack.c.b16 %v2400, %v2399
        %v2423 = vpack.c.b16 %v2402, %v2401
        %v2424 = vpack.c.b16 %v2404, %v2403
        %v2425 = vpack.c.b16 %v2406, %v2405
        %v2426 = vpack.c.b16 %v2408, %v2407
        %v2427 = vpack.c.b16 %v2410, %v2409
        %v2428 = vpack.c.b16 %v2412, %v2411
        %2429 = vrot.lane.b32.xlu0 %v2413, 96
        %v2430 = vpop.permute.xlu0 %2429
        %2431 = vrot.lane.b32.xlu0 %v2414, 96
        %v2432 = vpop.permute.xlu0 %2431
        %2433 = vrot.lane.b32.xlu0 %v2415, 96
        %v2434 = vpop.permute.xlu0 %2433
        %2435 = vrot.lane.b32.xlu0 %v2416, 96
        %v2436 = vpop.permute.xlu0 %2435
        %2437 = vrot.lane.b32.xlu0 %v2417, 96
        %v2438 = vpop.permute.xlu0 %2437
        %2439 = vrot.lane.b32.xlu0 %v2418, 96
        %v2440 = vpop.permute.xlu0 %2439
        %2441 = vrot.lane.b32.xlu0 %v2419, 96
        %v2442 = vpop.permute.xlu0 %2441
        %2443 = vrot.lane.b32.xlu0 %v2420, 96
        %v2444 = vpop.permute.xlu0 %2443
        %2445 = vrot.lane.b32.xlu0 %v2421, 96
        %v2446 = vpop.permute.xlu0 %2445
        %2447 = vrot.lane.b32.xlu0 %v2422, 96
        %v2448 = vpop.permute.xlu0 %2447
        %2449 = vrot.lane.b32.xlu0 %v2423, 96
        %v2450 = vpop.permute.xlu0 %2449
        %2451 = vrot.lane.b32.xlu0 %v2424, 96
        %v2452 = vpop.permute.xlu0 %2451
        %2453 = vrot.lane.b32.xlu0 %v2425, 96
        %v2454 = vpop.permute.xlu0 %2453
        %2455 = vrot.lane.b32.xlu0 %v2426, 96
        %v2456 = vpop.permute.xlu0 %2455
        %2457 = vrot.lane.b32.xlu0 %v2427, 96
        %v2458 = vpop.permute.xlu0 %2457
        %2459 = vrot.lane.b32.xlu0 %v2428, 96
        %v2460 = vpop.permute.xlu0 %2459
        %vm2477 = vcmask 917248
        %2478 = vst.msk [vmem:[#allocation2] sm:$0xff] %vm2477, %v2430
        %2479 = vst.msk [vmem:[#allocation2 + $0x10] sm:$0xff] %vm2477, %v2432
        %2480 = vst.msk [vmem:[#allocation2 + $0x20] sm:$0xff] %vm2477, %v2434
        %2481 = vst.msk [vmem:[#allocation2 + $0x30] sm:$0xff] %vm2477, %v2436
        %2482 = vst.msk [vmem:[#allocation2 + $0x40] sm:$0xff] %vm2477, %v2438
        %2483 = vst.msk [vmem:[#allocation2 + $0x50] sm:$0xff] %vm2477, %v2440
        %2484 = vst.msk [vmem:[#allocation2 + $0x60] sm:$0xff] %vm2477, %v2442
        %2485 = vst.msk [vmem:[#allocation2 + $0x70] sm:$0xff] %vm2477, %v2444
        %2486 = vst.msk [vmem:[#allocation2 + $0x80] sm:$0xff] %vm2477, %v2446
        %2487 = vst.msk [vmem:[#allocation2 + $0x90] sm:$0xff] %vm2477, %v2448
        %2488 = vst.msk [vmem:[#allocation2 + $0xa0] sm:$0xff] %vm2477, %v2450
        %2489 = vst.msk [vmem:[#allocation2 + $0xb0] sm:$0xff] %vm2477, %v2452
        %2490 = vst.msk [vmem:[#allocation2 + $0xc0] sm:$0xff] %vm2477, %v2454
        %2491 = vst.msk [vmem:[#allocation2 + $0xd0] sm:$0xff] %vm2477, %v2456
        %2492 = vst.msk [vmem:[#allocation2 + $0xe0] sm:$0xff] %vm2477, %v2458
        %2493 = vst.msk [vmem:[#allocation2 + $0xf0] sm:$0xff] %vm2477, %v2460
        %v2494 = vld [vmem:[%s2316] sm:$0xf]
        %v2495 = vld [vmem:[%s2316 + $0x4] sm:$0xf]
        %v2496 = vld [vmem:[%s2316 + $0x8] sm:$0x1]
        %v2497 = vld [vmem:[%s2316 + $0xc] sm:$0xf]
        %v2498 = vld [vmem:[%s2316 + $0x10] sm:$0xf]
        %v2499 = vld [vmem:[%s2316 + $0x14] sm:$0x1]
        %v2500 = vld [vmem:[%s2316 + $0x18] sm:$0xf]
        %v2501 = vld [vmem:[%s2316 + $0x1c] sm:$0xf]
        %v2502 = vld [vmem:[%s2316 + $0x20] sm:$0x1]
        %v2503 = vld [vmem:[%s2316 + $0x24] sm:$0xf]
        %v2504 = vld [vmem:[%s2316 + $0x28] sm:$0xf]
        %v2505 = vld [vmem:[%s2316 + $0x2c] sm:$0x1]
        %v2506 = vld [vmem:[%s2316 + $0x30] sm:$0xf]
        %v2507 = vld [vmem:[%s2316 + $0x34] sm:$0xf]
        %v2508 = vld [vmem:[%s2316 + $0x38] sm:$0x1]
        %v2509 = vld [vmem:[%s2316 + $0x3c] sm:$0xf]
        %v2510 = vld [vmem:[%s2316 + $0x40] sm:$0xf]
        %v2511 = vld [vmem:[%s2316 + $0x44] sm:$0x1]
        %v2512 = vld [vmem:[%s2316 + $0x48] sm:$0xf]
        %v2513 = vld [vmem:[%s2316 + $0x4c] sm:$0xf]
        %v2514 = vld [vmem:[%s2316 + $0x50] sm:$0x1]
        %v2515 = vld [vmem:[%s2316 + $0x54] sm:$0xf]
        %v2516 = vld [vmem:[%s2316 + $0x58] sm:$0xf]
        %v2517 = vld [vmem:[%s2316 + $0x5c] sm:$0x1]
        %v2518 = vld [vmem:[%s2316 + $0x60] sm:$0xf]
        %v2519 = vld [vmem:[%s2316 + $0x64] sm:$0xf]
        %v2520 = vld [vmem:[%s2316 + $0x68] sm:$0x1]
        %v2521 = vld [vmem:[%s2316 + $0x6c] sm:$0xf]
        %v2522 = vld [vmem:[%s2316 + $0x70] sm:$0xf]
        %v2523 = vld [vmem:[%s2316 + $0x74] sm:$0x1]
        %v2524 = vld [vmem:[%s2316 + $0x78] sm:$0xf]
        %v2525 = vld [vmem:[%s2316 + $0x7c] sm:$0xf]
        %v2526 = vld [vmem:[%s2316 + $0x80] sm:$0x1]
        %v2527 = vld [vmem:[%s2316 + $0x84] sm:$0xf]
        %v2528 = vld [vmem:[%s2316 + $0x88] sm:$0xf]
        %v2529 = vld [vmem:[%s2316 + $0x8c] sm:$0x1]
        %v2530 = vld [vmem:[%s2316 + $0x90] sm:$0xf]
        %v2531 = vld [vmem:[%s2316 + $0x94] sm:$0xf]
        %v2532 = vld [vmem:[%s2316 + $0x98] sm:$0x1]
        %v2533 = vld [vmem:[%s2316 + $0x9c] sm:$0xf]
        %v2534 = vld [vmem:[%s2316 + $0xa0] sm:$0xf]
        %v2535 = vld [vmem:[%s2316 + $0xa4] sm:$0x1]
        %v2536 = vld [vmem:[%s2316 + $0xa8] sm:$0xf]
        %v2537 = vld [vmem:[%s2316 + $0xac] sm:$0xf]
        %v2538 = vld [vmem:[%s2316 + $0xb0] sm:$0x1]
        %v2539 = vld [vmem:[%s2316 + $0xb4] sm:$0xf]
        %v2540 = vld [vmem:[%s2316 + $0xb8] sm:$0xf]
        %v2541 = vld [vmem:[%s2316 + $0xbc] sm:$0x1]
        %v2543 = vshrl.u32 %v2494, 16
        %v2545 = vrot.slane %v2543, 4
        %v2546 = vshll.u32 %v2494, 16
        %v2548 = vrot.slane %v2546, 5
        %v2549 = vor.u32 %v2545, %v2548
        %v2550 = vrot.slane %v2549, 4
        %v2552 = vshll.u32 %v2495, 16
        %v2554 = vrot.slane %v2552, 5
        %v2555 = vsel %vm444, %v2550, %v2554
        %v2556 = vshrl.u32 %v2495, 16
        %v2558 = vrot.slane %v2556, 4
        %v2559 = vor.u32 %v2558, %v2554
        %v2560 = vrot.slane %v2559, 4
        %v2562 = vshll.u32 %v2496, 16
        %v2564 = vrot.slane %v2562, 5
        %v2565 = vsel %vm444, %v2560, %v2564
        %v2567 = vshrl.u32 %v2497, 16
        %v2569 = vrot.slane %v2567, 4
        %v2570 = vshll.u32 %v2497, 16
        %v2572 = vrot.slane %v2570, 5
        %v2573 = vor.u32 %v2569, %v2572
        %v2574 = vrot.slane %v2573, 4
        %v2576 = vshll.u32 %v2498, 16
        %v2578 = vrot.slane %v2576, 5
        %v2579 = vsel %vm444, %v2574, %v2578
        %v2580 = vshrl.u32 %v2498, 16
        %v2582 = vrot.slane %v2580, 4
        %v2583 = vor.u32 %v2582, %v2578
        %v2584 = vrot.slane %v2583, 4
        %v2586 = vshll.u32 %v2499, 16
        %v2588 = vrot.slane %v2586, 5
        %v2589 = vsel %vm444, %v2584, %v2588
        %v2591 = vshrl.u32 %v2500, 16
        %v2593 = vrot.slane %v2591, 4
        %v2594 = vshll.u32 %v2500, 16
        %v2596 = vrot.slane %v2594, 5
        %v2597 = vor.u32 %v2593, %v2596
        %v2598 = vrot.slane %v2597, 4
        %v2600 = vshll.u32 %v2501, 16
        %v2602 = vrot.slane %v2600, 5
        %v2603 = vsel %vm444, %v2598, %v2602
        %v2604 = vshrl.u32 %v2501, 16
        %v2606 = vrot.slane %v2604, 4
        %v2607 = vor.u32 %v2606, %v2602
        %v2608 = vrot.slane %v2607, 4
        %v2610 = vshll.u32 %v2502, 16
        %v2612 = vrot.slane %v2610, 5
        %v2613 = vsel %vm444, %v2608, %v2612
        %v2615 = vshrl.u32 %v2503, 16
        %v2617 = vrot.slane %v2615, 4
        %v2618 = vshll.u32 %v2503, 16
        %v2620 = vrot.slane %v2618, 5
        %v2621 = vor.u32 %v2617, %v2620
        %v2622 = vrot.slane %v2621, 4
        %v2624 = vshll.u32 %v2504, 16
        %v2626 = vrot.slane %v2624, 5
        %v2627 = vsel %vm444, %v2622, %v2626
        %v2628 = vshrl.u32 %v2504, 16
        %v2630 = vrot.slane %v2628, 4
        %v2631 = vor.u32 %v2630, %v2626
        %v2632 = vrot.slane %v2631, 4
        %v2634 = vshll.u32 %v2505, 16
        %v2636 = vrot.slane %v2634, 5
        %v2637 = vsel %vm444, %v2632, %v2636
        %v2639 = vshrl.u32 %v2506, 16
        %v2641 = vrot.slane %v2639, 4
        %v2642 = vshll.u32 %v2506, 16
        %v2644 = vrot.slane %v2642, 5
        %v2645 = vor.u32 %v2641, %v2644
        %v2646 = vrot.slane %v2645, 4
        %v2648 = vshll.u32 %v2507, 16
        %v2650 = vrot.slane %v2648, 5
        %v2651 = vsel %vm444, %v2646, %v2650
        %v2652 = vshrl.u32 %v2507, 16
        %v2654 = vrot.slane %v2652, 4
        %v2655 = vor.u32 %v2654, %v2650
        %v2656 = vrot.slane %v2655, 4
        %v2658 = vshll.u32 %v2508, 16
        %v2660 = vrot.slane %v2658, 5
        %v2661 = vsel %vm444, %v2656, %v2660
        %v2663 = vshrl.u32 %v2509, 16
        %v2665 = vrot.slane %v2663, 4
        %v2666 = vshll.u32 %v2509, 16
        %v2668 = vrot.slane %v2666, 5
        %v2669 = vor.u32 %v2665, %v2668
        %v2670 = vrot.slane %v2669, 4
        %v2672 = vshll.u32 %v2510, 16
        %v2674 = vrot.slane %v2672, 5
        %v2675 = vsel %vm444, %v2670, %v2674
        %v2676 = vshrl.u32 %v2510, 16
        %v2678 = vrot.slane %v2676, 4
        %v2679 = vor.u32 %v2678, %v2674
        %v2680 = vrot.slane %v2679, 4
        %v2682 = vshll.u32 %v2511, 16
        %v2684 = vrot.slane %v2682, 5
        %v2685 = vsel %vm444, %v2680, %v2684
        %v2687 = vshrl.u32 %v2512, 16
        %v2689 = vrot.slane %v2687, 4
        %v2690 = vshll.u32 %v2512, 16
        %v2692 = vrot.slane %v2690, 5
        %v2693 = vor.u32 %v2689, %v2692
        %v2694 = vrot.slane %v2693, 4
        %v2696 = vshll.u32 %v2513, 16
        %v2698 = vrot.slane %v2696, 5
        %v2699 = vsel %vm444, %v2694, %v2698
        %v2700 = vshrl.u32 %v2513, 16
        %v2702 = vrot.slane %v2700, 4
        %v2703 = vor.u32 %v2702, %v2698
        %v2704 = vrot.slane %v2703, 4
        %v2706 = vshll.u32 %v2514, 16
        %v2708 = vrot.slane %v2706, 5
        %v2709 = vsel %vm444, %v2704, %v2708
        %v2711 = vshrl.u32 %v2515, 16
        %v2713 = vrot.slane %v2711, 4
        %v2714 = vshll.u32 %v2515, 16
        %v2716 = vrot.slane %v2714, 5
        %v2717 = vor.u32 %v2713, %v2716
        %v2718 = vrot.slane %v2717, 4
        %v2720 = vshll.u32 %v2516, 16
        %v2722 = vrot.slane %v2720, 5
        %v2723 = vsel %vm444, %v2718, %v2722
        %v2724 = vshrl.u32 %v2516, 16
        %v2726 = vrot.slane %v2724, 4
        %v2727 = vor.u32 %v2726, %v2722
        %v2728 = vrot.slane %v2727, 4
        %v2730 = vshll.u32 %v2517, 16
        %v2732 = vrot.slane %v2730, 5
        %v2733 = vsel %vm444, %v2728, %v2732
        %v2735 = vshrl.u32 %v2518, 16
        %v2737 = vrot.slane %v2735, 4
        %v2738 = vshll.u32 %v2518, 16
        %v2740 = vrot.slane %v2738, 5
        %v2741 = vor.u32 %v2737, %v2740
        %v2742 = vrot.slane %v2741, 4
        %v2744 = vshll.u32 %v2519, 16
        %v2746 = vrot.slane %v2744, 5
        %v2747 = vsel %vm444, %v2742, %v2746
        %v2748 = vshrl.u32 %v2519, 16
        %v2750 = vrot.slane %v2748, 4
        %v2751 = vor.u32 %v2750, %v2746
        %v2752 = vrot.slane %v2751, 4
        %v2754 = vshll.u32 %v2520, 16
        %v2756 = vrot.slane %v2754, 5
        %v2757 = vsel %vm444, %v2752, %v2756
        %v2759 = vshrl.u32 %v2521, 16
        %v2761 = vrot.slane %v2759, 4
        %v2762 = vshll.u32 %v2521, 16
        %v2764 = vrot.slane %v2762, 5
        %v2765 = vor.u32 %v2761, %v2764
        %v2766 = vrot.slane %v2765, 4
        %v2768 = vshll.u32 %v2522, 16
        %v2770 = vrot.slane %v2768, 5
        %v2771 = vsel %vm444, %v2766, %v2770
        %v2772 = vshrl.u32 %v2522, 16
        %v2774 = vrot.slane %v2772, 4
        %v2775 = vor.u32 %v2774, %v2770
        %v2776 = vrot.slane %v2775, 4
        %v2778 = vshll.u32 %v2523, 16
        %v2780 = vrot.slane %v2778, 5
        %v2781 = vsel %vm444, %v2776, %v2780
        %v2783 = vshrl.u32 %v2524, 16
        %v2785 = vrot.slane %v2783, 4
        %v2786 = vshll.u32 %v2524, 16
        %v2788 = vrot.slane %v2786, 5
        %v2789 = vor.u32 %v2785, %v2788
        %v2790 = vrot.slane %v2789, 4
        %v2792 = vshll.u32 %v2525, 16
        %v2794 = vrot.slane %v2792, 5
        %v2795 = vsel %vm444, %v2790, %v2794
        %v2796 = vshrl.u32 %v2525, 16
        %v2798 = vrot.slane %v2796, 4
        %v2799 = vor.u32 %v2798, %v2794
        %v2800 = vrot.slane %v2799, 4
        %v2802 = vshll.u32 %v2526, 16
        %v2804 = vrot.slane %v2802, 5
        %v2805 = vsel %vm444, %v2800, %v2804
        %v2807 = vshrl.u32 %v2527, 16
        %v2809 = vrot.slane %v2807, 4
        %v2810 = vshll.u32 %v2527, 16
        %v2812 = vrot.slane %v2810, 5
        %v2813 = vor.u32 %v2809, %v2812
        %v2814 = vrot.slane %v2813, 4
        %v2816 = vshll.u32 %v2528, 16
        %v2818 = vrot.slane %v2816, 5
        %v2819 = vsel %vm444, %v2814, %v2818
        %v2820 = vshrl.u32 %v2528, 16
        %v2822 = vrot.slane %v2820, 4
        %v2823 = vor.u32 %v2822, %v2818
        %v2824 = vrot.slane %v2823, 4
        %v2826 = vshll.u32 %v2529, 16
        %v2828 = vrot.slane %v2826, 5
        %v2829 = vsel %vm444, %v2824, %v2828
        %v2831 = vshrl.u32 %v2530, 16
        %v2833 = vrot.slane %v2831, 4
        %v2834 = vshll.u32 %v2530, 16
        %v2836 = vrot.slane %v2834, 5
        %v2837 = vor.u32 %v2833, %v2836
        %v2838 = vrot.slane %v2837, 4
        %v2840 = vshll.u32 %v2531, 16
        %v2842 = vrot.slane %v2840, 5
        %v2843 = vsel %vm444, %v2838, %v2842
        %v2844 = vshrl.u32 %v2531, 16
        %v2846 = vrot.slane %v2844, 4
        %v2847 = vor.u32 %v2846, %v2842
        %v2848 = vrot.slane %v2847, 4
        %v2850 = vshll.u32 %v2532, 16
        %v2852 = vrot.slane %v2850, 5
        %v2853 = vsel %vm444, %v2848, %v2852
        %v2855 = vshrl.u32 %v2533, 16
        %v2857 = vrot.slane %v2855, 4
        %v2858 = vshll.u32 %v2533, 16
        %v2860 = vrot.slane %v2858, 5
        %v2861 = vor.u32 %v2857, %v2860
        %v2862 = vrot.slane %v2861, 4
        %v2864 = vshll.u32 %v2534, 16
        %v2866 = vrot.slane %v2864, 5
        %v2867 = vsel %vm444, %v2862, %v2866
        %v2868 = vshrl.u32 %v2534, 16
        %v2870 = vrot.slane %v2868, 4
        %v2871 = vor.u32 %v2870, %v2866
        %v2872 = vrot.slane %v2871, 4
        %v2874 = vshll.u32 %v2535, 16
        %v2876 = vrot.slane %v2874, 5
        %v2877 = vsel %vm444, %v2872, %v2876
        %v2879 = vshrl.u32 %v2536, 16
        %v2881 = vrot.slane %v2879, 4
        %v2882 = vshll.u32 %v2536, 16
        %v2884 = vrot.slane %v2882, 5
        %v2885 = vor.u32 %v2881, %v2884
        %v2886 = vrot.slane %v2885, 4
        %v2888 = vshll.u32 %v2537, 16
        %v2890 = vrot.slane %v2888, 5
        %v2891 = vsel %vm444, %v2886, %v2890
        %v2892 = vshrl.u32 %v2537, 16
        %v2894 = vrot.slane %v2892, 4
        %v2895 = vor.u32 %v2894, %v2890
        %v2896 = vrot.slane %v2895, 4
        %v2898 = vshll.u32 %v2538, 16
        %v2900 = vrot.slane %v2898, 5
        %v2901 = vsel %vm444, %v2896, %v2900
        %v2903 = vshrl.u32 %v2539, 16
        %v2905 = vrot.slane %v2903, 4
        %v2906 = vshll.u32 %v2539, 16
        %v2908 = vrot.slane %v2906, 5
        %v2909 = vor.u32 %v2905, %v2908
        %v2910 = vrot.slane %v2909, 4
        %v2912 = vshll.u32 %v2540, 16
        %v2914 = vrot.slane %v2912, 5
        %v2915 = vsel %vm444, %v2910, %v2914
        %v2916 = vshrl.u32 %v2540, 16
        %v2918 = vrot.slane %v2916, 4
        %v2919 = vor.u32 %v2918, %v2914
        %v2920 = vrot.slane %v2919, 4
        %v2922 = vshll.u32 %v2541, 16
        %v2924 = vrot.slane %v2922, 5
        %v2925 = vsel %vm444, %v2920, %v2924
        %v2926 = vunpack.c.l.b16 %v2555
        %v2927 = vunpack.c.l.b16 %v2565
        %v2928 = vunpack.c.l.b16 %v2579
        %v2929 = vunpack.c.l.b16 %v2589
        %v2930 = vunpack.c.l.b16 %v2603
        %v2931 = vunpack.c.l.b16 %v2613
        %v2932 = vunpack.c.l.b16 %v2627
        %v2933 = vunpack.c.l.b16 %v2637
        %v2934 = vunpack.c.l.b16 %v2651
        %v2935 = vunpack.c.l.b16 %v2661
        %v2936 = vunpack.c.l.b16 %v2675
        %v2937 = vunpack.c.l.b16 %v2685
        %v2938 = vunpack.c.l.b16 %v2699
        %v2939 = vunpack.c.l.b16 %v2709
        %v2940 = vunpack.c.l.b16 %v2723
        %v2941 = vunpack.c.l.b16 %v2733
        %v2942 = vunpack.c.l.b16 %v2747
        %v2943 = vunpack.c.l.b16 %v2757
        %v2944 = vunpack.c.l.b16 %v2771
        %v2945 = vunpack.c.l.b16 %v2781
        %v2946 = vunpack.c.l.b16 %v2795
        %v2947 = vunpack.c.l.b16 %v2805
        %v2948 = vunpack.c.l.b16 %v2819
        %v2949 = vunpack.c.l.b16 %v2829
        %v2950 = vunpack.c.l.b16 %v2843
        %v2951 = vunpack.c.l.b16 %v2853
        %v2952 = vunpack.c.l.b16 %v2867
        %v2953 = vunpack.c.l.b16 %v2877
        %v2954 = vunpack.c.l.b16 %v2891
        %v2955 = vunpack.c.l.b16 %v2901
        %v2956 = vunpack.c.l.b16 %v2915
        %v2957 = vunpack.c.l.b16 %v2925
        %v2958 = vpack.c.b16 %v2927, %v2926
        %v2959 = vpack.c.b16 %v2929, %v2928
        %v2960 = vpack.c.b16 %v2931, %v2930
        %v2961 = vpack.c.b16 %v2933, %v2932
        %v2962 = vpack.c.b16 %v2935, %v2934
        %v2963 = vpack.c.b16 %v2937, %v2936
        %v2964 = vpack.c.b16 %v2939, %v2938
        %v2965 = vpack.c.b16 %v2941, %v2940
        %v2966 = vpack.c.b16 %v2943, %v2942
        %v2967 = vpack.c.b16 %v2945, %v2944
        %v2968 = vpack.c.b16 %v2947, %v2946
        %v2969 = vpack.c.b16 %v2949, %v2948
        %v2970 = vpack.c.b16 %v2951, %v2950
        %v2971 = vpack.c.b16 %v2953, %v2952
        %v2972 = vpack.c.b16 %v2955, %v2954
        %v2973 = vpack.c.b16 %v2957, %v2956
        %2974 = vrot.lane.b32.xlu0 %v2958, 112
        %v2975 = vpop.permute.xlu0 %2974
        %2976 = vrot.lane.b32.xlu0 %v2959, 112
        %v2977 = vpop.permute.xlu0 %2976
        %2978 = vrot.lane.b32.xlu0 %v2960, 112
        %v2979 = vpop.permute.xlu0 %2978
        %2980 = vrot.lane.b32.xlu0 %v2961, 112
        %v2981 = vpop.permute.xlu0 %2980
        %2982 = vrot.lane.b32.xlu0 %v2962, 112
        %v2983 = vpop.permute.xlu0 %2982
        %2984 = vrot.lane.b32.xlu0 %v2963, 112
        %v2985 = vpop.permute.xlu0 %2984
        %2986 = vrot.lane.b32.xlu0 %v2964, 112
        %v2987 = vpop.permute.xlu0 %2986
        %2988 = vrot.lane.b32.xlu0 %v2965, 112
        %v2989 = vpop.permute.xlu0 %2988
        %2990 = vrot.lane.b32.xlu0 %v2966, 112
        %v2991 = vpop.permute.xlu0 %2990
        %2992 = vrot.lane.b32.xlu0 %v2967, 112
        %v2993 = vpop.permute.xlu0 %2992
        %2994 = vrot.lane.b32.xlu0 %v2968, 112
        %v2995 = vpop.permute.xlu0 %2994
        %2996 = vrot.lane.b32.xlu0 %v2969, 112
        %v2997 = vpop.permute.xlu0 %2996
        %2998 = vrot.lane.b32.xlu0 %v2970, 112
        %v2999 = vpop.permute.xlu0 %2998
        %3000 = vrot.lane.b32.xlu0 %v2971, 112
        %v3001 = vpop.permute.xlu0 %3000
        %3002 = vrot.lane.b32.xlu0 %v2972, 112
        %v3003 = vpop.permute.xlu0 %3002
        %3004 = vrot.lane.b32.xlu0 %v2973, 112
        %v3005 = vpop.permute.xlu0 %3004
        %vm3022 = vcmask 1048448
        %3023 = vst.msk [vmem:[#allocation2] sm:$0xff] %vm3022, %v2975
        %3024 = vst.msk [vmem:[#allocation2 + $0x10] sm:$0xff] %vm3022, %v2977
        %3025 = vst.msk [vmem:[#allocation2 + $0x20] sm:$0xff] %vm3022, %v2979
        %3026 = vst.msk [vmem:[#allocation2 + $0x30] sm:$0xff] %vm3022, %v2981
        %3027 = vst.msk [vmem:[#allocation2 + $0x40] sm:$0xff] %vm3022, %v2983
        %3028 = vst.msk [vmem:[#allocation2 + $0x50] sm:$0xff] %vm3022, %v2985
        %3029 = vst.msk [vmem:[#allocation2 + $0x60] sm:$0xff] %vm3022, %v2987
        %3030 = vst.msk [vmem:[#allocation2 + $0x70] sm:$0xff] %vm3022, %v2989
        %3031 = vst.msk [vmem:[#allocation2 + $0x80] sm:$0xff] %vm3022, %v2991
        %3032 = vst.msk [vmem:[#allocation2 + $0x90] sm:$0xff] %vm3022, %v2993
        %3033 = vst.msk [vmem:[#allocation2 + $0xa0] sm:$0xff] %vm3022, %v2995
        %3034 = vst.msk [vmem:[#allocation2 + $0xb0] sm:$0xff] %vm3022, %v2997
        %3035 = vst.msk [vmem:[#allocation2 + $0xc0] sm:$0xff] %vm3022, %v2999
        %3036 = vst.msk [vmem:[#allocation2 + $0xd0] sm:$0xff] %vm3022, %v3001
        %3037 = vst.msk [vmem:[#allocation2 + $0xe0] sm:$0xff] %vm3022, %v3003
        %3038 = vst.msk [vmem:[#allocation2 + $0xf0] sm:$0xff] %vm3022, %v3005
        %v3039 = vld [vmem:[%s2316] sm:$0xe]
        %v3040 = vld [vmem:[%s2316 + $0x4] sm:$0xf]
        %v3041 = vld [vmem:[%s2316 + $0x8] sm:$0x1]
        %v3042 = vld [vmem:[%s2316 + $0xc] sm:$0xe]
        %v3043 = vld [vmem:[%s2316 + $0x10] sm:$0xf]
        %v3044 = vld [vmem:[%s2316 + $0x14] sm:$0x1]
        %v3045 = vld [vmem:[%s2316 + $0x18] sm:$0xe]
        %v3046 = vld [vmem:[%s2316 + $0x1c] sm:$0xf]
        %v3047 = vld [vmem:[%s2316 + $0x20] sm:$0x1]
        %v3048 = vld [vmem:[%s2316 + $0x24] sm:$0xe]
        %v3049 = vld [vmem:[%s2316 + $0x28] sm:$0xf]
        %v3050 = vld [vmem:[%s2316 + $0x2c] sm:$0x1]
        %v3051 = vld [vmem:[%s2316 + $0x30] sm:$0xe]
        %v3052 = vld [vmem:[%s2316 + $0x34] sm:$0xf]
        %v3053 = vld [vmem:[%s2316 + $0x38] sm:$0x1]
        %v3054 = vld [vmem:[%s2316 + $0x3c] sm:$0xe]
        %v3055 = vld [vmem:[%s2316 + $0x40] sm:$0xf]
        %v3056 = vld [vmem:[%s2316 + $0x44] sm:$0x1]
        %v3057 = vld [vmem:[%s2316 + $0x48] sm:$0xe]
        %v3058 = vld [vmem:[%s2316 + $0x4c] sm:$0xf]
        %v3059 = vld [vmem:[%s2316 + $0x50] sm:$0x1]
        %v3060 = vld [vmem:[%s2316 + $0x54] sm:$0xe]
        %v3061 = vld [vmem:[%s2316 + $0x58] sm:$0xf]
        %v3062 = vld [vmem:[%s2316 + $0x5c] sm:$0x1]
        %v3063 = vld [vmem:[%s2316 + $0x60] sm:$0xe]
        %v3064 = vld [vmem:[%s2316 + $0x64] sm:$0xf]
        %v3065 = vld [vmem:[%s2316 + $0x68] sm:$0x1]
        %v3066 = vld [vmem:[%s2316 + $0x6c] sm:$0xe]
        %v3067 = vld [vmem:[%s2316 + $0x70] sm:$0xf]
        %v3068 = vld [vmem:[%s2316 + $0x74] sm:$0x1]
        %v3069 = vld [vmem:[%s2316 + $0x78] sm:$0xe]
        %v3070 = vld [vmem:[%s2316 + $0x7c] sm:$0xf]
        %v3071 = vld [vmem:[%s2316 + $0x80] sm:$0x1]
        %v3072 = vld [vmem:[%s2316 + $0x84] sm:$0xe]
        %v3073 = vld [vmem:[%s2316 + $0x88] sm:$0xf]
        %v3074 = vld [vmem:[%s2316 + $0x8c] sm:$0x1]
        %v3075 = vld [vmem:[%s2316 + $0x90] sm:$0xe]
        %v3076 = vld [vmem:[%s2316 + $0x94] sm:$0xf]
        %v3077 = vld [vmem:[%s2316 + $0x98] sm:$0x1]
        %v3078 = vld [vmem:[%s2316 + $0x9c] sm:$0xe]
        %v3079 = vld [vmem:[%s2316 + $0xa0] sm:$0xf]
        %v3080 = vld [vmem:[%s2316 + $0xa4] sm:$0x1]
        %v3081 = vld [vmem:[%s2316 + $0xa8] sm:$0xe]
        %v3082 = vld [vmem:[%s2316 + $0xac] sm:$0xf]
        %v3083 = vld [vmem:[%s2316 + $0xb0] sm:$0x1]
        %v3084 = vld [vmem:[%s2316 + $0xb4] sm:$0xe]
        %v3085 = vld [vmem:[%s2316 + $0xb8] sm:$0xf]
        %v3086 = vld [vmem:[%s2316 + $0xbc] sm:$0x1]
        %v3135 = vrot.slane %v3039, 5
        %v3136 = vrot.slane %v3135, 4
        %v3137 = vrot.slane %v3040, 5
        %v3138 = vsel %vm1040, %v3136, %v3137
        %v3139 = vrot.slane %v3137, 4
        %v3140 = vrot.slane %v3041, 5
        %v3141 = vsel %vm1040, %v3139, %v3140
        %v3142 = vrot.slane %v3042, 5
        %v3143 = vrot.slane %v3142, 4
        %v3144 = vrot.slane %v3043, 5
        %v3145 = vsel %vm1040, %v3143, %v3144
        %v3146 = vrot.slane %v3144, 4
        %v3147 = vrot.slane %v3044, 5
        %v3148 = vsel %vm1040, %v3146, %v3147
        %v3149 = vrot.slane %v3045, 5
        %v3150 = vrot.slane %v3149, 4
        %v3151 = vrot.slane %v3046, 5
        %v3152 = vsel %vm1040, %v3150, %v3151
        %v3153 = vrot.slane %v3151, 4
        %v3154 = vrot.slane %v3047, 5
        %v3155 = vsel %vm1040, %v3153, %v3154
        %v3156 = vrot.slane %v3048, 5
        %v3157 = vrot.slane %v3156, 4
        %v3158 = vrot.slane %v3049, 5
        %v3159 = vsel %vm1040, %v3157, %v3158
        %v3160 = vrot.slane %v3158, 4
        %v3161 = vrot.slane %v3050, 5
        %v3162 = vsel %vm1040, %v3160, %v3161
        %v3163 = vrot.slane %v3051, 5
        %v3164 = vrot.slane %v3163, 4
        %v3165 = vrot.slane %v3052, 5
        %v3166 = vsel %vm1040, %v3164, %v3165
        %v3167 = vrot.slane %v3165, 4
        %v3168 = vrot.slane %v3053, 5
        %v3169 = vsel %vm1040, %v3167, %v3168
        %v3170 = vrot.slane %v3054, 5
        %v3171 = vrot.slane %v3170, 4
        %v3172 = vrot.slane %v3055, 5
        %v3173 = vsel %vm1040, %v3171, %v3172
        %v3174 = vrot.slane %v3172, 4
        %v3175 = vrot.slane %v3056, 5
        %v3176 = vsel %vm1040, %v3174, %v3175
        %v3177 = vrot.slane %v3057, 5
        %v3178 = vrot.slane %v3177, 4
        %v3179 = vrot.slane %v3058, 5
        %v3180 = vsel %vm1040, %v3178, %v3179
        %v3181 = vrot.slane %v3179, 4
        %v3182 = vrot.slane %v3059, 5
        %v3183 = vsel %vm1040, %v3181, %v3182
        %v3184 = vrot.slane %v3060, 5
        %v3185 = vrot.slane %v3184, 4
        %v3186 = vrot.slane %v3061, 5
        %v3187 = vsel %vm1040, %v3185, %v3186
        %v3188 = vrot.slane %v3186, 4
        %v3189 = vrot.slane %v3062, 5
        %v3190 = vsel %vm1040, %v3188, %v3189
        %v3191 = vrot.slane %v3063, 5
        %v3192 = vrot.slane %v3191, 4
        %v3193 = vrot.slane %v3064, 5
        %v3194 = vsel %vm1040, %v3192, %v3193
        %v3195 = vrot.slane %v3193, 4
        %v3196 = vrot.slane %v3065, 5
        %v3197 = vsel %vm1040, %v3195, %v3196
        %v3198 = vrot.slane %v3066, 5
        %v3199 = vrot.slane %v3198, 4
        %v3200 = vrot.slane %v3067, 5
        %v3201 = vsel %vm1040, %v3199, %v3200
        %v3202 = vrot.slane %v3200, 4
        %v3203 = vrot.slane %v3068, 5
        %v3204 = vsel %vm1040, %v3202, %v3203
        %v3205 = vrot.slane %v3069, 5
        %v3206 = vrot.slane %v3205, 4
        %v3207 = vrot.slane %v3070, 5
        %v3208 = vsel %vm1040, %v3206, %v3207
        %v3209 = vrot.slane %v3207, 4
        %v3210 = vrot.slane %v3071, 5
        %v3211 = vsel %vm1040, %v3209, %v3210
        %v3212 = vrot.slane %v3072, 5
        %v3213 = vrot.slane %v3212, 4
        %v3214 = vrot.slane %v3073, 5
        %v3215 = vsel %vm1040, %v3213, %v3214
        %v3216 = vrot.slane %v3214, 4
        %v3217 = vrot.slane %v3074, 5
        %v3218 = vsel %vm1040, %v3216, %v3217
        %v3219 = vrot.slane %v3075, 5
        %v3220 = vrot.slane %v3219, 4
        %v3221 = vrot.slane %v3076, 5
        %v3222 = vsel %vm1040, %v3220, %v3221
        %v3223 = vrot.slane %v3221, 4
        %v3224 = vrot.slane %v3077, 5
        %v3225 = vsel %vm1040, %v3223, %v3224
        %v3226 = vrot.slane %v3078, 5
        %v3227 = vrot.slane %v3226, 4
        %v3228 = vrot.slane %v3079, 5
        %v3229 = vsel %vm1040, %v3227, %v3228
        %v3230 = vrot.slane %v3228, 4
        %v3231 = vrot.slane %v3080, 5
        %v3232 = vsel %vm1040, %v3230, %v3231
        %v3233 = vrot.slane %v3081, 5
        %v3234 = vrot.slane %v3233, 4
        %v3235 = vrot.slane %v3082, 5
        %v3236 = vsel %vm1040, %v3234, %v3235
        %v3237 = vrot.slane %v3235, 4
        %v3238 = vrot.slane %v3083, 5
        %v3239 = vsel %vm1040, %v3237, %v3238
        %v3240 = vrot.slane %v3084, 5
        %v3241 = vrot.slane %v3240, 4
        %v3242 = vrot.slane %v3085, 5
        %v3243 = vsel %vm1040, %v3241, %v3242
        %v3244 = vrot.slane %v3242, 4
        %v3245 = vrot.slane %v3086, 5
        %v3246 = vsel %vm1040, %v3244, %v3245
        %v3247 = vunpack.c.l.b16 %v3138
        %v3248 = vunpack.c.l.b16 %v3141
        %v3249 = vunpack.c.l.b16 %v3145
        %v3250 = vunpack.c.l.b16 %v3148
        %v3251 = vunpack.c.l.b16 %v3152
        %v3252 = vunpack.c.l.b16 %v3155
        %v3253 = vunpack.c.l.b16 %v3159
        %v3254 = vunpack.c.l.b16 %v3162
        %v3255 = vunpack.c.l.b16 %v3166
        %v3256 = vunpack.c.l.b16 %v3169
        %v3257 = vunpack.c.l.b16 %v3173
        %v3258 = vunpack.c.l.b16 %v3176
        %v3259 = vunpack.c.l.b16 %v3180
        %v3260 = vunpack.c.l.b16 %v3183
        %v3261 = vunpack.c.l.b16 %v3187
        %v3262 = vunpack.c.l.b16 %v3190
        %v3263 = vunpack.c.l.b16 %v3194
        %v3264 = vunpack.c.l.b16 %v3197
        %v3265 = vunpack.c.l.b16 %v3201
        %v3266 = vunpack.c.l.b16 %v3204
        %v3267 = vunpack.c.l.b16 %v3208
        %v3268 = vunpack.c.l.b16 %v3211
        %v3269 = vunpack.c.l.b16 %v3215
        %v3270 = vunpack.c.l.b16 %v3218
        %v3271 = vunpack.c.l.b16 %v3222
        %v3272 = vunpack.c.l.b16 %v3225
        %v3273 = vunpack.c.l.b16 %v3229
        %v3274 = vunpack.c.l.b16 %v3232
        %v3275 = vunpack.c.l.b16 %v3236
        %v3276 = vunpack.c.l.b16 %v3239
        %v3277 = vunpack.c.l.b16 %v3243
        %v3278 = vunpack.c.l.b16 %v3246
        %v3279 = vpack.c.b16 %v3248, %v3247
        %v3280 = vpack.c.b16 %v3250, %v3249
        %v3281 = vpack.c.b16 %v3252, %v3251
        %v3282 = vpack.c.b16 %v3254, %v3253
        %v3283 = vpack.c.b16 %v3256, %v3255
        %v3284 = vpack.c.b16 %v3258, %v3257
        %v3285 = vpack.c.b16 %v3260, %v3259
        %v3286 = vpack.c.b16 %v3262, %v3261
        %v3287 = vpack.c.b16 %v3264, %v3263
        %v3288 = vpack.c.b16 %v3266, %v3265
        %v3289 = vpack.c.b16 %v3268, %v3267
        %v3290 = vpack.c.b16 %v3270, %v3269
        %v3291 = vpack.c.b16 %v3272, %v3271
        %v3292 = vpack.c.b16 %v3274, %v3273
        %v3293 = vpack.c.b16 %v3276, %v3275
        %v3294 = vpack.c.b16 %v3278, %v3277
        %3311 = vst.msk [vmem:[#allocation2 + $0x8] sm:$0xff] %vm377, %v3279
        %3312 = vst.msk [vmem:[#allocation2 + $0x18] sm:$0xff] %vm377, %v3280
        %3313 = vst.msk [vmem:[#allocation2 + $0x28] sm:$0xff] %vm377, %v3281
        %3314 = vst.msk [vmem:[#allocation2 + $0x38] sm:$0xff] %vm377, %v3282
        %3315 = vst.msk [vmem:[#allocation2 + $0x48] sm:$0xff] %vm377, %v3283
        %3316 = vst.msk [vmem:[#allocation2 + $0x58] sm:$0xff] %vm377, %v3284
        %3317 = vst.msk [vmem:[#allocation2 + $0x68] sm:$0xff] %vm377, %v3285
        %3318 = vst.msk [vmem:[#allocation2 + $0x78] sm:$0xff] %vm377, %v3286
        %3319 = vst.msk [vmem:[#allocation2 + $0x88] sm:$0xff] %vm377, %v3287
        %3320 = vst.msk [vmem:[#allocation2 + $0x98] sm:$0xff] %vm377, %v3288
        %3321 = vst.msk [vmem:[#allocation2 + $0xa8] sm:$0xff] %vm377, %v3289
        %3322 = vst.msk [vmem:[#allocation2 + $0xb8] sm:$0xff] %vm377, %v3290
        %3323 = vst.msk [vmem:[#allocation2 + $0xc8] sm:$0xff] %vm377, %v3291
        %3324 = vst.msk [vmem:[#allocation2 + $0xd8] sm:$0xff] %vm377, %v3292
        %3325 = vst.msk [vmem:[#allocation2 + $0xe8] sm:$0xff] %vm377, %v3293
        %3326 = vst.msk [vmem:[#allocation2 + $0xf8] sm:$0xff] %vm377, %v3294
      $region36: #{pruned_conv_forward.1} parent=31 // pred_fallthru
        _
      %v3327 = vld [vmem:[#allocation2] sm:$0xff]
      %v3328 = vld [vmem:[#allocation2 + $0x8] sm:$0xff]
      %v3329 = vld [vmem:[#allocation2 + $0x10] sm:$0xff]
      %v3330 = vld [vmem:[#allocation2 + $0x18] sm:$0xff]
      %v3331 = vld [vmem:[#allocation2 + $0x20] sm:$0xff]
      %v3332 = vld [vmem:[#allocation2 + $0x28] sm:$0xff]
      %v3333 = vld [vmem:[#allocation2 + $0x30] sm:$0xff]
      %v3334 = vld [vmem:[#allocation2 + $0x38] sm:$0xff]
      %v3335 = vld [vmem:[#allocation2 + $0x40] sm:$0xff]
      %v3336 = vld [vmem:[#allocation2 + $0x48] sm:$0xff]
      %v3337 = vld [vmem:[#allocation2 + $0x50] sm:$0xff]
      %v3338 = vld [vmem:[#allocation2 + $0x58] sm:$0xff]
      %v3339 = vld [vmem:[#allocation2 + $0x60] sm:$0xff]
      %v3340 = vld [vmem:[#allocation2 + $0x68] sm:$0xff]
      %v3341 = vld [vmem:[#allocation2 + $0x70] sm:$0xff]
      %v3342 = vld [vmem:[#allocation2 + $0x78] sm:$0xff]
      %v3343 = vld [vmem:[#allocation2 + $0x80] sm:$0xff]
      %v3344 = vld [vmem:[#allocation2 + $0x88] sm:$0xff]
      %v3345 = vld [vmem:[#allocation2 + $0x90] sm:$0xff]
      %v3346 = vld [vmem:[#allocation2 + $0x98] sm:$0xff]
      %v3347 = vld [vmem:[#allocation2 + $0xa0] sm:$0xff]
      %v3348 = vld [vmem:[#allocation2 + $0xa8] sm:$0xff]
      %v3349 = vld [vmem:[#allocation2 + $0xb0] sm:$0xff]
      %v3350 = vld [vmem:[#allocation2 + $0xb8] sm:$0xff]
      %v3351 = vld [vmem:[#allocation2 + $0xc0] sm:$0xff]
      %v3352 = vld [vmem:[#allocation2 + $0xc8] sm:$0xff]
      %v3353 = vld [vmem:[#allocation2 + $0xd0] sm:$0xff]
      %v3354 = vld [vmem:[#allocation2 + $0xd8] sm:$0xff]
      %v3355 = vld [vmem:[#allocation2 + $0xe0] sm:$0xff]
      %v3356 = vld [vmem:[#allocation2 + $0xe8] sm:$0xff]
      %v3357 = vld [vmem:[#allocation2 + $0xf0] sm:$0xff]
      %v3358 = vld [vmem:[#allocation2 + $0xf8] sm:$0xff]
      %v3359 = vld [vmem:[%s223] sm:$0xf]
      %v3360 = vld [vmem:[%s223 + $0x4] sm:$0xf]
      %v3361 = vld [vmem:[%s223 + $0x8] sm:$0xf]
      %v3362 = vld [vmem:[%s223 + $0xc] sm:$0xf]
      %v3363 = vld [vmem:[%s223 + $0x10] sm:$0xf]
      %v3364 = vld [vmem:[%s223 + $0x14] sm:$0xf]
      %v3365 = vld [vmem:[%s223 + $0x18] sm:$0xf]
      %v3366 = vld [vmem:[%s223 + $0x1c] sm:$0xf]
      %v3367 = vld [vmem:[%s223 + $0x20] sm:$0xf]
      %v3368 = vld [vmem:[%s223 + $0x24] sm:$0xf]
      %v3369 = vld [vmem:[%s223 + $0x28] sm:$0xf]
      %v3370 = vld [vmem:[%s223 + $0x2c] sm:$0xf]
      %v3371 = vld [vmem:[%s223 + $0x30] sm:$0xf]
      %v3372 = vld [vmem:[%s223 + $0x34] sm:$0xf]
      %v3373 = vld [vmem:[%s223 + $0x38] sm:$0xf]
      %v3374 = vld [vmem:[%s223 + $0x3c] sm:$0xf]
      %v3375 = vld [vmem:[%s223 + $0x40] sm:$0xf]
      %v3376 = vld [vmem:[%s223 + $0x44] sm:$0xf]
      %v3377 = vld [vmem:[%s226] sm:$0x1]
      %v3379 = vlaneseq
      %v3380 = vshrl.u32 %v3379, 7
      %v3381 = vsub.s32 0, %v3380
      %v3382 = vrot.slane %v3377, %v3381
      %v3402 = vunpack.c.l.b16 %v3359
      %v3403 = vunpack.c.l.b16 %v3360
      %v3404 = vunpack.c.l.b16 %v3361
      %v3405 = vunpack.c.l.b16 %v3362
      %v3406 = vunpack.c.l.b16 %v3363
      %v3407 = vunpack.c.l.b16 %v3364
      %v3408 = vunpack.c.l.b16 %v3365
      %v3409 = vunpack.c.l.b16 %v3366
      %v3410 = vunpack.c.l.b16 %v3367
      %v3411 = vunpack.c.l.b16 %v3368
      %v3412 = vunpack.c.l.b16 %v3369
      %v3413 = vunpack.c.l.b16 %v3370
      %v3414 = vunpack.c.l.b16 %v3371
      %v3415 = vunpack.c.l.b16 %v3372
      %v3416 = vunpack.c.l.b16 %v3373
      %v3417 = vunpack.c.l.b16 %v3374
      %v3418 = vunpack.c.l.b16 %v3375
      %v3419 = vunpack.c.l.b16 %v3376
      %v3420 = vpack.c.b16 %v3403, %v3402
      %v3421 = vpack.c.b16 %v3405, %v3404
      %v3422 = vpack.c.b16 %v3407, %v3406
      %v3423 = vpack.c.b16 %v3409, %v3408
      %v3424 = vpack.c.b16 %v3411, %v3410
      %v3425 = vpack.c.b16 %v3413, %v3412
      %v3426 = vpack.c.b16 %v3415, %v3414
      %v3427 = vpack.c.b16 %v3417, %v3416
      %v3428 = vpack.c.b16 %v3419, %v3418
      %vm3438 = vcmask 130048
      %v3440 = vsel %vm3438, %v3328, 0
      %v3443 = vsel %vm3438, %v3330, 0
      %v3446 = vsel %vm3438, %v3332, 0
      %v3449 = vsel %vm3438, %v3334, 0
      %v3452 = vsel %vm3438, %v3336, 0
      %v3455 = vsel %vm3438, %v3338, 0
      %v3458 = vsel %vm3438, %v3340, 0
      %v3461 = vsel %vm3438, %v3342, 0
      %v3464 = vsel %vm3438, %v3344, 0
      %v3467 = vsel %vm3438, %v3346, 0
      %v3470 = vsel %vm3438, %v3348, 0
      %v3473 = vsel %vm3438, %v3350, 0
      %v3476 = vsel %vm3438, %v3352, 0
      %v3479 = vsel %vm3438, %v3354, 0
      %v3482 = vsel %vm3438, %v3356, 0
      %v3485 = vsel %vm3438, %v3358, 0
      %3487 = vmatprep.subr.bf16.mxu0 0
      %3488 = vmatpush1.bf16.msra.mxu0 %v3420
      %3489 = vmatprep.subr.bf16.mxu0 0
      %3490 = vmatpush1.bf16.msra.mxu0 %v3421
      %3491 = vmatprep.subr.bf16.mxu0 0
      %3492 = vmatpush1.bf16.msra.mxu0 %v3422
      %3493 = vmatprep.subr.bf16.mxu0 0
      %3494 = vmatpush1.bf16.msra.mxu0 %v3423
      %3495 = vmatprep.subr.bf16.mxu0 0
      %3496 = vmatpush1.bf16.msra.mxu0 %v3424
      %3497 = vmatprep.subr.bf16.mxu0 0
      %3498 = vmatpush1.bf16.msra.mxu0 %v3425
      %3499 = vmatprep.subr.bf16.mxu0 0
      %3500 = vmatpush1.bf16.msra.mxu0 %v3426
      %3501 = vmatprep.subr.bf16.mxu0 0
      %3502 = vmatpush1.bf16.msra.mxu0 %v3427
      %3503 = vmatprep.subr.bf16.mxu0 0
      %3504 = vmatpush1.bf16.msra.mxu0 %v3428
      %3505 = vmatprep.subr.bf16.mxu0 0
      %3506 = vmatpush1.bf16.msra.mxu0 0
      %3507 = vmatprep.subr.bf16.mxu0 0
      %3508 = vmatpush1.bf16.msra.mxu0 0
      %3509 = vmatprep.subr.bf16.mxu0 0
      %3510 = vmatpush1.bf16.msra.mxu0 0
      %3511 = vmatprep.subr.bf16.mxu0 0
      %3512 = vmatpush1.bf16.msra.mxu0 0
      %3513 = vmatprep.subr.bf16.mxu0 0
      %3514 = vmatpush1.bf16.msra.mxu0 0
      %3515 = vmatprep.subr.bf16.mxu0 0
      %3516 = vmatpush1.bf16.msra.mxu0 0
      %3517 = vmatprep.subr.bf16.mxu0 0
      %3518 = vmatpush1.bf16.msra.mxu0 0
      %3519 = vmatprep.mubr.bf16.mxu0 %v3440
      %3520 = vmatmul.mubr.bf16.gmra.mrb[0].mxu0 %v3327
      %v3521 = vpop.f32.mrb[0].mxu0
      %v3522 = vadd.f32 %v3382, %v3521
      %v3523 = vpop.f32.mrb[0].mxu0
      %v3524 = vpop.f32.mrb[0].mxu0
      %v3525 = vadd.f32 %v3382, %v3524
      %v3526 = vpop.f32.mrb[0].mxu0
      %3527 = vmatprep.mubr.bf16.mxu0 %v3443
      %3528 = vmatmul.mubr.bf16.gmra.mrb[0].mxu0 %v3329
      %v3529 = vpop.f32.mrb[0].mxu0
      %v3530 = vadd.f32 %v3382, %v3529
      %v3531 = vpop.f32.mrb[0].mxu0
      %v3532 = vpop.f32.mrb[0].mxu0
      %v3533 = vadd.f32 %v3382, %v3532
      %v3534 = vpop.f32.mrb[0].mxu0
      %3535 = vmatprep.mubr.bf16.mxu0 %v3446
      %3536 = vmatmul.mubr.bf16.gmra.mrb[0].mxu0 %v3331
      %v3537 = vpop.f32.mrb[0].mxu0
      %v3538 = vadd.f32 %v3382, %v3537
      %v3539 = vpop.f32.mrb[0].mxu0
      %v3540 = vpop.f32.mrb[0].mxu0
      %v3541 = vadd.f32 %v3382, %v3540
      %v3542 = vpop.f32.mrb[0].mxu0
      %3543 = vmatprep.mubr.bf16.mxu0 %v3449
      %3544 = vmatmul.mubr.bf16.gmra.mrb[0].mxu0 %v3333
      %v3545 = vpop.f32.mrb[0].mxu0
      %v3546 = vadd.f32 %v3382, %v3545
      %v3547 = vpop.f32.mrb[0].mxu0
      %v3548 = vpop.f32.mrb[0].mxu0
      %v3549 = vadd.f32 %v3382, %v3548
      %v3550 = vpop.f32.mrb[0].mxu0
      %3551 = vmatprep.mubr.bf16.mxu0 %v3452
      %3552 = vmatmul.mubr.bf16.gmra.mrb[0].mxu0 %v3335
      %v3553 = vpop.f32.mrb[0].mxu0
      %v3554 = vadd.f32 %v3382, %v3553
      %v3555 = vpop.f32.mrb[0].mxu0
      %v3556 = vpop.f32.mrb[0].mxu0
      %v3557 = vadd.f32 %v3382, %v3556
      %v3558 = vpop.f32.mrb[0].mxu0
      %3559 = vmatprep.mubr.bf16.mxu0 %v3455
      %3560 = vmatmul.mubr.bf16.gmra.mrb[0].mxu0 %v3337
      %v3561 = vpop.f32.mrb[0].mxu0
      %v3562 = vadd.f32 %v3382, %v3561
      %v3563 = vpop.f32.mrb[0].mxu0
      %v3564 = vpop.f32.mrb[0].mxu0
      %v3565 = vadd.f32 %v3382, %v3564
      %v3566 = vpop.f32.mrb[0].mxu0
      %3567 = vmatprep.mubr.bf16.mxu0 %v3458
      %3568 = vmatmul.mubr.bf16.gmra.mrb[0].mxu0 %v3339
      %v3569 = vpop.f32.mrb[0].mxu0
      %v3570 = vadd.f32 %v3382, %v3569
      %v3571 = vpop.f32.mrb[0].mxu0
      %v3572 = vpop.f32.mrb[0].mxu0
      %v3573 = vadd.f32 %v3382, %v3572
      %v3574 = vpop.f32.mrb[0].mxu0
      %3575 = vmatprep.mubr.bf16.mxu0 %v3461
      %3576 = vmatmul.mubr.bf16.gmra.mrb[0].mxu0 %v3341
      %v3577 = vpop.f32.mrb[0].mxu0
      %v3578 = vadd.f32 %v3382, %v3577
      %v3579 = vpop.f32.mrb[0].mxu0
      %v3580 = vpop.f32.mrb[0].mxu0
      %v3581 = vadd.f32 %v3382, %v3580
      %v3582 = vpop.f32.mrb[0].mxu0
      %3583 = vmatprep.mubr.bf16.mxu0 %v3464
      %3584 = vmatmul.mubr.bf16.gmra.mrb[0].mxu0 %v3343
      %v3585 = vpop.f32.mrb[0].mxu0
      %v3586 = vadd.f32 %v3382, %v3585
      %v3587 = vpop.f32.mrb[0].mxu0
      %v3588 = vpop.f32.mrb[0].mxu0
      %v3589 = vadd.f32 %v3382, %v3588
      %v3590 = vpop.f32.mrb[0].mxu0
      %3591 = vmatprep.mubr.bf16.mxu0 %v3467
      %3592 = vmatmul.mubr.bf16.gmra.mrb[0].mxu0 %v3345
      %v3593 = vpop.f32.mrb[0].mxu0
      %v3594 = vadd.f32 %v3382, %v3593
      %v3595 = vpop.f32.mrb[0].mxu0
      %v3596 = vpop.f32.mrb[0].mxu0
      %v3597 = vadd.f32 %v3382, %v3596
      %v3598 = vpop.f32.mrb[0].mxu0
      %3599 = vmatprep.mubr.bf16.mxu0 %v3470
      %3600 = vmatmul.mubr.bf16.gmra.mrb[0].mxu0 %v3347
      %v3601 = vpop.f32.mrb[0].mxu0
      %v3602 = vadd.f32 %v3382, %v3601
      %v3603 = vpop.f32.mrb[0].mxu0
      %v3604 = vpop.f32.mrb[0].mxu0
      %v3605 = vadd.f32 %v3382, %v3604
      %v3606 = vpop.f32.mrb[0].mxu0
      %3607 = vmatprep.mubr.bf16.mxu0 %v3473
      %3608 = vmatmul.mubr.bf16.gmra.mrb[0].mxu0 %v3349
      %v3609 = vpop.f32.mrb[0].mxu0
      %v3610 = vadd.f32 %v3382, %v3609
      %v3611 = vpop.f32.mrb[0].mxu0
      %v3612 = vpop.f32.mrb[0].mxu0
      %v3613 = vadd.f32 %v3382, %v3612
      %v3614 = vpop.f32.mrb[0].mxu0
      %3615 = vmatprep.mubr.bf16.mxu0 %v3476
      %3616 = vmatmul.mubr.bf16.gmra.mrb[0].mxu0 %v3351
      %v3617 = vpop.f32.mrb[0].mxu0
      %v3618 = vadd.f32 %v3382, %v3617
      %v3619 = vpop.f32.mrb[0].mxu0
      %v3620 = vpop.f32.mrb[0].mxu0
      %v3621 = vadd.f32 %v3382, %v3620
      %v3622 = vpop.f32.mrb[0].mxu0
      %3623 = vmatprep.mubr.bf16.mxu0 %v3479
      %3624 = vmatmul.mubr.bf16.gmra.mrb[0].mxu0 %v3353
      %v3625 = vpop.f32.mrb[0].mxu0
      %v3626 = vadd.f32 %v3382, %v3625
      %v3627 = vpop.f32.mrb[0].mxu0
      %v3628 = vpop.f32.mrb[0].mxu0
      %v3629 = vadd.f32 %v3382, %v3628
      %v3630 = vpop.f32.mrb[0].mxu0
      %3631 = vmatprep.mubr.bf16.mxu0 %v3482
      %3632 = vmatmul.mubr.bf16.gmra.mrb[0].mxu0 %v3355
      %v3633 = vpop.f32.mrb[0].mxu0
      %v3634 = vadd.f32 %v3382, %v3633
      %v3635 = vpop.f32.mrb[0].mxu0
      %v3636 = vpop.f32.mrb[0].mxu0
      %v3637 = vadd.f32 %v3382, %v3636
      %v3638 = vpop.f32.mrb[0].mxu0
      %3639 = vmatprep.mubr.bf16.mxu0 %v3485
      %3640 = vmatmul.mubr.bf16.gmra.mrb[0].mxu0 %v3357
      %v3641 = vpop.f32.mrb[0].mxu0
      %v3642 = vadd.f32 %v3382, %v3641
      %v3643 = vpop.f32.mrb[0].mxu0
      %v3644 = vpop.f32.mrb[0].mxu0
      %v3645 = vadd.f32 %v3382, %v3644
      %v3646 = vpop.f32.mrb[0].mxu0
      %3647 = vdwg.mxu0
      %3648 = vst [vmem:[%s238] sm:$0xff] %v3522
      %3649 = vst [vmem:[%s238 + $0x8] sm:$0xff] %v3525
      %3650 = vst [vmem:[%s238 + $0x10] sm:$0xff] %v3530
      %3651 = vst [vmem:[%s238 + $0x18] sm:$0xff] %v3533
      %3652 = vst [vmem:[%s238 + $0x20] sm:$0xff] %v3538
      %3653 = vst [vmem:[%s238 + $0x28] sm:$0xff] %v3541
      %3654 = vst [vmem:[%s238 + $0x30] sm:$0xff] %v3546
      %3655 = vst [vmem:[%s238 + $0x38] sm:$0xff] %v3549
      %3656 = vst [vmem:[%s238 + $0x40] sm:$0xff] %v3554
      %3657 = vst [vmem:[%s238 + $0x48] sm:$0xff] %v3557
      %3658 = vst [vmem:[%s238 + $0x50] sm:$0xff] %v3562
      %3659 = vst [vmem:[%s238 + $0x58] sm:$0xff] %v3565
      %3660 = vst [vmem:[%s238 + $0x60] sm:$0xff] %v3570
      %3661 = vst [vmem:[%s238 + $0x68] sm:$0xff] %v3573
      %3662 = vst [vmem:[%s238 + $0x70] sm:$0xff] %v3578
      %3663 = vst [vmem:[%s238 + $0x78] sm:$0xff] %v3581
      %3664 = vst [vmem:[%s238 + $0x80] sm:$0xff] %v3586
      %3665 = vst [vmem:[%s238 + $0x88] sm:$0xff] %v3589
      %3666 = vst [vmem:[%s238 + $0x90] sm:$0xff] %v3594
      %3667 = vst [vmem:[%s238 + $0x98] sm:$0xff] %v3597
      %3668 = vst [vmem:[%s238 + $0xa0] sm:$0xff] %v3602
      %3669 = vst [vmem:[%s238 + $0xa8] sm:$0xff] %v3605
      %3670 = vst [vmem:[%s238 + $0xb0] sm:$0xff] %v3610
      %3671 = vst [vmem:[%s238 + $0xb8] sm:$0xff] %v3613
      %3672 = vst [vmem:[%s238 + $0xc0] sm:$0xff] %v3618
      %3673 = vst [vmem:[%s238 + $0xc8] sm:$0xff] %v3621
      %3674 = vst [vmem:[%s238 + $0xd0] sm:$0xff] %v3626
      %3675 = vst [vmem:[%s238 + $0xd8] sm:$0xff] %v3629
      %3676 = vst [vmem:[%s238 + $0xe0] sm:$0xff] %v3634
      %3677 = vst [vmem:[%s238 + $0xe8] sm:$0xff] %v3637
      %3678 = vst [vmem:[%s238 + $0xf0] sm:$0xff] %v3642
      %3679 = vst [vmem:[%s238 + $0xf8] sm:$0xff] %v3645
      %s3680 = smul.u32 32, %s20
      %p3681 = scmp.lt.s32.totalorder %s19, 1
      %s3682 = scalar_select %p3681, %s19, 1
      %p3683 = scmp.lt.s32.totalorder %s3680, 31
      %s3684 = scalar_select %p3683, %s3680, 31
      %p3685 = scmp.lt.s32.totalorder %s21, 0
      %s3686 = scalar_select %p3685, %s21, 0
      %s3687 = sadd.s32 %s3686, %s3684
      %s3688 = smul.addr %s3682, 32
      %s3689 = sadd.s32 %s3687, %s3688
      %s3690 = smul.addr %s3689, 8
      %s3691 = scalar_lea.vmem %s3, %s3690
      // Predicated region
      $region37: #{pruned_conv_forward.1} parent=31 // pred_check
        %p3692 = pneg %p133
      $region38: #{pruned_conv_forward.1} parent=31 // pred_check_branch
        %3694 = sbr.rel (%p3692) target = $region40
      $region39: #{pruned_conv_forward.1} parent=31 // pred_region
        %s3695 = smul.u32 32, %s20
      $region40: #{pruned_conv_forward.1} parent=31 // pred_fallthru
        _
    $region32: #{pruned_conv_forward.1} parent=5 // pred_fallthru
      _
    %p3696 = scmp.le.s32.totalorder 2, %s9
    // Predicated region
    $region41: #{pruned_conv_forward.1} parent=5 // pred_check
      %p3697 = pneg %p3696
    $region42: #{pruned_conv_forward.1} parent=5 // pred_check_branch
      %3699 = sbr.rel (%p3697) target = $region44
    $region43: #{pruned_conv_forward.1} parent=5 // pred_region
      %s3700 = ssub.s32 %s9, 2
      // Predicated region
      $region45: #{pruned_conv_forward.1} parent=43 // pred_check
        %p3701 = pneg %p139
      $region46: #{pruned_conv_forward.1} parent=43 // pred_check_branch
        %3703 = sbr.rel (%p3701) target = $region48
      $region47: #{pruned_conv_forward.1} parent=43 // pred_region
        %s3704 = smul.u32 32, %s23
        %p3705 = scmp.lt.s32.totalorder %s22, 1
        %s3706 = scalar_select %p3705, %s22, 1
        %p3707 = scmp.lt.s32.totalorder %s3704, 31
        %s3708 = scalar_select %p3707, %s3704, 31
        %p3709 = scmp.lt.s32.totalorder %s24, 0
        %s3710 = scalar_select %p3709, %s24, 0
        %s3711 = sadd.s32 %s3710, %s3708
        %s3712 = smul.addr %s3706, 32
        %s3713 = sadd.s32 %s3711, %s3712
        %s3714 = smul.addr %s3713, 8
        %s3715 = scalar_lea.vmem %s3, %s3714
      $region48: #{pruned_conv_forward.1} parent=43 // pred_fallthru
        _
    $region44: #{pruned_conv_forward.1} parent=5 // pred_fallthru
      _
  $region6: #{pruned_conv_forward.1} parent=0 // loop_footer
    %s13 = sadd.s32 1, %s9
  $region7: #{pruned_conv_forward.1} parent=0 // loop_footer_branch
    %8 = sbr.rel target = $region3
  $region8: #{pruned_conv_forward.1} parent=0 // loop_exit
    _

</llo_original>
